<compile_context>
chip_gen: v6e
topology: v6e:2x2x1
jax: 0.10.0
libtpu: 0.0.40
codegen_flags: <defaults>
</compile_context>

<pallas_src>
import functools

import numpy as np
import jax
import jax.numpy as jnp
from jax.experimental import pallas as pl
from jax.experimental.pallas import tpu as pltpu

# ----------------------------- model hyper-parameters -----------------------------
ATOMTYPE = ["H", "O"]          # stands in for the file-provided atomtype list
MAXNUMTYPE = len(ATOMTYPE)
NBLOCK = 1
NL_HIDDEN = [128, 128]
OC_LOOP = 1
OC_NL_HIDDEN = [128, 128]
OUTPUTNEURON = 1
NIPSIN = 2 + 1                 # nipsin += 1 in __init__
CUTOFF = 4.5
NWAVE = 7
NORBIT = int(NWAVE * (NWAVE + 1) / 2 * NIPSIN)   # 84
NPARA = [3 ** i for i in range(NIPSIN)]          # [1, 3, 9] angular components per L
NANGULAR = sum(NPARA)                            # 13
INITPOT = 0.0
LN_EPS = 1e-5
DTYPE = jnp.float32


def _round_up(x, m):
    return (x + m - 1) // m * m


def _mxu_dtype(k, n):
    # bf16 operands (f32 accumulation) for the wide hidden-layer contractions,
    # f32 for the tiny nwave=7 / 1-wide head shapes.
    return jnp.bfloat16 if (k >= 16 and n >= 16) else jnp.float32


# ----------------------------- Pallas kernels -----------------------------
# All kernels receive the scalar-prefetched per-block group-id array first
# (used only by the index_maps) and operate on one (bm, K) row block against the
# group-selected parameter blocks.  K and N use full-dim blocks (no 128 padding).


def _gmm_nn_kernel(bg_ref, x_ref, w_ref, o_ref, *, cdt):
    o_ref[...] = jnp.dot(x_ref[...].astype(cdt), w_ref[...].astype(cdt),
                         preferred_element_type=jnp.float32)


def _gmm_nt_kernel(bg_ref, x_ref, w_ref, o_ref, *, cdt):
    # x[bm, N] contracted with w[g][K, N] on the last dim of both operands
    # (i.e. x @ w.T) -- transpose-free backward, no HBM transpose / re-pad.
    o_ref[...] = jax.lax.dot_general(
        x_ref[...].astype(cdt), w_ref[...].astype(cdt),
        dimension_numbers=(((1,), (1,)), ((), ())),
        preferred_element_type=jnp.float32)


def _gmm_bias_kernel(bg_ref, x_ref, w_ref, b_ref, o_ref, *, cdt):
    o_ref[...] = (jnp.dot(x_ref[...].astype(cdt), w_ref[...].astype(cdt),
                          preferred_element_type=jnp.float32) + b_ref[...])


def _hidden_fwd_kernel(bg_ref, x_ref, w_ref, b_ref, g_ref, lb_ref, al_ref, be_ref,
                       y_ref, z_ref, *, cdt):
    # fused: matmul + bias + LayerNorm + Relu_like (alpha * silu(beta * x)).
    z = jnp.dot(x_ref[...].astype(cdt), w_ref[...].astype(cdt),
                preferred_element_type=jnp.float32) + b_ref[...]
    z_ref[...] = z                                   # residual for the backward
    mu = jnp.mean(z, axis=-1, keepdims=True)
    var = jnp.mean(jnp.square(z - mu), axis=-1, keepdims=True)
    zh = (z - mu) * jax.lax.rsqrt(var + LN_EPS)      # EUP rsqrt
    t = (zh * g_ref[...] + lb_ref[...]) * be_ref[...]
    sig = pl.reciprocal(1.0 + jnp.exp(-t), approx=True)   # EUP exp + recip
    y_ref[...] = al_ref[...] * t * sig


def _hidden_bwd_kernel(bg_ref, z_ref, ct_ref, w_ref, g_ref, lb_ref, al_ref, be_ref,
                       dx_ref, *, cdt):
    # fused backward: silu' + LayerNorm backward + transposed matmul (dz @ W^T),
    # all in one pass over the (bm, N) block -- no intermediate HBM round trips.
    z = z_ref[...]
    mu = jnp.mean(z, axis=-1, keepdims=True)
    var = jnp.mean(jnp.square(z - mu), axis=-1, keepdims=True)
    inv = jax.lax.rsqrt(var + LN_EPS)
    zh = (z - mu) * inv
    t = (zh * g_ref[...] + lb_ref[...]) * be_ref[...]
    s = pl.reciprocal(1.0 + jnp.exp(-t), approx=True)
    dt = ct_ref[...] * al_ref[...] * s * (1.0 + t * (1.0 - s))   # d silu
    dzh = dt * be_ref[...] * g_ref[...]
    dz = inv * (dzh - jnp.mean(dzh, axis=-1, keepdims=True)
                - zh * jnp.mean(dzh * zh, axis=-1, keepdims=True))
    dx_ref[...] = jax.lax.dot_general(
        dz.astype(cdt), w_ref[...].astype(cdt),
        dimension_numbers=(((1,), (1,)), ((), ())),
        preferred_element_type=jnp.float32)


# ----------------------------- pallas_call wrappers -----------------------------


def _row_spec(bm, width):
    return pl.BlockSpec((bm, width), lambda i, g: (i, 0))


def _grp_spec(shape):
    # group-stacked parameter [G, ...]; block index along G comes from the
    # scalar-prefetched per-block group id (data-dependent index_map).
    return pl.BlockSpec((None,) + tuple(shape), lambda i, g: (g[i], 0, 0))


def _grouped_pallas(kernel, block_g, bm, row_inputs, grp_inputs, out_shapes,
                    out_specs, cdt, flops, bytes_accessed, transcendentals=0):
    mp = row_inputs[0].shape[0]
    nblocks = mp // bm
    in_specs = ([_row_spec(bm, r.shape[1]) for r in row_inputs]
                + [_grp_spec(o.shape[1:]) for o in grp_inputs])
    return pl.pallas_call(
        functools.partial(kernel, cdt=cdt),
        out_shape=out_shapes,
        grid_spec=pltpu.PrefetchScalarGridSpec(
            num_scalar_prefetch=1,
            grid=(nblocks,),
            in_specs=in_specs,
            out_specs=out_specs),
        compiler_params=pltpu.CompilerParams(
            dimension_semantics=("parallel",)),        # megacore: shard row blocks
        cost_estimate=pl.CostEstimate(flops=int(flops),
                                      transcendentals=int(transcendentals),
                                      bytes_accessed=int(bytes_accessed)),
    )(block_g, *row_inputs, *grp_inputs)


def grouped_matmul(x, w_s, block_g, bm):
    mp, k = x.shape
    g, _, n = w_s.shape
    return _grouped_pallas(
        _gmm_nn_kernel, block_g, bm, [x], [w_s],
        jax.ShapeDtypeStruct((mp, n), jnp.float32), _row_spec(bm, n),
        _mxu_dtype(k, n),
        flops=2 * mp * k * n,
        bytes_accessed=4 * (mp * k + g * k * n + mp * n))


def grouped_matmul_nt(x, w_s, block_g, bm):
    mp, n = x.shape
    g, k, _ = w_s.shape
    return _grouped_pallas(
        _gmm_nt_kernel, block_g, bm, [x], [w_s],
        jax.ShapeDtypeStruct((mp, k), jnp.float32), _row_spec(bm, k),
        _mxu_dtype(n, k),
        flops=2 * mp * k * n,
        bytes_accessed=4 * (mp * n + g * k * n + mp * k))


def grouped_linear_call(x, w_s, b_s, block_g, bm):
    mp, k = x.shape
    g, _, n = w_s.shape
    return _grouped_pallas(
        _gmm_bias_kernel, block_g, bm, [x], [w_s, b_s],
        jax.ShapeDtypeStruct((mp, n), jnp.float32), _row_spec(bm, n),
        _mxu_dtype(k, n),
        flops=2 * mp * k * n,
        bytes_accessed=4 * (mp * k + g * k * n + g * n + mp * n))


def grouped_hidden_fwd_call(x, w_s, b_s, g_s, lb_s, al_s, be_s, block_g, bm):
    mp, k = x.shape
    g, _, n = w_s.shape
    out_shapes = (jax.ShapeDtypeStruct((mp, n), jnp.float32),
                  jax.ShapeDtypeStruct((mp, n), jnp.float32))
    out_specs = (_row_spec(bm, n), _row_spec(bm, n))
    return _grouped_pallas(
        _hidden_fwd_kernel, block_g, bm, [x], [w_s, b_s, g_s, lb_s, al_s, be_s],
        out_shapes, out_specs, _mxu_dtype(k, n),
        flops=2 * mp * k * n,
        bytes_accessed=4 * (mp * k + g * k * n + 5 * g * n + 2 * mp * n),
        transcendentals=mp * n)


def grouped_hidden_bwd_call(z, ct, w_s, g_s, lb_s, al_s, be_s, block_g, bm):
    mp, n = z.shape
    g, k, _ = w_s.shape
    return _grouped_pallas(
        _hidden_bwd_kernel, block_g, bm, [z, ct], [w_s, g_s, lb_s, al_s, be_s],
        jax.ShapeDtypeStruct((mp, k), jnp.float32), _row_spec(bm, k),
        _mxu_dtype(n, k),
        flops=2 * mp * k * n,
        bytes_accessed=4 * (2 * mp * n + g * k * n + 4 * g * n + mp * k),
        transcendentals=mp * n)


# ----------------------------- differentiable layer factories -----------------------------
# PES.forward only differentiates w.r.t. the coordinates, so the custom VJPs
# close over the (non-differentiated) parameters and emit only d/dx.
# TODO(synk): parameter gradients are intentionally not produced by these VJPs.


def make_hidden_layer(lyr, layout):
    w_s, b_s = lyr["w"], lyr["b"]
    g_s, lb_s = lyr["ln_g"], lyr["ln_b"]
    al_s, be_s = lyr["alpha"], lyr["beta"]
    block_g, bm = layout["block_g"], layout["bm"]

    @jax.custom_vjp
    def layer(x):
        y, _ = grouped_hidden_fwd_call(x, w_s, b_s, g_s, lb_s, al_s, be_s,
                                       block_g, bm)
        return y

    def layer_fwd(x):
        y, z = grouped_hidden_fwd_call(x, w_s, b_s, g_s, lb_s, al_s, be_s,
                                       block_g, bm)
        return y, z

    def layer_bwd(z, ct):
        dx = grouped_hidden_bwd_call(z, ct, w_s, g_s, lb_s, al_s, be_s,
                                     block_g, bm)
        return (dx,)

    layer.defvjp(layer_fwd, layer_bwd)
    return layer


def make_linear_layer(w_s, b_s, layout):
    block_g, row_g, bm = layout["block_g"], layout["row_g"], layout["bm"]
    n = w_s.shape[-1]

    @jax.custom_vjp
    def layer(x):
        return grouped_linear_call(x, w_s, b_s, block_g, bm)

    def layer_fwd(x):
        return grouped_linear_call(x, w_s, b_s, block_g, bm), None

    def layer_bwd(_, ct):
        if n >= 8:
            dx = grouped_matmul_nt(ct, w_s, block_g, bm)
        else:
            # 1- / 7-wide heads: contraction too narrow to be worth an MXU launch.
            dx = jnp.einsum("mn,mkn->mk", ct, w_s[row_g])
        return (dx,)

    layer.defvjp(layer_fwd, layer_bwd)
    return layer


def make_grouped_contract(w_s, layout):
    block_g, bm = layout["block_g"], layout["bm"]

    @jax.custom_vjp
    def contract(x):
        return grouped_matmul(x, w_s, block_g, bm)

    def contract_fwd(x):
        return grouped_matmul(x, w_s, block_g, bm), None

    def contract_bwd(_, ct):
        return (grouped_matmul_nt(ct, w_s, block_g, bm),)

    contract.defvjp(contract_fwd, contract_bwd)
    return contract


# ----------------------------- grouped-layout construction -----------------------------


def build_species_layout(species, num_groups, bm=None):
    """Species-grouped, bm-padded row layout + per-block group ids (runtime values,
    static shapes)."""
    natom = species.shape[0]
    if bm is None:
        # adaptive row-block size: 8 for tiny systems, up to 128 for large ones
        # (amortises the ~0.35us per-grid-step overhead).
        bm = max(8, min(128, _round_up(max(1, natom // num_groups), 8)))
    sp = species.astype(jnp.int32)
    counts = jnp.sum(sp[:, None] == jnp.arange(num_groups, dtype=jnp.int32)[None, :],
                     axis=0).astype(jnp.int32)
    padded = ((counts + bm - 1) // bm) * bm
    ends = jnp.cumsum(padded).astype(jnp.int32)
    group_start = ends - padded
    # rank of each atom within its species
    order = jnp.argsort(sp)
    excl = (jnp.cumsum(counts) - counts).astype(jnp.int32)
    rank_sorted = jnp.arange(natom, dtype=jnp.int32) - excl[sp[order]]
    rank = jnp.zeros((natom,), jnp.int32).at[order].set(rank_sorted)
    row_of_atom = group_start[sp] + rank

    mp = _round_up(natom + num_groups * (bm - 1), bm)     # static row capacity
    nblocks = mp // bm
    block_start = jnp.arange(nblocks, dtype=jnp.int32) * bm
    block_g = jnp.searchsorted(ends, block_start, side="right").astype(jnp.int32)
    block_g = jnp.minimum(block_g, num_groups - 1)
    row_g = jnp.repeat(block_g, bm)
    return dict(bm=bm, mp=mp, block_g=block_g, row_g=row_g, row_of_atom=row_of_atom)


def build_angular_layout(natom, bm=None):
    """L-major row layout for the batched hyper contraction (static)."""
    if bm is None:
        bm = max(8, min(128, _round_up(natom, 8)))
    na_p = _round_up(natom, bm)
    block_l = np.concatenate(
        [np.full((cnt * na_p) // bm, l, np.int32) for l, cnt in enumerate(NPARA)])
    return dict(bm=bm, na_p=na_p, mp=NANGULAR * na_p, block_g=jnp.asarray(block_l))


# ----------------------------- parameter construction -----------------------------


def _init_nnmod(key, n_in, hidden_widths, n_out):
    """One NNMod: per-element (Linear -> LayerNorm -> Relu_like)* + Linear,
    parameters stacked over atom types for the grouped kernels."""
    # TODO(synk): REANN's exact residual-block (ResMod) wiring is not included in the
    # provided source; this uses the plain Linear/LayerNorm/Relu_like stack it configures.
    layers = []
    prev = n_in
    for _ in range(NBLOCK):
        for width in hidden_widths:
            key, k1 = jax.random.split(key)
            layers.append(dict(
                w=(jax.random.normal(k1, (MAXNUMTYPE, prev, width), DTYPE)
                   / np.sqrt(prev)).astype(DTYPE),
                b=jnp.zeros((MAXNUMTYPE, 1, width), DTYPE),
                ln_g=jnp.ones((MAXNUMTYPE, 1, width), DTYPE),
                ln_b=jnp.zeros((MAXNUMTYPE, 1, width), DTYPE),
                alpha=jnp.ones((MAXNUMTYPE, 1, width), DTYPE),
                beta=jnp.full((MAXNUMTYPE, 1, width), 1.0 / width, DTYPE),
            ))
            prev = width
    key, k2 = jax.random.split(key)
    mod = dict(hidden=layers,
               w_out=(jax.random.normal(k2, (MAXNUMTYPE, prev, n_out), DTYPE)
                      / np.sqrt(prev)).astype(DTYPE),
               b_out=jnp.zeros((MAXNUMTYPE, 1, n_out), DTYPE))
    return mod, key


def build_params(seed=0):
    key = jax.random.PRNGKey(seed)
    rs = jnp.stack([jnp.linspace(0.0, CUTOFF, NWAVE)] * MAXNUMTYPE, 0).astype(DTYPE)
    inta = jnp.ones((MAXNUMTYPE, NWAVE), DTYPE)
    params_c = jnp.ones((MAXNUMTYPE, NWAVE), DTYPE) / float(MAXNUMTYPE)
    key, kh = jax.random.split(key)
    hyper = (jax.random.normal(kh, (OC_LOOP + 1, NIPSIN, NWAVE, NORBIT), DTYPE)
             / np.sqrt(NWAVE)).astype(DTYPE)
    density = dict(rs=rs, inta=inta, params=params_c, hyper=hyper)
    oc = []
    for _ in range(OC_LOOP):
        p, key = _init_nnmod(key, NORBIT, OC_NL_HIDDEN, NWAVE)
        oc.append(p)
    nn, key = _init_nnmod(key, NORBIT, NL_HIDDEN, OUTPUTNEURON)
    return dict(density=density, oc=oc, nn=nn, initpot=jnp.asarray(INITPOT, DTYPE))


# ----------------------------- forward math -----------------------------


def nnmod_apply(nnp, x_atoms, layout):
    """Per-element networks executed as grouped (species-blocked) fused Pallas layers."""
    mp, roa = layout["mp"], layout["row_of_atom"]
    h = jnp.zeros((mp, x_atoms.shape[1]), x_atoms.dtype).at[roa].set(x_atoms)
    for lyr in nnp["hidden"]:
        h = make_hidden_layer(lyr, layout)(h)
    h = make_linear_layer(nnp["w_out"], nnp["b_out"], layout)(h)
    return h[roa]


def _obtain_orb_coeff(iteration, natom, orbital, idx_center, idx_neigh,
                      orb_coeff, hyper, ang_layout):
    # orbital: [P, NANGULAR, NWAVE]; orb_coeff: [natom, NWAVE]
    expand = orb_coeff[idx_neigh]                       # [P, NWAVE]
    worbital = orbital * expand[:, None, :]             # [P, 13, 7]
    sum_w = jnp.zeros((natom, NANGULAR, NWAVE), orbital.dtype)
    sum_w = sum_w.at[idx_center].add(worbital)          # [natom, 13, 7]
    na_p = ang_layout["na_p"]
    sw = jnp.pad(sum_w, ((0, na_p - natom), (0, 0), (0, 0)))
    rows = jnp.transpose(sw, (1, 0, 2)).reshape(NANGULAR * na_p, NWAVE)
    # one grouped pallas_call for all three L blocks (per-block L scalar-prefetched)
    hw = make_grouped_contract(hyper[iteration], ang_layout)(rows)   # [13*na_p, 84]
    hw3 = hw.reshape(NANGULAR, na_p, NORBIT)[:, :natom]
    return jnp.sum(jnp.square(hw3), axis=0)             # [natom, NORBIT]


def get_density(cart, atom_index, local_species, neigh_species, dparams, oc_params,
                sp_layout, ang_layout):
    idx_c = atom_index[0]
    idx_n = atom_index[1]
    natom = local_species.shape[0]
    # TODO(synk): the neighbour-list gather / scatter-add and the per-pair radial &
    # angular terms stay in XLA so jax.grad produces the forces automatically.
    dist_vec = cart[idx_c] - cart[idx_n]                           # [P, 3]
    distances = jnp.sqrt(jnp.sum(jnp.square(dist_vec), axis=-1))   # [P]
    f_cut = jnp.square(0.5 * jnp.cos(distances * (np.pi / CUTOFF)) + 0.5)
    rs_n = dparams["rs"][neigh_species]                            # [P, 7]
    inta_n = dparams["inta"][neigh_species]                        # [P, 7]
    radial = jnp.exp(-inta_n * jnp.square(distances[:, None] - rs_n))
    dvt = dist_vec.T                                               # [3, P]
    pieces = [f_cut[None, :]]
    orb = f_cut[None, :]
    for _ in range(1, NIPSIN):
        orb = (orb[:, None, :] * dvt[None, :, :]).reshape(-1, dist_vec.shape[0])
        pieces.append(orb)
    angular = jnp.concatenate(pieces, axis=0)                      # [13, P]
    orbital = angular.T[:, :, None] * radial[:, None, :]           # [P, 13, 7]

    orb_coeff = dparams["params"][local_species]                   # [natom, 7]
    density = _obtain_orb_coeff(0, natom, orbital, idx_c, idx_n,
                                orb_coeff, dparams["hyper"], ang_layout)
    for it, ocp in enumerate(oc_params):
        orb_coeff = orb_coeff + nnmod_apply(ocp, density, sp_layout)
        density = _obtain_orb_coeff(it + 1, natom, orbital, idx_c, idx_n,
                                    orb_coeff, dparams["hyper"], ang_layout)
    return density


@jax.jit
def pes_forward(cart, atom_index, local_species, neigh_species, params):
    """Replicates PES.forward: returns (varene, -dE/dcart flattened, per-atom output)."""
    natom = local_species.shape[0]
    sp_layout = build_species_layout(local_species, MAXNUMTYPE)
    ang_layout = build_angular_layout(natom)

    def energy_fn(c):
        density = get_density(c, atom_index, local_species, neigh_species,
                              params["density"], params["oc"], sp_layout, ang_layout)
        output = nnmod_apply(params["nn"], density, sp_layout) + params["initpot"]
        return jnp.sum(output), output

    (varene, output), grad = jax.value_and_grad(energy_fn, has_aux=True)(cart)
    return varene, -grad.reshape(-1), output


# ----------------------------- demo -----------------------------
if __name__ == "__main__":
    key = jax.random.PRNGKey(0)
    natom = 8
    key, kc = jax.random.split(key)
    # small cluster so most pair distances are inside the 4.5 cutoff
    cart = (jax.random.uniform(kc, (natom, 3), DTYPE) * 3.0).astype(DTYPE)

    # full neighbour list: all ordered pairs i != j
    idx_i, idx_j = np.meshgrid(np.arange(natom), np.arange(natom), indexing="ij")
    mask = idx_i != idx_j
    atom_index = jnp.asarray(
        np.stack([idx_i[mask], idx_j[mask]], axis=0), dtype=jnp.int32)   # [2, 56]
    local_species = jnp.asarray(np.arange(natom) % MAXNUMTYPE, dtype=jnp.int32)
    neigh_species = local_species[atom_index[1]]

    params = build_params(seed=0)

    varene, neg_force, output = pes_forward(cart, atom_index,
                                            local_species, neigh_species, params)
    jax.block_until_ready((varene, neg_force, output))
    assert varene.shape == ()
    assert neg_force.shape == (natom * 3,)
    assert output.shape == (natom, OUTPUTNEURON)
    assert bool(jnp.all(jnp.isfinite(neg_force)))
    assert bool(jnp.all(jnp.isfinite(output)))
    print("KERNEL_OK")
</pallas_src>

<mosaic_0001>
module attributes {stable_mosaic.version = 11 : i64} {
  func.func private @main(%arg0: i32) attributes {dimension_semantics = [#tpu.dimension_semantics<core_parallel>], iteration_bounds = array<i64: 2>, tpu.core_type = #tpu.core_type<sc_scalar_subcore>, window_params = []} {
    return
  }
}

module attributes {stable_mosaic.version = 11 : i64} {
  func.func private @main(%arg0: i32) attributes {dimension_semantics = [#tpu.dimension_semantics<core_parallel>], iteration_bounds = array<i64: 2>, tpu.core_type = #tpu.core_type<sc_scalar_subcore>, window_params = []} {
    return
  }
}

module attributes {stable_mosaic.version = 11 : i64} {
  func.func @_gmm_nn_kernel(%arg0: i32, %arg1: memref<13xi32, #tpu.memory_space<smem>>, %arg2: memref<8x7xf32, #tpu.memory_space<vmem>>, %arg3: memref<1x7x84xf32, #tpu.memory_space<vmem>>, %arg4: memref<8x84xf32, #tpu.memory_space<vmem>>) attributes {dimension_semantics = [#tpu.dimension_semantics<parallel>], iteration_bounds = array<i64: 13>, scalar_prefetch = 1 : i64, scratch_operands = 0 : i64, tpu.core_type = #tpu.core_type<tc>, window_params = [{transform_indices = @transform_0, window_bounds = array<i64: 8, 7>}, {transform_indices = @transform_1, window_bounds = array<i64: 1, 7, 84>}, {transform_indices = @transform_2, window_bounds = array<i64: 8, 84>}]} {
    %c0 = arith.constant 0 : index
    %c0_0 = arith.constant 0 : index
    %0 = vector.load %arg2[%c0, %c0_0] : memref<8x7xf32, #tpu.memory_space<vmem>>, vector<8x7xf32>
    %c0_1 = arith.constant 0 : index
    %c0_2 = arith.constant 0 : index
    %c0_3 = arith.constant 0 : index
    %1 = vector.load %arg3[%c0_1, %c0_2, %c0_3] : memref<1x7x84xf32, #tpu.memory_space<vmem>>, vector<1x7x84xf32>
    %2 = vector.shape_cast %1 : vector<1x7x84xf32> to vector<7x84xf32>
    %cst = arith.constant dense<0.000000e+00> : vector<8x84xf32>
    %3 = tpu.matmul %0, %2, %cst {dimension_numbers = #tpu.dot_dimension_numbers<[1], [0], [0], [1], [0, 0, 1, 1], [], []>} : vector<8x7xf32>, vector<7x84xf32>, vector<8x84xf32> -> vector<8x84xf32>
    %c0_4 = arith.constant 0 : index
    %c0_5 = arith.constant 0 : index
    %4 = vector.load %arg4[%c0_4, %c0_5] : memref<8x84xf32, #tpu.memory_space<vmem>>, vector<8x84xf32>
    tpu.vector_store %arg4[%c0_4, %c0_5], %3 {strides = array<i32>} : memref<8x84xf32, #tpu.memory_space<vmem>>, vector<8x84xf32>,
    return
  }
  func.func @transform_0(%arg0: i32, %arg1: memref<13xi32, #tpu.memory_space<smem>>) -> (i32, i32) {
    %c0_i32 = arith.constant 0 : i32
    %c0_i32_0 = arith.constant 0 : i32
    return %arg0, %c0_i32 : i32, i32
  }
  func.func @transform_1(%arg0: i32, %arg1: memref<13xi32, #tpu.memory_space<smem>>) -> (i32, i32, i32) {
    %0 = arith.index_cast %arg0 : i32 to index
    %1 = memref.load %arg1[%0] : memref<13xi32, #tpu.memory_space<smem>>
    %c0_i32 = arith.constant 0 : i32
    %c0_i32_0 = arith.constant 0 : i32
    %c0_i32_1 = arith.constant 0 : i32
    return %1, %c0_i32, %c0_i32_0 : i32, i32, i32
  }
  func.func @transform_2(%arg0: i32, %arg1: memref<13xi32, #tpu.memory_space<smem>>) -> (i32, i32) {
    %c0_i32 = arith.constant 0 : i32
    %c0_i32_0 = arith.constant 0 : i32
    return %arg0, %c0_i32 : i32, i32
  }
}

module attributes {stable_mosaic.version = 11 : i64} {
  func.func @_hidden_fwd_kernel(%arg0: i32, %arg1: memref<3xi32, #tpu.memory_space<smem>>, %arg2: memref<8x84xf32, #tpu.memory_space<vmem>>, %arg3: memref<1x84x128xf32, #tpu.memory_space<vmem>>, %arg4: memref<1x1x128xf32, #tpu.memory_space<vmem>>, %arg5: memref<1x1x128xf32, #tpu.memory_space<vmem>>, %arg6: memref<1x1x128xf32, #tpu.memory_space<vmem>>, %arg7: memref<1x1x128xf32, #tpu.memory_space<vmem>>, %arg8: memref<1x1x128xf32, #tpu.memory_space<vmem>>, %arg9: memref<8x128xf32, #tpu.memory_space<vmem>>, %arg10: memref<8x128xf32, #tpu.memory_space<vmem>>) attributes {dimension_semantics = [#tpu.dimension_semantics<parallel>], iteration_bounds = array<i64: 3>, scalar_prefetch = 1 : i64, scratch_operands = 0 : i64, tpu.core_type = #tpu.core_type<tc>, window_params = [{transform_indices = @transform_0, window_bounds = array<i64: 8, 84>}, {transform_indices = @transform_1, window_bounds = array<i64: 1, 84, 128>}, {transform_indices = @transform_2, window_bounds = array<i64: 1, 1, 128>}, {transform_indices = @transform_3, window_bounds = array<i64: 1, 1, 128>}, {transform_indices = @transform_4, window_bounds = array<i64: 1, 1, 128>}, {transform_indices = @transform_5, window_bounds = array<i64: 1, 1, 128>}, {transform_indices = @transform_6, window_bounds = array<i64: 1, 1, 128>}, {transform_indices = @transform_7, window_bounds = array<i64: 8, 128>}, {transform_indices = @transform_8, window_bounds = array<i64: 8, 128>}]} {
    %c0 = arith.constant 0 : index
    %c0_0 = arith.constant 0 : index
    %0 = vector.load %arg2[%c0, %c0_0] : memref<8x84xf32, #tpu.memory_space<vmem>>, vector<8x84xf32>
    %1 = arith.truncf %0 : vector<8x84xf32> to vector<8x84xbf16>
    %c0_1 = arith.constant 0 : index
    %c0_2 = arith.constant 0 : index
    %c0_3 = arith.constant 0 : index
    %2 = vector.load %arg3[%c0_1, %c0_2, %c0_3] : memref<1x84x128xf32, #tpu.memory_space<vmem>>, vector<1x84x128xf32>
    %3 = vector.shape_cast %2 : vector<1x84x128xf32> to vector<84x128xf32>
    %4 = arith.truncf %3 : vector<84x128xf32> to vector<84x128xbf16>
    %cst = arith.constant dense<0.000000e+00> : vector<8x128xf32>
    %5 = tpu.matmul %1, %4, %cst {dimension_numbers = #tpu.dot_dimension_numbers<[1], [0], [0], [1], [0, 0, 1, 1], [], []>} : vector<8x84xbf16>, vector<84x128xbf16>, vector<8x128xf32> -> vector<8x128xf32>
    %c0_4 = arith.constant 0 : index
    %c0_5 = arith.constant 0 : index
    %c0_6 = arith.constant 0 : index
    %6 = vector.load %arg4[%c0_4, %c0_5, %c0_6] : memref<1x1x128xf32, #tpu.memory_space<vmem>>, vector<1x1x128xf32>
    %7 = vector.shape_cast %6 : vector<1x1x128xf32> to vector<1x128xf32>
    %8 = vector.broadcast %7 : vector<1x128xf32> to vector<8x128xf32>
    %9 = arith.addf %5, %8 : vector<8x128xf32>
    %c0_7 = arith.constant 0 : index
    %c0_8 = arith.constant 0 : index
    %10 = vector.load %arg10[%c0_7, %c0_8] : memref<8x128xf32, #tpu.memory_space<vmem>>, vector<8x128xf32>
    tpu.vector_store %arg10[%c0_7, %c0_8], %9 {strides = array<i32>} : memref<8x128xf32, #tpu.memory_space<vmem>>, vector<8x128xf32>,
    %cst_9 = arith.constant dense<0.000000e+00> : vector<8xf32>
    %11 = vector.multi_reduction <add>, %9, %cst_9 [1] : vector<8x128xf32> to vector<8xf32>
    %12 = vector.shape_cast %11 : vector<8xf32> to vector<8x1xf32>
    %cst_10 = arith.constant 1.280000e+02 : f32
    %13 = vector.broadcast %cst_10 : f32 to vector<8x1xf32>
    %14 = arith.divf %12, %13 : vector<8x1xf32>
    %15 = vector.broadcast %14 : vector<8x1xf32> to vector<8x128xf32>
    %16 = arith.subf %9, %15 : vector<8x128xf32>
    %17 = arith.mulf %16, %16 : vector<8x128xf32>
    %cst_11 = arith.constant dense<0.000000e+00> : vector<8xf32>
    %18 = vector.multi_reduction <add>, %17, %cst_11 [1] : vector<8x128xf32> to vector<8xf32>
    %19 = vector.shape_cast %18 : vector<8xf32> to vector<8x1xf32>
    %cst_12 = arith.constant 1.280000e+02 : f32
    %20 = vector.broadcast %cst_12 : f32 to vector<8x1xf32>
    %21 = arith.divf %19, %20 : vector<8x1xf32>
    %22 = vector.broadcast %14 : vector<8x1xf32> to vector<8x128xf32>
    %23 = arith.subf %9, %22 : vector<8x128xf32>
    %cst_13 = arith.constant 9.99999974E-6 : f32
    %24 = vector.broadcast %cst_13 : f32 to vector<8x1xf32>
    %25 = arith.addf %21, %24 : vector<8x1xf32>
    %26 = math.rsqrt %25 : vector<8x1xf32>
    %27 = vector.broadcast %26 : vector<8x1xf32> to vector<8x128xf32>
    %28 = arith.mulf %23, %27 : vector<8x128xf32>
    %c0_14 = arith.constant 0 : index
    %c0_15 = arith.constant 0 : index
    %c0_16 = arith.constant 0 : index
    %29 = vector.load %arg5[%c0_14, %c0_15, %c0_16] : memref<1x1x128xf32, #tpu.memory_space<vmem>>, vector<1x1x128xf32>
    %30 = vector.shape_cast %29 : vector<1x1x128xf32> to vector<1x128xf32>
    %31 = vector.broadcast %30 : vector<1x128xf32> to vector<8x128xf32>
    %32 = arith.mulf %28, %31 : vector<8x128xf32>
    %c0_17 = arith.constant 0 : index
    %c0_18 = arith.constant 0 : index
    %c0_19 = arith.constant 0 : index
    %33 = vector.load %arg6[%c0_17, %c0_18, %c0_19] : memref<1x1x128xf32, #tpu.memory_space<vmem>>, vector<1x1x128xf32>
    %34 = vector.shape_cast %33 : vector<1x1x128xf32> to vector<1x128xf32>
    %35 = vector.broadcast %34 : vector<1x128xf32> to vector<8x128xf32>
    %36 = arith.addf %32, %35 : vector<8x128xf32>
    %c0_20 = arith.constant 0 : index
    %c0_21 = arith.constant 0 : index
    %c0_22 = arith.constant 0 : index
    %37 = vector.load %arg8[%c0_20, %c0_21, %c0_22] : memref<1x1x128xf32, #tpu.memory_space<vmem>>, vector<1x1x128xf32>
    %38 = vector.shape_cast %37 : vector<1x1x128xf32> to vector<1x128xf32>
    %39 = vector.broadcast %38 : vector<1x128xf32> to vector<8x128xf32>
    %40 = arith.mulf %36, %39 : vector<8x128xf32>
    %cst_23 = arith.constant 0.000000e+00 : f32
    %41 = vector.broadcast %cst_23 : f32 to vector<8x128xf32>
    %42 = arith.subf %41, %40 : vector<8x128xf32>
    %43 = math.exp %42 : vector<8x128xf32>
    %cst_24 = arith.constant 1.000000e+00 : f32
    %44 = vector.broadcast %cst_24 : f32 to vector<8x128xf32>
    %45 = arith.addf %44, %43 : vector<8x128xf32>
    %46 = tpu.reciprocal %45 {approx = true} : vector<8x128xf32> -> vector<8x128xf32>
    %c0_25 = arith.constant 0 : index
    %c0_26 = arith.constant 0 : index
    %c0_27 = arith.constant 0 : index
    %47 = vector.load %arg7[%c0_25, %c0_26, %c0_27] : memref<1x1x128xf32, #tpu.memory_space<vmem>>, vector<1x1x128xf32>
    %48 = vector.shape_cast %47 : vector<1x1x128xf32> to vector<1x128xf32>
    %49 = vector.broadcast %48 : vector<1x128xf32> to vector<8x128xf32>
    %50 = arith.mulf %49, %40 : vector<8x128xf32>
    %51 = arith.mulf %50, %46 : vector<8x128xf32>
    %c0_28 = arith.constant 0 : index
    %c0_29 = arith.constant 0 : index
    %52 = vector.load %arg9[%c0_28, %c0_29] : memref<8x128xf32, #tpu.memory_space<vmem>>, vector<8x128xf32>
    tpu.vector_store %arg9[%c0_28, %c0_29], %51 {strides = array<i32>} : memref<8x128xf32, #tpu.memory_space<vmem>>, vector<8x128xf32>,
    return
  }
  func.func @transform_0(%arg0: i32, %arg1: memref<3xi32, #tpu.memory_space<smem>>) -> (i32, i32) {
    %c0_i32 = arith.constant 0 : i32
    %c0_i32_0 = arith.constant 0 : i32
    return %arg0, %c0_i32 : i32, i32
  }
  func.func @transform_1(%arg0: i32, %arg1: memref<3xi32, #tpu.memory_space<smem>>) -> (i32, i32, i32) {
    %0 = arith.index_cast %arg0 : i32 to index
    %1 = memref.load %arg1[%0] : memref<3xi32, #tpu.memory_space<smem>>
    %c0_i32 = arith.constant 0 : i32
    %c0_i32_0 = arith.constant 0 : i32
    %c0_i32_1 = arith.constant 0 : i32
    return %1, %c0_i32, %c0_i32_0 : i32, i32, i32
  }
  func.func @transform_2(%arg0: i32, %arg1: memref<3xi32, #tpu.memory_space<smem>>) -> (i32, i32, i32) {
    %0 = arith.index_cast %arg0 : i32 to index
    %1 = memref.load %arg1[%0] : memref<3xi32, #tpu.memory_space<smem>>
    %c0_i32 = arith.constant 0 : i32
    %c0_i32_0 = arith.constant 0 : i32
    %c0_i32_1 = arith.constant 0 : i32
    return %1, %c0_i32, %c0_i32_0 : i32, i32, i32
  }
  func.func @transform_3(%arg0: i32, %arg1: memref<3xi32, #tpu.memory_space<smem>>) -> (i32, i32, i32) {
    %0 = arith.index_cast %arg0 : i32 to index
    %1 = memref.load %arg1[%0] : memref<3xi32, #tpu.memory_space<smem>>
    %c0_i32 = arith.constant 0 : i32
    %c0_i32_0 = arith.constant 0 : i32
    %c0_i32_1 = arith.constant 0 : i32
    return %1, %c0_i32, %c0_i32_0 : i32, i32, i32
  }
  func.func @transform_4(%arg0: i32, %arg1: memref<3xi32, #tpu.memory_space<smem>>) -> (i32, i32, i32) {
    %0 = arith.index_cast %arg0 : i32 to index
    %1 = memref.load %arg1[%0] : memref<3xi32, #tpu.memory_space<smem>>
    %c0_i32 = arith.constant 0 : i32
    %c0_i32_0 = arith.constant 0 : i32
    %c0_i32_1 = arith.constant 0 : i32
    return %1, %c0_i32, %c0_i32_0 : i32, i32, i32
  }
  func.func @transform_5(%arg0: i32, %arg1: memref<3xi32, #tpu.memory_space<smem>>) -> (i32, i32, i32) {
    %0 = arith.index_cast %arg0 : i32 to index
    %1 = memref.load %arg1[%0] : memref<3xi32, #tpu.memory_space<smem>>
    %c0_i32 = arith.constant 0 : i32
    %c0_i32_0 = arith.constant 0 : i32
    %c0_i32_1 = arith.constant 0 : i32
    return %1, %c0_i32, %c0_i32_0 : i32, i32, i32
  }
  func.func @transform_6(%arg0: i32, %arg1: memref<3xi32, #tpu.memory_space<smem>>) -> (i32, i32, i32) {
    %0 = arith.index_cast %arg0 : i32 to index
    %1 = memref.load %arg1[%0] : memref<3xi32, #tpu.memory_space<smem>>
    %c0_i32 = arith.constant 0 : i32
    %c0_i32_0 = arith.constant 0 : i32
    %c0_i32_1 = arith.constant 0 : i32
    return %1, %c0_i32, %c0_i32_0 : i32, i32, i32
  }
  func.func @transform_7(%arg0: i32, %arg1: memref<3xi32, #tpu.memory_space<smem>>) -> (i32, i32) {
    %c0_i32 = arith.constant 0 : i32
    %c0_i32_0 = arith.constant 0 : i32
    return %arg0, %c0_i32 : i32, i32
  }
  func.func @transform_8(%arg0: i32, %arg1: memref<3xi32, #tpu.memory_space<smem>>) -> (i32, i32) {
    %c0_i32 = arith.constant 0 : i32
    %c0_i32_0 = arith.constant 0 : i32
    return %arg0, %c0_i32 : i32, i32
  }
}

module attributes {stable_mosaic.version = 11 : i64} {
  func.func @_hidden_fwd_kernel(%arg0: i32, %arg1: memref<3xi32, #tpu.memory_space<smem>>, %arg2: memref<8x128xf32, #tpu.memory_space<vmem>>, %arg3: memref<1x128x128xf32, #tpu.memory_space<vmem>>, %arg4: memref<1x1x128xf32, #tpu.memory_space<vmem>>, %arg5: memref<1x1x128xf32, #tpu.memory_space<vmem>>, %arg6: memref<1x1x128xf32, #tpu.memory_space<vmem>>, %arg7: memref<1x1x128xf32, #tpu.memory_space<vmem>>, %arg8: memref<1x1x128xf32, #tpu.memory_space<vmem>>, %arg9: memref<8x128xf32, #tpu.memory_space<vmem>>, %arg10: memref<8x128xf32, #tpu.memory_space<vmem>>) attributes {dimension_semantics = [#tpu.dimension_semantics<parallel>], iteration_bounds = array<i64: 3>, scalar_prefetch = 1 : i64, scratch_operands = 0 : i64, tpu.core_type = #tpu.core_type<tc>, window_params = [{transform_indices = @transform_0, window_bounds = array<i64: 8, 128>}, {transform_indices = @transform_1, window_bounds = array<i64: 1, 128, 128>}, {transform_indices = @transform_2, window_bounds = array<i64: 1, 1, 128>}, {transform_indices = @transform_3, window_bounds = array<i64: 1, 1, 128>}, {transform_indices = @transform_4, window_bounds = array<i64: 1, 1, 128>}, {transform_indices = @transform_5, window_bounds = array<i64: 1, 1, 128>}, {transform_indices = @transform_6, window_bounds = array<i64: 1, 1, 128>}, {transform_indices = @transform_7, window_bounds = array<i64: 8, 128>}, {transform_indices = @transform_8, window_bounds = array<i64: 8, 128>}]} {
    %c0 = arith.constant 0 : index
    %c0_0 = arith.constant 0 : index
    %0 = vector.load %arg2[%c0, %c0_0] : memref<8x128xf32, #tpu.memory_space<vmem>>, vector<8x128xf32>
    %1 = arith.truncf %0 : vector<8x128xf32> to vector<8x128xbf16>
    %c0_1 = arith.constant 0 : index
    %c0_2 = arith.constant 0 : index
    %c0_3 = arith.constant 0 : index
    %2 = vector.load %arg3[%c0_1, %c0_2, %c0_3] : memref<1x128x128xf32, #tpu.memory_space<vmem>>, vector<1x128x128xf32>
    %3 = vector.shape_cast %2 : vector<1x128x128xf32> to vector<128x128xf32>
    %4 = arith.truncf %3 : vector<128x128xf32> to vector<128x128xbf16>
    %cst = arith.constant dense<0.000000e+00> : vector<8x128xf32>
    %5 = tpu.matmul %1, %4, %cst {dimension_numbers = #tpu.dot_dimension_numbers<[1], [0], [0], [1], [0, 0, 1, 1], [], []>} : vector<8x128xbf16>, vector<128x128xbf16>, vector<8x128xf32> -> vector<8x128xf32>
    %c0_4 = arith.constant 0 : index
    %c0_5 = arith.constant 0 : index
    %c0_6 = arith.constant 0 : index
    %6 = vector.load %arg4[%c0_4, %c0_5, %c0_6] : memref<1x1x128xf32, #tpu.memory_space<vmem>>, vector<1x1x128xf32>
    %7 = vector.shape_cast %6 : vector<1x1x128xf32> to vector<1x128xf32>
    %8 = vector.broadcast %7 : vector<1x128xf32> to vector<8x128xf32>
    %9 = arith.addf %5, %8 : vector<8x128xf32>
    %c0_7 = arith.constant 0 : index
    %c0_8 = arith.constant 0 : index
    %10 = vector.load %arg10[%c0_7, %c0_8] : memref<8x128xf32, #tpu.memory_space<vmem>>, vector<8x128xf32>
    tpu.vector_store %arg10[%c0_7, %c0_8], %9 {strides = array<i32>} : memref<8x128xf32, #tpu.memory_space<vmem>>, vector<8x128xf32>,
    %cst_9 = arith.constant dense<0.000000e+00> : vector<8xf32>
    %11 = vector.multi_reduction <add>, %9, %cst_9 [1] : vector<8x128xf32> to vector<8xf32>
    %12 = vector.shape_cast %11 : vector<8xf32> to vector<8x1xf32>
    %cst_10 = arith.constant 1.280000e+02 : f32
    %13 = vector.broadcast %cst_10 : f32 to vector<8x1xf32>
    %14 = arith.divf %12, %13 : vector<8x1xf32>
    %15 = vector.broadcast %14 : vector<8x1xf32> to vector<8x128xf32>
    %16 = arith.subf %9, %15 : vector<8x128xf32>
    %17 = arith.mulf %16, %16 : vector<8x128xf32>
    %cst_11 = arith.constant dense<0.000000e+00> : vector<8xf32>
    %18 = vector.multi_reduction <add>, %17, %cst_11 [1] : vector<8x128xf32> to vector<8xf32>
    %19 = vector.shape_cast %18 : vector<8xf32> to vector<8x1xf32>
    %cst_12 = arith.constant 1.280000e+02 : f32
    %20 = vector.broadcast %cst_12 : f32 to vector<8x1xf32>
    %21 = arith.divf %19, %20 : vector<8x1xf32>
    %22 = vector.broadcast %14 : vector<8x1xf32> to vector<8x128xf32>
    %23 = arith.subf %9, %22 : vector<8x128xf32>
    %cst_13 = arith.constant 9.99999974E-6 : f32
    %24 = vector.broadcast %cst_13 : f32 to vector<8x1xf32>
    %25 = arith.addf %21, %24 : vector<8x1xf32>
    %26 = math.rsqrt %25 : vector<8x1xf32>
    %27 = vector.broadcast %26 : vector<8x1xf32> to vector<8x128xf32>
    %28 = arith.mulf %23, %27 : vector<8x128xf32>
    %c0_14 = arith.constant 0 : index
    %c0_15 = arith.constant 0 : index
    %c0_16 = arith.constant 0 : index
    %29 = vector.load %arg5[%c0_14, %c0_15, %c0_16] : memref<1x1x128xf32, #tpu.memory_space<vmem>>, vector<1x1x128xf32>
    %30 = vector.shape_cast %29 : vector<1x1x128xf32> to vector<1x128xf32>
    %31 = vector.broadcast %30 : vector<1x128xf32> to vector<8x128xf32>
    %32 = arith.mulf %28, %31 : vector<8x128xf32>
    %c0_17 = arith.constant 0 : index
    %c0_18 = arith.constant 0 : index
    %c0_19 = arith.constant 0 : index
    %33 = vector.load %arg6[%c0_17, %c0_18, %c0_19] : memref<1x1x128xf32, #tpu.memory_space<vmem>>, vector<1x1x128xf32>
    %34 = vector.shape_cast %33 : vector<1x1x128xf32> to vector<1x128xf32>
    %35 = vector.broadcast %34 : vector<1x128xf32> to vector<8x128xf32>
    %36 = arith.addf %32, %35 : vector<8x128xf32>
    %c0_20 = arith.constant 0 : index
    %c0_21 = arith.constant 0 : index
    %c0_22 = arith.constant 0 : index
    %37 = vector.load %arg8[%c0_20, %c0_21, %c0_22] : memref<1x1x128xf32, #tpu.memory_space<vmem>>, vector<1x1x128xf32>
    %38 = vector.shape_cast %37 : vector<1x1x128xf32> to vector<1x128xf32>
    %39 = vector.broadcast %38 : vector<1x128xf32> to vector<8x128xf32>
    %40 = arith.mulf %36, %39 : vector<8x128xf32>
    %cst_23 = arith.constant 0.000000e+00 : f32
    %41 = vector.broadcast %cst_23 : f32 to vector<8x128xf32>
    %42 = arith.subf %41, %40 : vector<8x128xf32>
    %43 = math.exp %42 : vector<8x128xf32>
    %cst_24 = arith.constant 1.000000e+00 : f32
    %44 = vector.broadcast %cst_24 : f32 to vector<8x128xf32>
    %45 = arith.addf %44, %43 : vector<8x128xf32>
    %46 = tpu.reciprocal %45 {approx = true} : vector<8x128xf32> -> vector<8x128xf32>
    %c0_25 = arith.constant 0 : index
    %c0_26 = arith.constant 0 : index
    %c0_27 = arith.constant 0 : index
    %47 = vector.load %arg7[%c0_25, %c0_26, %c0_27] : memref<1x1x128xf32, #tpu.memory_space<vmem>>, vector<1x1x128xf32>
    %48 = vector.shape_cast %47 : vector<1x1x128xf32> to vector<1x128xf32>
    %49 = vector.broadcast %48 : vector<1x128xf32> to vector<8x128xf32>
    %50 = arith.mulf %49, %40 : vector<8x128xf32>
    %51 = arith.mulf %50, %46 : vector<8x128xf32>
    %c0_28 = arith.constant 0 : index
    %c0_29 = arith.constant 0 : index
    %52 = vector.load %arg9[%c0_28, %c0_29] : memref<8x128xf32, #tpu.memory_space<vmem>>, vector<8x128xf32>
    tpu.vector_store %arg9[%c0_28, %c0_29], %51 {strides = array<i32>} : memref<8x128xf32, #tpu.memory_space<vmem>>, vector<8x128xf32>,
    return
  }
  func.func @transform_0(%arg0: i32, %arg1: memref<3xi32, #tpu.memory_space<smem>>) -> (i32, i32) {
    %c0_i32 = arith.constant 0 : i32
    %c0_i32_0 = arith.constant 0 : i32
    return %arg0, %c0_i32 : i32, i32
  }
  func.func @transform_1(%arg0: i32, %arg1: memref<3xi32, #tpu.memory_space<smem>>) -> (i32, i32, i32) {
    %0 = arith.index_cast %arg0 : i32 to index
    %1 = memref.load %arg1[%0] : memref<3xi32, #tpu.memory_space<smem>>
    %c0_i32 = arith.constant 0 : i32
    %c0_i32_0 = arith.constant 0 : i32
    %c0_i32_1 = arith.constant 0 : i32
    return %1, %c0_i32, %c0_i32_0 : i32, i32, i32
  }
  func.func @transform_2(%arg0: i32, %arg1: memref<3xi32, #tpu.memory_space<smem>>) -> (i32, i32, i32) {
    %0 = arith.index_cast %arg0 : i32 to index
    %1 = memref.load %arg1[%0] : memref<3xi32, #tpu.memory_space<smem>>
    %c0_i32 = arith.constant 0 : i32
    %c0_i32_0 = arith.constant 0 : i32
    %c0_i32_1 = arith.constant 0 : i32
    return %1, %c0_i32, %c0_i32_0 : i32, i32, i32
  }
  func.func @transform_3(%arg0: i32, %arg1: memref<3xi32, #tpu.memory_space<smem>>) -> (i32, i32, i32) {
    %0 = arith.index_cast %arg0 : i32 to index
    %1 = memref.load %arg1[%0] : memref<3xi32, #tpu.memory_space<smem>>
    %c0_i32 = arith.constant 0 : i32
    %c0_i32_0 = arith.constant 0 : i32
    %c0_i32_1 = arith.constant 0 : i32
    return %1, %c0_i32, %c0_i32_0 : i32, i32, i32
  }
  func.func @transform_4(%arg0: i32, %arg1: memref<3xi32, #tpu.memory_space<smem>>) -> (i32, i32, i32) {
    %0 = arith.index_cast %arg0 : i32 to index
    %1 = memref.load %arg1[%0] : memref<3xi32, #tpu.memory_space<smem>>
    %c0_i32 = arith.constant 0 : i32
    %c0_i32_0 = arith.constant 0 : i32
    %c0_i32_1 = arith.constant 0 : i32
    return %1, %c0_i32, %c0_i32_0 : i32, i32, i32
  }
  func.func @transform_5(%arg0: i32, %arg1: memref<3xi32, #tpu.memory_space<smem>>) -> (i32, i32, i32) {
    %0 = arith.index_cast %arg0 : i32 to index
    %1 = memref.load %arg1[%0] : memref<3xi32, #tpu.memory_space<smem>>
    %c0_i32 = arith.constant 0 : i32
    %c0_i32_0 = arith.constant 0 : i32
    %c0_i32_1 = arith.constant 0 : i32
    return %1, %c0_i32, %c0_i32_0 : i32, i32, i32
  }
  func.func @transform_6(%arg0: i32, %arg1: memref<3xi32, #tpu.memory_space<smem>>) -> (i32, i32, i32) {
    %0 = arith.index_cast %arg0 : i32 to index
    %1 = memref.load %arg1[%0] : memref<3xi32, #tpu.memory_space<smem>>
    %c0_i32 = arith.constant 0 : i32
    %c0_i32_0 = arith.constant 0 : i32
    %c0_i32_1 = arith.constant 0 : i32
    return %1, %c0_i32, %c0_i32_0 : i32, i32, i32
  }
  func.func @transform_7(%arg0: i32, %arg1: memref<3xi32, #tpu.memory_space<smem>>) -> (i32, i32) {
    %c0_i32 = arith.constant 0 : i32
    %c0_i32_0 = arith.constant 0 : i32
    return %arg0, %c0_i32 : i32, i32
  }
  func.func @transform_8(%arg0: i32, %arg1: memref<3xi32, #tpu.memory_space<smem>>) -> (i32, i32) {
    %c0_i32 = arith.constant 0 : i32
    %c0_i32_0 = arith.constant 0 : i32
    return %arg0, %c0_i32 : i32, i32
  }
}

module attributes {stable_mosaic.version = 11 : i64} {
  func.func @_gmm_bias_kernel(%arg0: i32, %arg1: memref<3xi32, #tpu.memory_space<smem>>, %arg2: memref<8x128xf32, #tpu.memory_space<vmem>>, %arg3: memref<1x128x7xf32, #tpu.memory_space<vmem>>, %arg4: memref<1x1x7xf32, #tpu.memory_space<vmem>>, %arg5: memref<8x7xf32, #tpu.memory_space<vmem>>) attributes {dimension_semantics = [#tpu.dimension_semantics<parallel>], iteration_bounds = array<i64: 3>, scalar_prefetch = 1 : i64, scratch_operands = 0 : i64, tpu.core_type = #tpu.core_type<tc>, window_params = [{transform_indices = @transform_0, window_bounds = array<i64: 8, 128>}, {transform_indices = @transform_1, window_bounds = array<i64: 1, 128, 7>}, {transform_indices = @transform_2, window_bounds = array<i64: 1, 1, 7>}, {transform_indices = @transform_3, window_bounds = array<i64: 8, 7>}]} {
    %c0 = arith.constant 0 : index
    %c0_0 = arith.constant 0 : index
    %0 = vector.load %arg2[%c0, %c0_0] : memref<8x128xf32, #tpu.memory_space<vmem>>, vector<8x128xf32>
    %c0_1 = arith.constant 0 : index
    %c0_2 = arith.constant 0 : index
    %c0_3 = arith.constant 0 : index
    %1 = vector.load %arg3[%c0_1, %c0_2, %c0_3] : memref<1x128x7xf32, #tpu.memory_space<vmem>>, vector<1x128x7xf32>
    %2 = vector.shape_cast %1 : vector<1x128x7xf32> to vector<128x7xf32>
    %cst = arith.constant dense<0.000000e+00> : vector<8x7xf32>
    %3 = tpu.matmul %0, %2, %cst {dimension_numbers = #tpu.dot_dimension_numbers<[1], [0], [0], [1], [0, 0, 1, 1], [], []>} : vector<8x128xf32>, vector<128x7xf32>, vector<8x7xf32> -> vector<8x7xf32>
    %c0_4 = arith.constant 0 : index
    %c0_5 = arith.constant 0 : index
    %c0_6 = arith.constant 0 : index
    %4 = vector.load %arg4[%c0_4, %c0_5, %c0_6] : memref<1x1x7xf32, #tpu.memory_space<vmem>>, vector<1x1x7xf32>
    %5 = vector.shape_cast %4 : vector<1x1x7xf32> to vector<1x7xf32>
    %6 = vector.broadcast %5 : vector<1x7xf32> to vector<8x7xf32>
    %7 = arith.addf %3, %6 : vector<8x7xf32>
    %c0_7 = arith.constant 0 : index
    %c0_8 = arith.constant 0 : index
    %8 = vector.load %arg5[%c0_7, %c0_8] : memref<8x7xf32, #tpu.memory_space<vmem>>, vector<8x7xf32>
    tpu.vector_store %arg5[%c0_7, %c0_8], %7 {strides = array<i32>} : memref<8x7xf32, #tpu.memory_space<vmem>>, vector<8x7xf32>,
    return
  }
  func.func @transform_0(%arg0: i32, %arg1: memref<3xi32, #tpu.memory_space<smem>>) -> (i32, i32) {
    %c0_i32 = arith.constant 0 : i32
    %c0_i32_0 = arith.constant 0 : i32
    return %arg0, %c0_i32 : i32, i32
  }
  func.func @transform_1(%arg0: i32, %arg1: memref<3xi32, #tpu.memory_space<smem>>) -> (i32, i32, i32) {
    %0 = arith.index_cast %arg0 : i32 to index
    %1 = memref.load %arg1[%0] : memref<3xi32, #tpu.memory_space<smem>>
    %c0_i32 = arith.constant 0 : i32
    %c0_i32_0 = arith.constant 0 : i32
    %c0_i32_1 = arith.constant 0 : i32
    return %1, %c0_i32, %c0_i32_0 : i32, i32, i32
  }
  func.func @transform_2(%arg0: i32, %arg1: memref<3xi32, #tpu.memory_space<smem>>) -> (i32, i32, i32) {
    %0 = arith.index_cast %arg0 : i32 to index
    %1 = memref.load %arg1[%0] : memref<3xi32, #tpu.memory_space<smem>>
    %c0_i32 = arith.constant 0 : i32
    %c0_i32_0 = arith.constant 0 : i32
    %c0_i32_1 = arith.constant 0 : i32
    return %1, %c0_i32, %c0_i32_0 : i32, i32, i32
  }
  func.func @transform_3(%arg0: i32, %arg1: memref<3xi32, #tpu.memory_space<smem>>) -> (i32, i32) {
    %c0_i32 = arith.constant 0 : i32
    %c0_i32_0 = arith.constant 0 : i32
    return %arg0, %c0_i32 : i32, i32
  }
}

module attributes {stable_mosaic.version = 11 : i64} {
  func.func @_gmm_bias_kernel(%arg0: i32, %arg1: memref<3xi32, #tpu.memory_space<smem>>, %arg2: memref<8x128xf32, #tpu.memory_space<vmem>>, %arg3: memref<1x128x1xf32, #tpu.memory_space<vmem>>, %arg4: memref<1x1x1xf32, #tpu.memory_space<vmem>>, %arg5: memref<8x1xf32, #tpu.memory_space<vmem>>) attributes {dimension_semantics = [#tpu.dimension_semantics<parallel>], iteration_bounds = array<i64: 3>, scalar_prefetch = 1 : i64, scratch_operands = 0 : i64, tpu.core_type = #tpu.core_type<tc>, window_params = [{transform_indices = @transform_0, window_bounds = array<i64: 8, 128>}, {transform_indices = @transform_1, window_bounds = array<i64: 1, 128, 1>}, {transform_indices = @transform_2, window_bounds = array<i64: 1, 1, 1>}, {transform_indices = @transform_3, window_bounds = array<i64: 8, 1>}]} {
    %c0 = arith.constant 0 : index
    %c0_0 = arith.constant 0 : index
    %0 = vector.load %arg2[%c0, %c0_0] : memref<8x128xf32, #tpu.memory_space<vmem>>, vector<8x128xf32>
    %c0_1 = arith.constant 0 : index
    %c0_2 = arith.constant 0 : index
    %c0_3 = arith.constant 0 : index
    %1 = vector.load %arg3[%c0_1, %c0_2, %c0_3] : memref<1x128x1xf32, #tpu.memory_space<vmem>>, vector<1x128x1xf32>
    %2 = vector.shape_cast %1 : vector<1x128x1xf32> to vector<128x1xf32>
    %cst = arith.constant dense<0.000000e+00> : vector<8x1xf32>
    %3 = tpu.matmul %0, %2, %cst {dimension_numbers = #tpu.dot_dimension_numbers<[1], [0], [0], [1], [0, 0, 1, 1], [], []>} : vector<8x128xf32>, vector<128x1xf32>, vector<8x1xf32> -> vector<8x1xf32>
    %c0_4 = arith.constant 0 : index
    %c0_5 = arith.constant 0 : index
    %c0_6 = arith.constant 0 : index
    %4 = vector.load %arg4[%c0_4, %c0_5, %c0_6] : memref<1x1x1xf32, #tpu.memory_space<vmem>>, vector<1x1x1xf32>
    %5 = vector.shape_cast %4 : vector<1x1x1xf32> to vector<1x1xf32>
    %6 = vector.broadcast %5 : vector<1x1xf32> to vector<8x1xf32>
    %7 = arith.addf %3, %6 : vector<8x1xf32>
    %c0_7 = arith.constant 0 : index
    %c0_8 = arith.constant 0 : index
    %8 = vector.load %arg5[%c0_7, %c0_8] : memref<8x1xf32, #tpu.memory_space<vmem>>, vector<8x1xf32>
    tpu.vector_store %arg5[%c0_7, %c0_8], %7 {strides = array<i32>} : memref<8x1xf32, #tpu.memory_space<vmem>>, vector<8x1xf32>,
    return
  }
  func.func @transform_0(%arg0: i32, %arg1: memref<3xi32, #tpu.memory_space<smem>>) -> (i32, i32) {
    %c0_i32 = arith.constant 0 : i32
    %c0_i32_0 = arith.constant 0 : i32
    return %arg0, %c0_i32 : i32, i32
  }
  func.func @transform_1(%arg0: i32, %arg1: memref<3xi32, #tpu.memory_space<smem>>) -> (i32, i32, i32) {
    %0 = arith.index_cast %arg0 : i32 to index
    %1 = memref.load %arg1[%0] : memref<3xi32, #tpu.memory_space<smem>>
    %c0_i32 = arith.constant 0 : i32
    %c0_i32_0 = arith.constant 0 : i32
    %c0_i32_1 = arith.constant 0 : i32
    return %1, %c0_i32, %c0_i32_0 : i32, i32, i32
  }
  func.func @transform_2(%arg0: i32, %arg1: memref<3xi32, #tpu.memory_space<smem>>) -> (i32, i32, i32) {
    %0 = arith.index_cast %arg0 : i32 to index
    %1 = memref.load %arg1[%0] : memref<3xi32, #tpu.memory_space<smem>>
    %c0_i32 = arith.constant 0 : i32
    %c0_i32_0 = arith.constant 0 : i32
    %c0_i32_1 = arith.constant 0 : i32
    return %1, %c0_i32, %c0_i32_0 : i32, i32, i32
  }
  func.func @transform_3(%arg0: i32, %arg1: memref<3xi32, #tpu.memory_space<smem>>) -> (i32, i32) {
    %c0_i32 = arith.constant 0 : i32
    %c0_i32_0 = arith.constant 0 : i32
    return %arg0, %c0_i32 : i32, i32
  }
}

module attributes {stable_mosaic.version = 11 : i64} {
  func.func @_hidden_bwd_kernel(%arg0: i32, %arg1: memref<3xi32, #tpu.memory_space<smem>>, %arg2: memref<8x128xf32, #tpu.memory_space<vmem>>, %arg3: memref<8x128xf32, #tpu.memory_space<vmem>>, %arg4: memref<1x84x128xf32, #tpu.memory_space<vmem>>, %arg5: memref<1x1x128xf32, #tpu.memory_space<vmem>>, %arg6: memref<1x1x128xf32, #tpu.memory_space<vmem>>, %arg7: memref<1x1x128xf32, #tpu.memory_space<vmem>>, %arg8: memref<1x1x128xf32, #tpu.memory_space<vmem>>, %arg9: memref<8x84xf32, #tpu.memory_space<vmem>>) attributes {dimension_semantics = [#tpu.dimension_semantics<parallel>], iteration_bounds = array<i64: 3>, scalar_prefetch = 1 : i64, scratch_operands = 0 : i64, tpu.core_type = #tpu.core_type<tc>, window_params = [{transform_indices = @transform_0, window_bounds = array<i64: 8, 128>}, {transform_indices = @transform_1, window_bounds = array<i64: 8, 128>}, {transform_indices = @transform_2, window_bounds = array<i64: 1, 84, 128>}, {transform_indices = @transform_3, window_bounds = array<i64: 1, 1, 128>}, {transform_indices = @transform_4, window_bounds = array<i64: 1, 1, 128>}, {transform_indices = @transform_5, window_bounds = array<i64: 1, 1, 128>}, {transform_indices = @transform_6, window_bounds = array<i64: 1, 1, 128>}, {transform_indices = @transform_7, window_bounds = array<i64: 8, 84>}]} {
    %c0 = arith.constant 0 : index
    %c0_0 = arith.constant 0 : index
    %0 = vector.load %arg2[%c0, %c0_0] : memref<8x128xf32, #tpu.memory_space<vmem>>, vector<8x128xf32>
    %cst = arith.constant dense<0.000000e+00> : vector<8xf32>
    %1 = vector.multi_reduction <add>, %0, %cst [1] : vector<8x128xf32> to vector<8xf32>
    %2 = vector.shape_cast %1 : vector<8xf32> to vector<8x1xf32>
    %cst_1 = arith.constant 1.280000e+02 : f32
    %3 = vector.broadcast %cst_1 : f32 to vector<8x1xf32>
    %4 = arith.divf %2, %3 : vector<8x1xf32>
    %5 = vector.broadcast %4 : vector<8x1xf32> to vector<8x128xf32>
    %6 = arith.subf %0, %5 : vector<8x128xf32>
    %7 = arith.mulf %6, %6 : vector<8x128xf32>
    %cst_2 = arith.constant dense<0.000000e+00> : vector<8xf32>
    %8 = vector.multi_reduction <add>, %7, %cst_2 [1] : vector<8x128xf32> to vector<8xf32>
    %9 = vector.shape_cast %8 : vector<8xf32> to vector<8x1xf32>
    %cst_3 = arith.constant 1.280000e+02 : f32
    %10 = vector.broadcast %cst_3 : f32 to vector<8x1xf32>
    %11 = arith.divf %9, %10 : vector<8x1xf32>
    %cst_4 = arith.constant 9.99999974E-6 : f32
    %12 = vector.broadcast %cst_4 : f32 to vector<8x1xf32>
    %13 = arith.addf %11, %12 : vector<8x1xf32>
    %14 = math.rsqrt %13 : vector<8x1xf32>
    %15 = vector.broadcast %4 : vector<8x1xf32> to vector<8x128xf32>
    %16 = arith.subf %0, %15 : vector<8x128xf32>
    %17 = vector.broadcast %14 : vector<8x1xf32> to vector<8x128xf32>
    %18 = arith.mulf %16, %17 : vector<8x128xf32>
    %c0_5 = arith.constant 0 : index
    %c0_6 = arith.constant 0 : index
    %c0_7 = arith.constant 0 : index
    %19 = vector.load %arg5[%c0_5, %c0_6, %c0_7] : memref<1x1x128xf32, #tpu.memory_space<vmem>>, vector<1x1x128xf32>
    %20 = vector.shape_cast %19 : vector<1x1x128xf32> to vector<1x128xf32>
    %21 = vector.broadcast %20 : vector<1x128xf32> to vector<8x128xf32>
    %22 = arith.mulf %18, %21 : vector<8x128xf32>
    %c0_8 = arith.constant 0 : index
    %c0_9 = arith.constant 0 : index
    %c0_10 = arith.constant 0 : index
    %23 = vector.load %arg6[%c0_8, %c0_9, %c0_10] : memref<1x1x128xf32, #tpu.memory_space<vmem>>, vector<1x1x128xf32>
    %24 = vector.shape_cast %23 : vector<1x1x128xf32> to vector<1x128xf32>
    %25 = vector.broadcast %24 : vector<1x128xf32> to vector<8x128xf32>
    %26 = arith.addf %22, %25 : vector<8x128xf32>
    %c0_11 = arith.constant 0 : index
    %c0_12 = arith.constant 0 : index
    %c0_13 = arith.constant 0 : index
    %27 = vector.load %arg8[%c0_11, %c0_12, %c0_13] : memref<1x1x128xf32, #tpu.memory_space<vmem>>, vector<1x1x128xf32>
    %28 = vector.shape_cast %27 : vector<1x1x128xf32> to vector<1x128xf32>
    %29 = vector.broadcast %28 : vector<1x128xf32> to vector<8x128xf32>
    %30 = arith.mulf %26, %29 : vector<8x128xf32>
    %cst_14 = arith.constant 0.000000e+00 : f32
    %31 = vector.broadcast %cst_14 : f32 to vector<8x128xf32>
    %32 = arith.subf %31, %30 : vector<8x128xf32>
    %33 = math.exp %32 : vector<8x128xf32>
    %cst_15 = arith.constant 1.000000e+00 : f32
    %34 = vector.broadcast %cst_15 : f32 to vector<8x128xf32>
    %35 = arith.addf %34, %33 : vector<8x128xf32>
    %36 = tpu.reciprocal %35 {approx = true} : vector<8x128xf32> -> vector<8x128xf32>
    %c0_16 = arith.constant 0 : index
    %c0_17 = arith.constant 0 : index
    %37 = vector.load %arg3[%c0_16, %c0_17] : memref<8x128xf32, #tpu.memory_space<vmem>>, vector<8x128xf32>
    %c0_18 = arith.constant 0 : index
    %c0_19 = arith.constant 0 : index
    %c0_20 = arith.constant 0 : index
    %38 = vector.load %arg7[%c0_18, %c0_19, %c0_20] : memref<1x1x128xf32, #tpu.memory_space<vmem>>, vector<1x1x128xf32>
    %39 = vector.shape_cast %38 : vector<1x1x128xf32> to vector<1x128xf32>
    %40 = vector.broadcast %39 : vector<1x128xf32> to vector<8x128xf32>
    %41 = arith.mulf %37, %40 : vector<8x128xf32>
    %42 = arith.mulf %41, %36 : vector<8x128xf32>
    %cst_21 = arith.constant 1.000000e+00 : f32
    %43 = vector.broadcast %cst_21 : f32 to vector<8x128xf32>
    %44 = arith.subf %43, %36 : vector<8x128xf32>
    %45 = arith.mulf %30, %44 : vector<8x128xf32>
    %cst_22 = arith.constant 1.000000e+00 : f32
    %46 = vector.broadcast %cst_22 : f32 to vector<8x128xf32>
    %47 = arith.addf %46, %45 : vector<8x128xf32>
    %48 = arith.mulf %42, %47 : vector<8x128xf32>
    %c0_23 = arith.constant 0 : index
    %c0_24 = arith.constant 0 : index
    %c0_25 = arith.constant 0 : index
    %49 = vector.load %arg8[%c0_23, %c0_24, %c0_25] : memref<1x1x128xf32, #tpu.memory_space<vmem>>, vector<1x1x128xf32>
    %50 = vector.shape_cast %49 : vector<1x1x128xf32> to vector<1x128xf32>
    %51 = vector.broadcast %50 : vector<1x128xf32> to vector<8x128xf32>
    %52 = arith.mulf %48, %51 : vector<8x128xf32>
    %c0_26 = arith.constant 0 : index
    %c0_27 = arith.constant 0 : index
    %c0_28 = arith.constant 0 : index
    %53 = vector.load %arg5[%c0_26, %c0_27, %c0_28] : memref<1x1x128xf32, #tpu.memory_space<vmem>>, vector<1x1x128xf32>
    %54 = vector.shape_cast %53 : vector<1x1x128xf32> to vector<1x128xf32>
    %55 = vector.broadcast %54 : vector<1x128xf32> to vector<8x128xf32>
    %56 = arith.mulf %52, %55 : vector<8x128xf32>
    %cst_29 = arith.constant dense<0.000000e+00> : vector<8xf32>
    %57 = vector.multi_reduction <add>, %56, %cst_29 [1] : vector<8x128xf32> to vector<8xf32>
    %58 = vector.shape_cast %57 : vector<8xf32> to vector<8x1xf32>
    %cst_30 = arith.constant 1.280000e+02 : f32
    %59 = vector.broadcast %cst_30 : f32 to vector<8x1xf32>
    %60 = arith.divf %58, %59 : vector<8x1xf32>
    %61 = vector.broadcast %60 : vector<8x1xf32> to vector<8x128xf32>
    %62 = arith.subf %56, %61 : vector<8x128xf32>
    %63 = arith.mulf %56, %18 : vector<8x128xf32>
    %cst_31 = arith.constant dense<0.000000e+00> : vector<8xf32>
    %64 = vector.multi_reduction <add>, %63, %cst_31 [1] : vector<8x128xf32> to vector<8xf32>
    %65 = vector.shape_cast %64 : vector<8xf32> to vector<8x1xf32>
    %cst_32 = arith.constant 1.280000e+02 : f32
    %66 = vector.broadcast %cst_32 : f32 to vector<8x1xf32>
    %67 = arith.divf %65, %66 : vector<8x1xf32>
    %68 = vector.broadcast %67 : vector<8x1xf32> to vector<8x128xf32>
    %69 = arith.mulf %18, %68 : vector<8x128xf32>
    %70 = arith.subf %62, %69 : vector<8x128xf32>
    %71 = vector.broadcast %14 : vector<8x1xf32> to vector<8x128xf32>
    %72 = arith.mulf %71, %70 : vector<8x128xf32>
    %73 = arith.truncf %72 : vector<8x128xf32> to vector<8x128xbf16>
    %c0_33 = arith.constant 0 : index
    %c0_34 = arith.constant 0 : index
    %c0_35 = arith.constant 0 : index
    %74 = vector.load %arg4[%c0_33, %c0_34, %c0_35] : memref<1x84x128xf32, #tpu.memory_space<vmem>>, vector<1x84x128xf32>
    %75 = vector.shape_cast %74 : vector<1x84x128xf32> to vector<84x128xf32>
    %76 = arith.truncf %75 : vector<84x128xf32> to vector<84x128xbf16>
    %cst_36 = arith.constant dense<0.000000e+00> : vector<8x84xf32>
    %77 = tpu.matmul %73, %76, %cst_36 {dimension_numbers = #tpu.dot_dimension_numbers<[1], [1], [0], [0], [0, 0, 1, 0], [], []>} : vector<8x128xbf16>, vector<84x128xbf16>, vector<8x84xf32> -> vector<8x84xf32>
    %c0_37 = arith.constant 0 : index
    %c0_38 = arith.constant 0 : index
    %78 = vector.load %arg9[%c0_37, %c0_38] : memref<8x84xf32, #tpu.memory_space<vmem>>, vector<8x84xf32>
    tpu.vector_store %arg9[%c0_37, %c0_38], %77 {strides = array<i32>} : memref<8x84xf32, #tpu.memory_space<vmem>>, vector<8x84xf32>,
    return
  }
  func.func @transform_0(%arg0: i32, %arg1: memref<3xi32, #tpu.memory_space<smem>>) -> (i32, i32) {
    %c0_i32 = arith.constant 0 : i32
    %c0_i32_0 = arith.constant 0 : i32
    return %arg0, %c0_i32 : i32, i32
  }
  func.func @transform_1(%arg0: i32, %arg1: memref<3xi32, #tpu.memory_space<smem>>) -> (i32, i32) {
    %c0_i32 = arith.constant 0 : i32
    %c0_i32_0 = arith.constant 0 : i32
    return %arg0, %c0_i32 : i32, i32
  }
  func.func @transform_2(%arg0: i32, %arg1: memref<3xi32, #tpu.memory_space<smem>>) -> (i32, i32, i32) {
    %0 = arith.index_cast %arg0 : i32 to index
    %1 = memref.load %arg1[%0] : memref<3xi32, #tpu.memory_space<smem>>
    %c0_i32 = arith.constant 0 : i32
    %c0_i32_0 = arith.constant 0 : i32
    %c0_i32_1 = arith.constant 0 : i32
    return %1, %c0_i32, %c0_i32_0 : i32, i32, i32
  }
  func.func @transform_3(%arg0: i32, %arg1: memref<3xi32, #tpu.memory_space<smem>>) -> (i32, i32, i32) {
    %0 = arith.index_cast %arg0 : i32 to index
    %1 = memref.load %arg1[%0] : memref<3xi32, #tpu.memory_space<smem>>
    %c0_i32 = arith.constant 0 : i32
    %c0_i32_0 = arith.constant 0 : i32
    %c0_i32_1 = arith.constant 0 : i32
    return %1, %c0_i32, %c0_i32_0 : i32, i32, i32
  }
  func.func @transform_4(%arg0: i32, %arg1: memref<3xi32, #tpu.memory_space<smem>>) -> (i32, i32, i32) {
    %0 = arith.index_cast %arg0 : i32 to index
    %1 = memref.load %arg1[%0] : memref<3xi32, #tpu.memory_space<smem>>
    %c0_i32 = arith.constant 0 : i32
    %c0_i32_0 = arith.constant 0 : i32
    %c0_i32_1 = arith.constant 0 : i32
    return %1, %c0_i32, %c0_i32_0 : i32, i32, i32
  }
  func.func @transform_5(%arg0: i32, %arg1: memref<3xi32, #tpu.memory_space<smem>>) -> (i32, i32, i32) {
    %0 = arith.index_cast %arg0 : i32 to index
    %1 = memref.load %arg1[%0] : memref<3xi32, #tpu.memory_space<smem>>
    %c0_i32 = arith.constant 0 : i32
    %c0_i32_0 = arith.constant 0 : i32
    %c0_i32_1 = arith.constant 0 : i32
    return %1, %c0_i32, %c0_i32_0 : i32, i32, i32
  }
  func.func @transform_6(%arg0: i32, %arg1: memref<3xi32, #tpu.memory_space<smem>>) -> (i32, i32, i32) {
    %0 = arith.index_cast %arg0 : i32 to index
    %1 = memref.load %arg1[%0] : memref<3xi32, #tpu.memory_space<smem>>
    %c0_i32 = arith.constant 0 : i32
    %c0_i32_0 = arith.constant 0 : i32
    %c0_i32_1 = arith.constant 0 : i32
    return %1, %c0_i32, %c0_i32_0 : i32, i32, i32
  }
  func.func @transform_7(%arg0: i32, %arg1: memref<3xi32, #tpu.memory_space<smem>>) -> (i32, i32) {
    %c0_i32 = arith.constant 0 : i32
    %c0_i32_0 = arith.constant 0 : i32
    return %arg0, %c0_i32 : i32, i32
  }
}

module attributes {stable_mosaic.version = 11 : i64} {
  func.func @_hidden_bwd_kernel(%arg0: i32, %arg1: memref<3xi32, #tpu.memory_space<smem>>, %arg2: memref<8x128xf32, #tpu.memory_space<vmem>>, %arg3: memref<8x128xf32, #tpu.memory_space<vmem>>, %arg4: memref<1x128x128xf32, #tpu.memory_space<vmem>>, %arg5: memref<1x1x128xf32, #tpu.memory_space<vmem>>, %arg6: memref<1x1x128xf32, #tpu.memory_space<vmem>>, %arg7: memref<1x1x128xf32, #tpu.memory_space<vmem>>, %arg8: memref<1x1x128xf32, #tpu.memory_space<vmem>>, %arg9: memref<8x128xf32, #tpu.memory_space<vmem>>) attributes {dimension_semantics = [#tpu.dimension_semantics<parallel>], iteration_bounds = array<i64: 3>, scalar_prefetch = 1 : i64, scratch_operands = 0 : i64, tpu.core_type = #tpu.core_type<tc>, window_params = [{transform_indices = @transform_0, window_bounds = array<i64: 8, 128>}, {transform_indices = @transform_1, window_bounds = array<i64: 8, 128>}, {transform_indices = @transform_2, window_bounds = array<i64: 1, 128, 128>}, {transform_indices = @transform_3, window_bounds = array<i64: 1, 1, 128>}, {transform_indices = @transform_4, window_bounds = array<i64: 1, 1, 128>}, {transform_indices = @transform_5, window_bounds = array<i64: 1, 1, 128>}, {transform_indices = @transform_6, window_bounds = array<i64: 1, 1, 128>}, {transform_indices = @transform_7, window_bounds = array<i64: 8, 128>}]} {
    %c0 = arith.constant 0 : index
    %c0_0 = arith.constant 0 : index
    %0 = vector.load %arg2[%c0, %c0_0] : memref<8x128xf32, #tpu.memory_space<vmem>>, vector<8x128xf32>
    %cst = arith.constant dense<0.000000e+00> : vector<8xf32>
    %1 = vector.multi_reduction <add>, %0, %cst [1] : vector<8x128xf32> to vector<8xf32>
    %2 = vector.shape_cast %1 : vector<8xf32> to vector<8x1xf32>
    %cst_1 = arith.constant 1.280000e+02 : f32
    %3 = vector.broadcast %cst_1 : f32 to vector<8x1xf32>
    %4 = arith.divf %2, %3 : vector<8x1xf32>
    %5 = vector.broadcast %4 : vector<8x1xf32> to vector<8x128xf32>
    %6 = arith.subf %0, %5 : vector<8x128xf32>
    %7 = arith.mulf %6, %6 : vector<8x128xf32>
    %cst_2 = arith.constant dense<0.000000e+00> : vector<8xf32>
    %8 = vector.multi_reduction <add>, %7, %cst_2 [1] : vector<8x128xf32> to vector<8xf32>
    %9 = vector.shape_cast %8 : vector<8xf32> to vector<8x1xf32>
    %cst_3 = arith.constant 1.280000e+02 : f32
    %10 = vector.broadcast %cst_3 : f32 to vector<8x1xf32>
    %11 = arith.divf %9, %10 : vector<8x1xf32>
    %cst_4 = arith.constant 9.99999974E-6 : f32
    %12 = vector.broadcast %cst_4 : f32 to vector<8x1xf32>
    %13 = arith.addf %11, %12 : vector<8x1xf32>
    %14 = math.rsqrt %13 : vector<8x1xf32>
    %15 = vector.broadcast %4 : vector<8x1xf32> to vector<8x128xf32>
    %16 = arith.subf %0, %15 : vector<8x128xf32>
    %17 = vector.broadcast %14 : vector<8x1xf32> to vector<8x128xf32>
    %18 = arith.mulf %16, %17 : vector<8x128xf32>
    %c0_5 = arith.constant 0 : index
    %c0_6 = arith.constant 0 : index
    %c0_7 = arith.constant 0 : index
    %19 = vector.load %arg5[%c0_5, %c0_6, %c0_7] : memref<1x1x128xf32, #tpu.memory_space<vmem>>, vector<1x1x128xf32>
    %20 = vector.shape_cast %19 : vector<1x1x128xf32> to vector<1x128xf32>
    %21 = vector.broadcast %20 : vector<1x128xf32> to vector<8x128xf32>
    %22 = arith.mulf %18, %21 : vector<8x128xf32>
    %c0_8 = arith.constant 0 : index
    %c0_9 = arith.constant 0 : index
    %c0_10 = arith.constant 0 : index
    %23 = vector.load %arg6[%c0_8, %c0_9, %c0_10] : memref<1x1x128xf32, #tpu.memory_space<vmem>>, vector<1x1x128xf32>
    %24 = vector.shape_cast %23 : vector<1x1x128xf32> to vector<1x128xf32>
    %25 = vector.broadcast %24 : vector<1x128xf32> to vector<8x128xf32>
    %26 = arith.addf %22, %25 : vector<8x128xf32>
    %c0_11 = arith.constant 0 : index
    %c0_12 = arith.constant 0 : index
    %c0_13 = arith.constant 0 : index
    %27 = vector.load %arg8[%c0_11, %c0_12, %c0_13] : memref<1x1x128xf32, #tpu.memory_space<vmem>>, vector<1x1x128xf32>
    %28 = vector.shape_cast %27 : vector<1x1x128xf32> to vector<1x128xf32>
    %29 = vector.broadcast %28 : vector<1x128xf32> to vector<8x128xf32>
    %30 = arith.mulf %26, %29 : vector<8x128xf32>
    %cst_14 = arith.constant 0.000000e+00 : f32
    %31 = vector.broadcast %cst_14 : f32 to vector<8x128xf32>
    %32 = arith.subf %31, %30 : vector<8x128xf32>
    %33 = math.exp %32 : vector<8x128xf32>
    %cst_15 = arith.constant 1.000000e+00 : f32
    %34 = vector.broadcast %cst_15 : f32 to vector<8x128xf32>
    %35 = arith.addf %34, %33 : vector<8x128xf32>
    %36 = tpu.reciprocal %35 {approx = true} : vector<8x128xf32> -> vector<8x128xf32>
    %c0_16 = arith.constant 0 : index
    %c0_17 = arith.constant 0 : index
    %37 = vector.load %arg3[%c0_16, %c0_17] : memref<8x128xf32, #tpu.memory_space<vmem>>, vector<8x128xf32>
    %c0_18 = arith.constant 0 : index
    %c0_19 = arith.constant 0 : index
    %c0_20 = arith.constant 0 : index
    %38 = vector.load %arg7[%c0_18, %c0_19, %c0_20] : memref<1x1x128xf32, #tpu.memory_space<vmem>>, vector<1x1x128xf32>
    %39 = vector.shape_cast %38 : vector<1x1x128xf32> to vector<1x128xf32>
    %40 = vector.broadcast %39 : vector<1x128xf32> to vector<8x128xf32>
    %41 = arith.mulf %37, %40 : vector<8x128xf32>
    %42 = arith.mulf %41, %36 : vector<8x128xf32>
    %cst_21 = arith.constant 1.000000e+00 : f32
    %43 = vector.broadcast %cst_21 : f32 to vector<8x128xf32>
    %44 = arith.subf %43, %36 : vector<8x128xf32>
    %45 = arith.mulf %30, %44 : vector<8x128xf32>
    %cst_22 = arith.constant 1.000000e+00 : f32
    %46 = vector.broadcast %cst_22 : f32 to vector<8x128xf32>
    %47 = arith.addf %46, %45 : vector<8x128xf32>
    %48 = arith.mulf %42, %47 : vector<8x128xf32>
    %c0_23 = arith.constant 0 : index
    %c0_24 = arith.constant 0 : index
    %c0_25 = arith.constant 0 : index
    %49 = vector.load %arg8[%c0_23, %c0_24, %c0_25] : memref<1x1x128xf32, #tpu.memory_space<vmem>>, vector<1x1x128xf32>
    %50 = vector.shape_cast %49 : vector<1x1x128xf32> to vector<1x128xf32>
    %51 = vector.broadcast %50 : vector<1x128xf32> to vector<8x128xf32>
    %52 = arith.mulf %48, %51 : vector<8x128xf32>
    %c0_26 = arith.constant 0 : index
    %c0_27 = arith.constant 0 : index
    %c0_28 = arith.constant 0 : index
    %53 = vector.load %arg5[%c0_26, %c0_27, %c0_28] : memref<1x1x128xf32, #tpu.memory_space<vmem>>, vector<1x1x128xf32>
    %54 = vector.shape_cast %53 : vector<1x1x128xf32> to vector<1x128xf32>
    %55 = vector.broadcast %54 : vector<1x128xf32> to vector<8x128xf32>
    %56 = arith.mulf %52, %55 : vector<8x128xf32>
    %cst_29 = arith.constant dense<0.000000e+00> : vector<8xf32>
    %57 = vector.multi_reduction <add>, %56, %cst_29 [1] : vector<8x128xf32> to vector<8xf32>
    %58 = vector.shape_cast %57 : vector<8xf32> to vector<8x1xf32>
    %cst_30 = arith.constant 1.280000e+02 : f32
    %59 = vector.broadcast %cst_30 : f32 to vector<8x1xf32>
    %60 = arith.divf %58, %59 : vector<8x1xf32>
    %61 = vector.broadcast %60 : vector<8x1xf32> to vector<8x128xf32>
    %62 = arith.subf %56, %61 : vector<8x128xf32>
    %63 = arith.mulf %56, %18 : vector<8x128xf32>
    %cst_31 = arith.constant dense<0.000000e+00> : vector<8xf32>
    %64 = vector.multi_reduction <add>, %63, %cst_31 [1] : vector<8x128xf32> to vector<8xf32>
    %65 = vector.shape_cast %64 : vector<8xf32> to vector<8x1xf32>
    %cst_32 = arith.constant 1.280000e+02 : f32
    %66 = vector.broadcast %cst_32 : f32 to vector<8x1xf32>
    %67 = arith.divf %65, %66 : vector<8x1xf32>
    %68 = vector.broadcast %67 : vector<8x1xf32> to vector<8x128xf32>
    %69 = arith.mulf %18, %68 : vector<8x128xf32>
    %70 = arith.subf %62, %69 : vector<8x128xf32>
    %71 = vector.broadcast %14 : vector<8x1xf32> to vector<8x128xf32>
    %72 = arith.mulf %71, %70 : vector<8x128xf32>
    %73 = arith.truncf %72 : vector<8x128xf32> to vector<8x128xbf16>
    %c0_33 = arith.constant 0 : index
    %c0_34 = arith.constant 0 : index
    %c0_35 = arith.constant 0 : index
    %74 = vector.load %arg4[%c0_33, %c0_34, %c0_35] : memref<1x128x128xf32, #tpu.memory_space<vmem>>, vector<1x128x128xf32>
    %75 = vector.shape_cast %74 : vector<1x128x128xf32> to vector<128x128xf32>
    %76 = arith.truncf %75 : vector<128x128xf32> to vector<128x128xbf16>
    %cst_36 = arith.constant dense<0.000000e+00> : vector<8x128xf32>
    %77 = tpu.matmul %73, %76, %cst_36 {dimension_numbers = #tpu.dot_dimension_numbers<[1], [1], [0], [0], [0, 0, 1, 0], [], []>} : vector<8x128xbf16>, vector<128x128xbf16>, vector<8x128xf32> -> vector<8x128xf32>
    %c0_37 = arith.constant 0 : index
    %c0_38 = arith.constant 0 : index
    %78 = vector.load %arg9[%c0_37, %c0_38] : memref<8x128xf32, #tpu.memory_space<vmem>>, vector<8x128xf32>
    tpu.vector_store %arg9[%c0_37, %c0_38], %77 {strides = array<i32>} : memref<8x128xf32, #tpu.memory_space<vmem>>, vector<8x128xf32>,
    return
  }
  func.func @transform_0(%arg0: i32, %arg1: memref<3xi32, #tpu.memory_space<smem>>) -> (i32, i32) {
    %c0_i32 = arith.constant 0 : i32
    %c0_i32_0 = arith.constant 0 : i32
    return %arg0, %c0_i32 : i32, i32
  }
  func.func @transform_1(%arg0: i32, %arg1: memref<3xi32, #tpu.memory_space<smem>>) -> (i32, i32) {
    %c0_i32 = arith.constant 0 : i32
    %c0_i32_0 = arith.constant 0 : i32
    return %arg0, %c0_i32 : i32, i32
  }
  func.func @transform_2(%arg0: i32, %arg1: memref<3xi32, #tpu.memory_space<smem>>) -> (i32, i32, i32) {
    %0 = arith.index_cast %arg0 : i32 to index
    %1 = memref.load %arg1[%0] : memref<3xi32, #tpu.memory_space<smem>>
    %c0_i32 = arith.constant 0 : i32
    %c0_i32_0 = arith.constant 0 : i32
    %c0_i32_1 = arith.constant 0 : i32
    return %1, %c0_i32, %c0_i32_0 : i32, i32, i32
  }
  func.func @transform_3(%arg0: i32, %arg1: memref<3xi32, #tpu.memory_space<smem>>) -> (i32, i32, i32) {
    %0 = arith.index_cast %arg0 : i32 to index
    %1 = memref.load %arg1[%0] : memref<3xi32, #tpu.memory_space<smem>>
    %c0_i32 = arith.constant 0 : i32
    %c0_i32_0 = arith.constant 0 : i32
    %c0_i32_1 = arith.constant 0 : i32
    return %1, %c0_i32, %c0_i32_0 : i32, i32, i32
  }
  func.func @transform_4(%arg0: i32, %arg1: memref<3xi32, #tpu.memory_space<smem>>) -> (i32, i32, i32) {
    %0 = arith.index_cast %arg0 : i32 to index
    %1 = memref.load %arg1[%0] : memref<3xi32, #tpu.memory_space<smem>>
    %c0_i32 = arith.constant 0 : i32
    %c0_i32_0 = arith.constant 0 : i32
    %c0_i32_1 = arith.constant 0 : i32
    return %1, %c0_i32, %c0_i32_0 : i32, i32, i32
  }
  func.func @transform_5(%arg0: i32, %arg1: memref<3xi32, #tpu.memory_space<smem>>) -> (i32, i32, i32) {
    %0 = arith.index_cast %arg0 : i32 to index
    %1 = memref.load %arg1[%0] : memref<3xi32, #tpu.memory_space<smem>>
    %c0_i32 = arith.constant 0 : i32
    %c0_i32_0 = arith.constant 0 : i32
    %c0_i32_1 = arith.constant 0 : i32
    return %1, %c0_i32, %c0_i32_0 : i32, i32, i32
  }
  func.func @transform_6(%arg0: i32, %arg1: memref<3xi32, #tpu.memory_space<smem>>) -> (i32, i32, i32) {
    %0 = arith.index_cast %arg0 : i32 to index
    %1 = memref.load %arg1[%0] : memref<3xi32, #tpu.memory_space<smem>>
    %c0_i32 = arith.constant 0 : i32
    %c0_i32_0 = arith.constant 0 : i32
    %c0_i32_1 = arith.constant 0 : i32
    return %1, %c0_i32, %c0_i32_0 : i32, i32, i32
  }
  func.func @transform_7(%arg0: i32, %arg1: memref<3xi32, #tpu.memory_space<smem>>) -> (i32, i32) {
    %c0_i32 = arith.constant 0 : i32
    %c0_i32_0 = arith.constant 0 : i32
    return %arg0, %c0_i32 : i32, i32
  }
}

module attributes {stable_mosaic.version = 11 : i64} {
  func.func @_gmm_nt_kernel(%arg0: i32, %arg1: memref<13xi32, #tpu.memory_space<smem>>, %arg2: memref<8x84xf32, #tpu.memory_space<vmem>>, %arg3: memref<1x7x84xf32, #tpu.memory_space<vmem>>, %arg4: memref<8x7xf32, #tpu.memory_space<vmem>>) attributes {dimension_semantics = [#tpu.dimension_semantics<parallel>], iteration_bounds = array<i64: 13>, scalar_prefetch = 1 : i64, scratch_operands = 0 : i64, tpu.core_type = #tpu.core_type<tc>, window_params = [{transform_indices = @transform_0, window_bounds = array<i64: 8, 84>}, {transform_indices = @transform_1, window_bounds = array<i64: 1, 7, 84>}, {transform_indices = @transform_2, window_bounds = array<i64: 8, 7>}]} {
    %c0 = arith.constant 0 : index
    %c0_0 = arith.constant 0 : index
    %0 = vector.load %arg2[%c0, %c0_0] : memref<8x84xf32, #tpu.memory_space<vmem>>, vector<8x84xf32>
    %c0_1 = arith.constant 0 : index
    %c0_2 = arith.constant 0 : index
    %c0_3 = arith.constant 0 : index
    %1 = vector.load %arg3[%c0_1, %c0_2, %c0_3] : memref<1x7x84xf32, #tpu.memory_space<vmem>>, vector<1x7x84xf32>
    %2 = vector.shape_cast %1 : vector<1x7x84xf32> to vector<7x84xf32>
    %cst = arith.constant dense<0.000000e+00> : vector<8x7xf32>
    %3 = tpu.matmul %0, %2, %cst {dimension_numbers = #tpu.dot_dimension_numbers<[1], [1], [0], [0], [0, 0, 1, 0], [], []>} : vector<8x84xf32>, vector<7x84xf32>, vector<8x7xf32> -> vector<8x7xf32>
    %c0_4 = arith.constant 0 : index
    %c0_5 = arith.constant 0 : index
    %4 = vector.load %arg4[%c0_4, %c0_5] : memref<8x7xf32, #tpu.memory_space<vmem>>, vector<8x7xf32>
    tpu.vector_store %arg4[%c0_4, %c0_5], %3 {strides = array<i32>} : memref<8x7xf32, #tpu.memory_space<vmem>>, vector<8x7xf32>,
    return
  }
  func.func @transform_0(%arg0: i32, %arg1: memref<13xi32, #tpu.memory_space<smem>>) -> (i32, i32) {
    %c0_i32 = arith.constant 0 : i32
    %c0_i32_0 = arith.constant 0 : i32
    return %arg0, %c0_i32 : i32, i32
  }
  func.func @transform_1(%arg0: i32, %arg1: memref<13xi32, #tpu.memory_space<smem>>) -> (i32, i32, i32) {
    %0 = arith.index_cast %arg0 : i32 to index
    %1 = memref.load %arg1[%0] : memref<13xi32, #tpu.memory_space<smem>>
    %c0_i32 = arith.constant 0 : i32
    %c0_i32_0 = arith.constant 0 : i32
    %c0_i32_1 = arith.constant 0 : i32
    return %1, %c0_i32, %c0_i32_0 : i32, i32, i32
  }
  func.func @transform_2(%arg0: i32, %arg1: memref<13xi32, #tpu.memory_space<smem>>) -> (i32, i32) {
    %c0_i32 = arith.constant 0 : i32
    %c0_i32_0 = arith.constant 0 : i32
    return %arg0, %c0_i32 : i32, i32
  }
}

module attributes {stable_mosaic.version = 11 : i64} {
  func.func @_hidden_bwd_kernel(%arg0: i32, %arg1: memref<3xi32, #tpu.memory_space<smem>>, %arg2: memref<8x128xf32, #tpu.memory_space<vmem>>, %arg3: memref<8x128xf32, #tpu.memory_space<vmem>>, %arg4: memref<1x128x128xf32, #tpu.memory_space<vmem>>, %arg5: memref<1x1x128xf32, #tpu.memory_space<vmem>>, %arg6: memref<1x1x128xf32, #tpu.memory_space<vmem>>, %arg7: memref<1x1x128xf32, #tpu.memory_space<vmem>>, %arg8: memref<1x1x128xf32, #tpu.memory_space<vmem>>, %arg9: memref<8x128xf32, #tpu.memory_space<vmem>>) attributes {dimension_semantics = [#tpu.dimension_semantics<parallel>], iteration_bounds = array<i64: 3>, scalar_prefetch = 1 : i64, scratch_operands = 0 : i64, tpu.core_type = #tpu.core_type<tc>, window_params = [{transform_indices = @transform_0, window_bounds = array<i64: 8, 128>}, {transform_indices = @transform_1, window_bounds = array<i64: 8, 128>}, {transform_indices = @transform_2, window_bounds = array<i64: 1, 128, 128>}, {transform_indices = @transform_3, window_bounds = array<i64: 1, 1, 128>}, {transform_indices = @transform_4, window_bounds = array<i64: 1, 1, 128>}, {transform_indices = @transform_5, window_bounds = array<i64: 1, 1, 128>}, {transform_indices = @transform_6, window_bounds = array<i64: 1, 1, 128>}, {transform_indices = @transform_7, window_bounds = array<i64: 8, 128>}]} {
    %c0 = arith.constant 0 : index
    %c0_0 = arith.constant 0 : index
    %0 = vector.load %arg2[%c0, %c0_0] : memref<8x128xf32, #tpu.memory_space<vmem>>, vector<8x128xf32>
    %cst = arith.constant dense<0.000000e+00> : vector<8xf32>
    %1 = vector.multi_reduction <add>, %0, %cst [1] : vector<8x128xf32> to vector<8xf32>
    %2 = vector.shape_cast %1 : vector<8xf32> to vector<8x1xf32>
    %cst_1 = arith.constant 1.280000e+02 : f32
    %3 = vector.broadcast %cst_1 : f32 to vector<8x1xf32>
    %4 = arith.divf %2, %3 : vector<8x1xf32>
    %5 = vector.broadcast %4 : vector<8x1xf32> to vector<8x128xf32>
    %6 = arith.subf %0, %5 : vector<8x128xf32>
    %7 = arith.mulf %6, %6 : vector<8x128xf32>
    %cst_2 = arith.constant dense<0.000000e+00> : vector<8xf32>
    %8 = vector.multi_reduction <add>, %7, %cst_2 [1] : vector<8x128xf32> to vector<8xf32>
    %9 = vector.shape_cast %8 : vector<8xf32> to vector<8x1xf32>
    %cst_3 = arith.constant 1.280000e+02 : f32
    %10 = vector.broadcast %cst_3 : f32 to vector<8x1xf32>
    %11 = arith.divf %9, %10 : vector<8x1xf32>
    %cst_4 = arith.constant 9.99999974E-6 : f32
    %12 = vector.broadcast %cst_4 : f32 to vector<8x1xf32>
    %13 = arith.addf %11, %12 : vector<8x1xf32>
    %14 = math.rsqrt %13 : vector<8x1xf32>
    %15 = vector.broadcast %4 : vector<8x1xf32> to vector<8x128xf32>
    %16 = arith.subf %0, %15 : vector<8x128xf32>
    %17 = vector.broadcast %14 : vector<8x1xf32> to vector<8x128xf32>
    %18 = arith.mulf %16, %17 : vector<8x128xf32>
    %c0_5 = arith.constant 0 : index
    %c0_6 = arith.constant 0 : index
    %c0_7 = arith.constant 0 : index
    %19 = vector.load %arg5[%c0_5, %c0_6, %c0_7] : memref<1x1x128xf32, #tpu.memory_space<vmem>>, vector<1x1x128xf32>
    %20 = vector.shape_cast %19 : vector<1x1x128xf32> to vector<1x128xf32>
    %21 = vector.broadcast %20 : vector<1x128xf32> to vector<8x128xf32>
    %22 = arith.mulf %18, %21 : vector<8x128xf32>
    %c0_8 = arith.constant 0 : index
    %c0_9 = arith.constant 0 : index
    %c0_10 = arith.constant 0 : index
    %23 = vector.load %arg6[%c0_8, %c0_9, %c0_10] : memref<1x1x128xf32, #tpu.memory_space<vmem>>, vector<1x1x128xf32>
    %24 = vector.shape_cast %23 : vector<1x1x128xf32> to vector<1x128xf32>
    %25 = vector.broadcast %24 : vector<1x128xf32> to vector<8x128xf32>
    %26 = arith.addf %22, %25 : vector<8x128xf32>
    %c0_11 = arith.constant 0 : index
    %c0_12 = arith.constant 0 : index
    %c0_13 = arith.constant 0 : index
    %27 = vector.load %arg8[%c0_11, %c0_12, %c0_13] : memref<1x1x128xf32, #tpu.memory_space<vmem>>, vector<1x1x128xf32>
    %28 = vector.shape_cast %27 : vector<1x1x128xf32> to vector<1x128xf32>
    %29 = vector.broadcast %28 : vector<1x128xf32> to vector<8x128xf32>
    %30 = arith.mulf %26, %29 : vector<8x128xf32>
    %cst_14 = arith.constant 0.000000e+00 : f32
    %31 = vector.broadcast %cst_14 : f32 to vector<8x128xf32>
    %32 = arith.subf %31, %30 : vector<8x128xf32>
    %33 = math.exp %32 : vector<8x128xf32>
    %cst_15 = arith.constant 1.000000e+00 : f32
    %34 = vector.broadcast %cst_15 : f32 to vector<8x128xf32>
    %35 = arith.addf %34, %33 : vector<8x128xf32>
    %36 = tpu.reciprocal %35 {approx = true} : vector<8x128xf32> -> vector<8x128xf32>
    %c0_16 = arith.constant 0 : index
    %c0_17 = arith.constant 0 : index
    %37 = vector.load %arg3[%c0_16, %c0_17] : memref<8x128xf32, #tpu.memory_space<vmem>>, vector<8x128xf32>
    %c0_18 = arith.constant 0 : index
    %c0_19 = arith.constant 0 : index
    %c0_20 = arith.constant 0 : index
    %38 = vector.load %arg7[%c0_18, %c0_19, %c0_20] : memref<1x1x128xf32, #tpu.memory_space<vmem>>, vector<1x1x128xf32>
    %39 = vector.shape_cast %38 : vector<1x1x128xf32> to vector<1x128xf32>
    %40 = vector.broadcast %39 : vector<1x128xf32> to vector<8x128xf32>
    %41 = arith.mulf %37, %40 : vector<8x128xf32>
    %42 = arith.mulf %41, %36 : vector<8x128xf32>
    %cst_21 = arith.constant 1.000000e+00 : f32
    %43 = vector.broadcast %cst_21 : f32 to vector<8x128xf32>
    %44 = arith.subf %43, %36 : vector<8x128xf32>
    %45 = arith.mulf %30, %44 : vector<8x128xf32>
    %cst_22 = arith.constant 1.000000e+00 : f32
    %46 = vector.broadcast %cst_22 : f32 to vector<8x128xf32>
    %47 = arith.addf %46, %45 : vector<8x128xf32>
    %48 = arith.mulf %42, %47 : vector<8x128xf32>
    %c0_23 = arith.constant 0 : index
    %c0_24 = arith.constant 0 : index
    %c0_25 = arith.constant 0 : index
    %49 = vector.load %arg8[%c0_23, %c0_24, %c0_25] : memref<1x1x128xf32, #tpu.memory_space<vmem>>, vector<1x1x128xf32>
    %50 = vector.shape_cast %49 : vector<1x1x128xf32> to vector<1x128xf32>
    %51 = vector.broadcast %50 : vector<1x128xf32> to vector<8x128xf32>
    %52 = arith.mulf %48, %51 : vector<8x128xf32>
    %c0_26 = arith.constant 0 : index
    %c0_27 = arith.constant 0 : index
    %c0_28 = arith.constant 0 : index
    %53 = vector.load %arg5[%c0_26, %c0_27, %c0_28] : memref<1x1x128xf32, #tpu.memory_space<vmem>>, vector<1x1x128xf32>
    %54 = vector.shape_cast %53 : vector<1x1x128xf32> to vector<1x128xf32>
    %55 = vector.broadcast %54 : vector<1x128xf32> to vector<8x128xf32>
    %56 = arith.mulf %52, %55 : vector<8x128xf32>
    %cst_29 = arith.constant dense<0.000000e+00> : vector<8xf32>
    %57 = vector.multi_reduction <add>, %56, %cst_29 [1] : vector<8x128xf32> to vector<8xf32>
    %58 = vector.shape_cast %57 : vector<8xf32> to vector<8x1xf32>
    %cst_30 = arith.constant 1.280000e+02 : f32
    %59 = vector.broadcast %cst_30 : f32 to vector<8x1xf32>
    %60 = arith.divf %58, %59 : vector<8x1xf32>
    %61 = vector.broadcast %60 : vector<8x1xf32> to vector<8x128xf32>
    %62 = arith.subf %56, %61 : vector<8x128xf32>
    %63 = arith.mulf %56, %18 : vector<8x128xf32>
    %cst_31 = arith.constant dense<0.000000e+00> : vector<8xf32>
    %64 = vector.multi_reduction <add>, %63, %cst_31 [1] : vector<8x128xf32> to vector<8xf32>
    %65 = vector.shape_cast %64 : vector<8xf32> to vector<8x1xf32>
    %cst_32 = arith.constant 1.280000e+02 : f32
    %66 = vector.broadcast %cst_32 : f32 to vector<8x1xf32>
    %67 = arith.divf %65, %66 : vector<8x1xf32>
    %68 = vector.broadcast %67 : vector<8x1xf32> to vector<8x128xf32>
    %69 = arith.mulf %18, %68 : vector<8x128xf32>
    %70 = arith.subf %62, %69 : vector<8x128xf32>
    %71 = vector.broadcast %14 : vector<8x1xf32> to vector<8x128xf32>
    %72 = arith.mulf %71, %70 : vector<8x128xf32>
    %73 = arith.truncf %72 : vector<8x128xf32> to vector<8x128xbf16>
    %c0_33 = arith.constant 0 : index
    %c0_34 = arith.constant 0 : index
    %c0_35 = arith.constant 0 : index
    %74 = vector.load %arg4[%c0_33, %c0_34, %c0_35] : memref<1x128x128xf32, #tpu.memory_space<vmem>>, vector<1x128x128xf32>
    %75 = vector.shape_cast %74 : vector<1x128x128xf32> to vector<128x128xf32>
    %76 = arith.truncf %75 : vector<128x128xf32> to vector<128x128xbf16>
    %cst_36 = arith.constant dense<0.000000e+00> : vector<8x128xf32>
    %77 = tpu.matmul %73, %76, %cst_36 {dimension_numbers = #tpu.dot_dimension_numbers<[1], [1], [0], [0], [0, 0, 1, 0], [], []>} : vector<8x128xbf16>, vector<128x128xbf16>, vector<8x128xf32> -> vector<8x128xf32>
    %c0_37 = arith.constant 0 : index
    %c0_38 = arith.constant 0 : index
    %78 = vector.load %arg9[%c0_37, %c0_38] : memref<8x128xf32, #tpu.memory_space<vmem>>, vector<8x128xf32>
    tpu.vector_store %arg9[%c0_37, %c0_38], %77 {strides = array<i32>} : memref<8x128xf32, #tpu.memory_space<vmem>>, vector<8x128xf32>,
    return
  }
  func.func @transform_0(%arg0: i32, %arg1: memref<3xi32, #tpu.memory_space<smem>>) -> (i32, i32) {
    %c0_i32 = arith.constant 0 : i32
    %c0_i32_0 = arith.constant 0 : i32
    return %arg0, %c0_i32 : i32, i32
  }
  func.func @transform_1(%arg0: i32, %arg1: memref<3xi32, #tpu.memory_space<smem>>) -> (i32, i32) {
    %c0_i32 = arith.constant 0 : i32
    %c0_i32_0 = arith.constant 0 : i32
    return %arg0, %c0_i32 : i32, i32
  }
  func.func @transform_2(%arg0: i32, %arg1: memref<3xi32, #tpu.memory_space<smem>>) -> (i32, i32, i32) {
    %0 = arith.index_cast %arg0 : i32 to index
    %1 = memref.load %arg1[%0] : memref<3xi32, #tpu.memory_space<smem>>
    %c0_i32 = arith.constant 0 : i32
    %c0_i32_0 = arith.constant 0 : i32
    %c0_i32_1 = arith.constant 0 : i32
    return %1, %c0_i32, %c0_i32_0 : i32, i32, i32
  }
  func.func @transform_3(%arg0: i32, %arg1: memref<3xi32, #tpu.memory_space<smem>>) -> (i32, i32, i32) {
    %0 = arith.index_cast %arg0 : i32 to index
    %1 = memref.load %arg1[%0] : memref<3xi32, #tpu.memory_space<smem>>
    %c0_i32 = arith.constant 0 : i32
    %c0_i32_0 = arith.constant 0 : i32
    %c0_i32_1 = arith.constant 0 : i32
    return %1, %c0_i32, %c0_i32_0 : i32, i32, i32
  }
  func.func @transform_4(%arg0: i32, %arg1: memref<3xi32, #tpu.memory_space<smem>>) -> (i32, i32, i32) {
    %0 = arith.index_cast %arg0 : i32 to index
    %1 = memref.load %arg1[%0] : memref<3xi32, #tpu.memory_space<smem>>
    %c0_i32 = arith.constant 0 : i32
    %c0_i32_0 = arith.constant 0 : i32
    %c0_i32_1 = arith.constant 0 : i32
    return %1, %c0_i32, %c0_i32_0 : i32, i32, i32
  }
  func.func @transform_5(%arg0: i32, %arg1: memref<3xi32, #tpu.memory_space<smem>>) -> (i32, i32, i32) {
    %0 = arith.index_cast %arg0 : i32 to index
    %1 = memref.load %arg1[%0] : memref<3xi32, #tpu.memory_space<smem>>
    %c0_i32 = arith.constant 0 : i32
    %c0_i32_0 = arith.constant 0 : i32
    %c0_i32_1 = arith.constant 0 : i32
    return %1, %c0_i32, %c0_i32_0 : i32, i32, i32
  }
  func.func @transform_6(%arg0: i32, %arg1: memref<3xi32, #tpu.memory_space<smem>>) -> (i32, i32, i32) {
    %0 = arith.index_cast %arg0 : i32 to index
    %1 = memref.load %arg1[%0] : memref<3xi32, #tpu.memory_space<smem>>
    %c0_i32 = arith.constant 0 : i32
    %c0_i32_0 = arith.constant 0 : i32
    %c0_i32_1 = arith.constant 0 : i32
    return %1, %c0_i32, %c0_i32_0 : i32, i32, i32
  }
  func.func @transform_7(%arg0: i32, %arg1: memref<3xi32, #tpu.memory_space<smem>>) -> (i32, i32) {
    %c0_i32 = arith.constant 0 : i32
    %c0_i32_0 = arith.constant 0 : i32
    return %arg0, %c0_i32 : i32, i32
  }
}

module attributes {stable_mosaic.version = 11 : i64} {
  func.func @_hidden_bwd_kernel(%arg0: i32, %arg1: memref<3xi32, #tpu.memory_space<smem>>, %arg2: memref<8x128xf32, #tpu.memory_space<vmem>>, %arg3: memref<8x128xf32, #tpu.memory_space<vmem>>, %arg4: memref<1x84x128xf32, #tpu.memory_space<vmem>>, %arg5: memref<1x1x128xf32, #tpu.memory_space<vmem>>, %arg6: memref<1x1x128xf32, #tpu.memory_space<vmem>>, %arg7: memref<1x1x128xf32, #tpu.memory_space<vmem>>, %arg8: memref<1x1x128xf32, #tpu.memory_space<vmem>>, %arg9: memref<8x84xf32, #tpu.memory_space<vmem>>) attributes {dimension_semantics = [#tpu.dimension_semantics<parallel>], iteration_bounds = array<i64: 3>, scalar_prefetch = 1 : i64, scratch_operands = 0 : i64, tpu.core_type = #tpu.core_type<tc>, window_params = [{transform_indices = @transform_0, window_bounds = array<i64: 8, 128>}, {transform_indices = @transform_1, window_bounds = array<i64: 8, 128>}, {transform_indices = @transform_2, window_bounds = array<i64: 1, 84, 128>}, {transform_indices = @transform_3, window_bounds = array<i64: 1, 1, 128>}, {transform_indices = @transform_4, window_bounds = array<i64: 1, 1, 128>}, {transform_indices = @transform_5, window_bounds = array<i64: 1, 1, 128>}, {transform_indices = @transform_6, window_bounds = array<i64: 1, 1, 128>}, {transform_indices = @transform_7, window_bounds = array<i64: 8, 84>}]} {
    %c0 = arith.constant 0 : index
    %c0_0 = arith.constant 0 : index
    %0 = vector.load %arg2[%c0, %c0_0] : memref<8x128xf32, #tpu.memory_space<vmem>>, vector<8x128xf32>
    %cst = arith.constant dense<0.000000e+00> : vector<8xf32>
    %1 = vector.multi_reduction <add>, %0, %cst [1] : vector<8x128xf32> to vector<8xf32>
    %2 = vector.shape_cast %1 : vector<8xf32> to vector<8x1xf32>
    %cst_1 = arith.constant 1.280000e+02 : f32
    %3 = vector.broadcast %cst_1 : f32 to vector<8x1xf32>
    %4 = arith.divf %2, %3 : vector<8x1xf32>
    %5 = vector.broadcast %4 : vector<8x1xf32> to vector<8x128xf32>
    %6 = arith.subf %0, %5 : vector<8x128xf32>
    %7 = arith.mulf %6, %6 : vector<8x128xf32>
    %cst_2 = arith.constant dense<0.000000e+00> : vector<8xf32>
    %8 = vector.multi_reduction <add>, %7, %cst_2 [1] : vector<8x128xf32> to vector<8xf32>
    %9 = vector.shape_cast %8 : vector<8xf32> to vector<8x1xf32>
    %cst_3 = arith.constant 1.280000e+02 : f32
    %10 = vector.broadcast %cst_3 : f32 to vector<8x1xf32>
    %11 = arith.divf %9, %10 : vector<8x1xf32>
    %cst_4 = arith.constant 9.99999974E-6 : f32
    %12 = vector.broadcast %cst_4 : f32 to vector<8x1xf32>
    %13 = arith.addf %11, %12 : vector<8x1xf32>
    %14 = math.rsqrt %13 : vector<8x1xf32>
    %15 = vector.broadcast %4 : vector<8x1xf32> to vector<8x128xf32>
    %16 = arith.subf %0, %15 : vector<8x128xf32>
    %17 = vector.broadcast %14 : vector<8x1xf32> to vector<8x128xf32>
    %18 = arith.mulf %16, %17 : vector<8x128xf32>
    %c0_5 = arith.constant 0 : index
    %c0_6 = arith.constant 0 : index
    %c0_7 = arith.constant 0 : index
    %19 = vector.load %arg5[%c0_5, %c0_6, %c0_7] : memref<1x1x128xf32, #tpu.memory_space<vmem>>, vector<1x1x128xf32>
    %20 = vector.shape_cast %19 : vector<1x1x128xf32> to vector<1x128xf32>
    %21 = vector.broadcast %20 : vector<1x128xf32> to vector<8x128xf32>
    %22 = arith.mulf %18, %21 : vector<8x128xf32>
    %c0_8 = arith.constant 0 : index
    %c0_9 = arith.constant 0 : index
    %c0_10 = arith.constant 0 : index
    %23 = vector.load %arg6[%c0_8, %c0_9, %c0_10] : memref<1x1x128xf32, #tpu.memory_space<vmem>>, vector<1x1x128xf32>
    %24 = vector.shape_cast %23 : vector<1x1x128xf32> to vector<1x128xf32>
    %25 = vector.broadcast %24 : vector<1x128xf32> to vector<8x128xf32>
    %26 = arith.addf %22, %25 : vector<8x128xf32>
    %c0_11 = arith.constant 0 : index
    %c0_12 = arith.constant 0 : index
    %c0_13 = arith.constant 0 : index
    %27 = vector.load %arg8[%c0_11, %c0_12, %c0_13] : memref<1x1x128xf32, #tpu.memory_space<vmem>>, vector<1x1x128xf32>
    %28 = vector.shape_cast %27 : vector<1x1x128xf32> to vector<1x128xf32>
    %29 = vector.broadcast %28 : vector<1x128xf32> to vector<8x128xf32>
    %30 = arith.mulf %26, %29 : vector<8x128xf32>
    %cst_14 = arith.constant 0.000000e+00 : f32
    %31 = vector.broadcast %cst_14 : f32 to vector<8x128xf32>
    %32 = arith.subf %31, %30 : vector<8x128xf32>
    %33 = math.exp %32 : vector<8x128xf32>
    %cst_15 = arith.constant 1.000000e+00 : f32
    %34 = vector.broadcast %cst_15 : f32 to vector<8x128xf32>
    %35 = arith.addf %34, %33 : vector<8x128xf32>
    %36 = tpu.reciprocal %35 {approx = true} : vector<8x128xf32> -> vector<8x128xf32>
    %c0_16 = arith.constant 0 : index
    %c0_17 = arith.constant 0 : index
    %37 = vector.load %arg3[%c0_16, %c0_17] : memref<8x128xf32, #tpu.memory_space<vmem>>, vector<8x128xf32>
    %c0_18 = arith.constant 0 : index
    %c0_19 = arith.constant 0 : index
    %c0_20 = arith.constant 0 : index
    %38 = vector.load %arg7[%c0_18, %c0_19, %c0_20] : memref<1x1x128xf32, #tpu.memory_space<vmem>>, vector<1x1x128xf32>
    %39 = vector.shape_cast %38 : vector<1x1x128xf32> to vector<1x128xf32>
    %40 = vector.broadcast %39 : vector<1x128xf32> to vector<8x128xf32>
    %41 = arith.mulf %37, %40 : vector<8x128xf32>
    %42 = arith.mulf %41, %36 : vector<8x128xf32>
    %cst_21 = arith.constant 1.000000e+00 : f32
    %43 = vector.broadcast %cst_21 : f32 to vector<8x128xf32>
    %44 = arith.subf %43, %36 : vector<8x128xf32>
    %45 = arith.mulf %30, %44 : vector<8x128xf32>
    %cst_22 = arith.constant 1.000000e+00 : f32
    %46 = vector.broadcast %cst_22 : f32 to vector<8x128xf32>
    %47 = arith.addf %46, %45 : vector<8x128xf32>
    %48 = arith.mulf %42, %47 : vector<8x128xf32>
    %c0_23 = arith.constant 0 : index
    %c0_24 = arith.constant 0 : index
    %c0_25 = arith.constant 0 : index
    %49 = vector.load %arg8[%c0_23, %c0_24, %c0_25] : memref<1x1x128xf32, #tpu.memory_space<vmem>>, vector<1x1x128xf32>
    %50 = vector.shape_cast %49 : vector<1x1x128xf32> to vector<1x128xf32>
    %51 = vector.broadcast %50 : vector<1x128xf32> to vector<8x128xf32>
    %52 = arith.mulf %48, %51 : vector<8x128xf32>
    %c0_26 = arith.constant 0 : index
    %c0_27 = arith.constant 0 : index
    %c0_28 = arith.constant 0 : index
    %53 = vector.load %arg5[%c0_26, %c0_27, %c0_28] : memref<1x1x128xf32, #tpu.memory_space<vmem>>, vector<1x1x128xf32>
    %54 = vector.shape_cast %53 : vector<1x1x128xf32> to vector<1x128xf32>
    %55 = vector.broadcast %54 : vector<1x128xf32> to vector<8x128xf32>
    %56 = arith.mulf %52, %55 : vector<8x128xf32>
    %cst_29 = arith.constant dense<0.000000e+00> : vector<8xf32>
    %57 = vector.multi_reduction <add>, %56, %cst_29 [1] : vector<8x128xf32> to vector<8xf32>
    %58 = vector.shape_cast %57 : vector<8xf32> to vector<8x1xf32>
    %cst_30 = arith.constant 1.280000e+02 : f32
    %59 = vector.broadcast %cst_30 : f32 to vector<8x1xf32>
    %60 = arith.divf %58, %59 : vector<8x1xf32>
    %61 = vector.broadcast %60 : vector<8x1xf32> to vector<8x128xf32>
    %62 = arith.subf %56, %61 : vector<8x128xf32>
    %63 = arith.mulf %56, %18 : vector<8x128xf32>
    %cst_31 = arith.constant dense<0.000000e+00> : vector<8xf32>
    %64 = vector.multi_reduction <add>, %63, %cst_31 [1] : vector<8x128xf32> to vector<8xf32>
    %65 = vector.shape_cast %64 : vector<8xf32> to vector<8x1xf32>
    %cst_32 = arith.constant 1.280000e+02 : f32
    %66 = vector.broadcast %cst_32 : f32 to vector<8x1xf32>
    %67 = arith.divf %65, %66 : vector<8x1xf32>
    %68 = vector.broadcast %67 : vector<8x1xf32> to vector<8x128xf32>
    %69 = arith.mulf %18, %68 : vector<8x128xf32>
    %70 = arith.subf %62, %69 : vector<8x128xf32>
    %71 = vector.broadcast %14 : vector<8x1xf32> to vector<8x128xf32>
    %72 = arith.mulf %71, %70 : vector<8x128xf32>
    %73 = arith.truncf %72 : vector<8x128xf32> to vector<8x128xbf16>
    %c0_33 = arith.constant 0 : index
    %c0_34 = arith.constant 0 : index
    %c0_35 = arith.constant 0 : index
    %74 = vector.load %arg4[%c0_33, %c0_34, %c0_35] : memref<1x84x128xf32, #tpu.memory_space<vmem>>, vector<1x84x128xf32>
    %75 = vector.shape_cast %74 : vector<1x84x128xf32> to vector<84x128xf32>
    %76 = arith.truncf %75 : vector<84x128xf32> to vector<84x128xbf16>
    %cst_36 = arith.constant dense<0.000000e+00> : vector<8x84xf32>
    %77 = tpu.matmul %73, %76, %cst_36 {dimension_numbers = #tpu.dot_dimension_numbers<[1], [1], [0], [0], [0, 0, 1, 0], [], []>} : vector<8x128xbf16>, vector<84x128xbf16>, vector<8x84xf32> -> vector<8x84xf32>
    %c0_37 = arith.constant 0 : index
    %c0_38 = arith.constant 0 : index
    %78 = vector.load %arg9[%c0_37, %c0_38] : memref<8x84xf32, #tpu.memory_space<vmem>>, vector<8x84xf32>
    tpu.vector_store %arg9[%c0_37, %c0_38], %77 {strides = array<i32>} : memref<8x84xf32, #tpu.memory_space<vmem>>, vector<8x84xf32>,
    return
  }
  func.func @transform_0(%arg0: i32, %arg1: memref<3xi32, #tpu.memory_space<smem>>) -> (i32, i32) {
    %c0_i32 = arith.constant 0 : i32
    %c0_i32_0 = arith.constant 0 : i32
    return %arg0, %c0_i32 : i32, i32
  }
  func.func @transform_1(%arg0: i32, %arg1: memref<3xi32, #tpu.memory_space<smem>>) -> (i32, i32) {
    %c0_i32 = arith.constant 0 : i32
    %c0_i32_0 = arith.constant 0 : i32
    return %arg0, %c0_i32 : i32, i32
  }
  func.func @transform_2(%arg0: i32, %arg1: memref<3xi32, #tpu.memory_space<smem>>) -> (i32, i32, i32) {
    %0 = arith.index_cast %arg0 : i32 to index
    %1 = memref.load %arg1[%0] : memref<3xi32, #tpu.memory_space<smem>>
    %c0_i32 = arith.constant 0 : i32
    %c0_i32_0 = arith.constant 0 : i32
    %c0_i32_1 = arith.constant 0 : i32
    return %1, %c0_i32, %c0_i32_0 : i32, i32, i32
  }
  func.func @transform_3(%arg0: i32, %arg1: memref<3xi32, #tpu.memory_space<smem>>) -> (i32, i32, i32) {
    %0 = arith.index_cast %arg0 : i32 to index
    %1 = memref.load %arg1[%0] : memref<3xi32, #tpu.memory_space<smem>>
    %c0_i32 = arith.constant 0 : i32
    %c0_i32_0 = arith.constant 0 : i32
    %c0_i32_1 = arith.constant 0 : i32
    return %1, %c0_i32, %c0_i32_0 : i32, i32, i32
  }
  func.func @transform_4(%arg0: i32, %arg1: memref<3xi32, #tpu.memory_space<smem>>) -> (i32, i32, i32) {
    %0 = arith.index_cast %arg0 : i32 to index
    %1 = memref.load %arg1[%0] : memref<3xi32, #tpu.memory_space<smem>>
    %c0_i32 = arith.constant 0 : i32
    %c0_i32_0 = arith.constant 0 : i32
    %c0_i32_1 = arith.constant 0 : i32
    return %1, %c0_i32, %c0_i32_0 : i32, i32, i32
  }
  func.func @transform_5(%arg0: i32, %arg1: memref<3xi32, #tpu.memory_space<smem>>) -> (i32, i32, i32) {
    %0 = arith.index_cast %arg0 : i32 to index
    %1 = memref.load %arg1[%0] : memref<3xi32, #tpu.memory_space<smem>>
    %c0_i32 = arith.constant 0 : i32
    %c0_i32_0 = arith.constant 0 : i32
    %c0_i32_1 = arith.constant 0 : i32
    return %1, %c0_i32, %c0_i32_0 : i32, i32, i32
  }
  func.func @transform_6(%arg0: i32, %arg1: memref<3xi32, #tpu.memory_space<smem>>) -> (i32, i32, i32) {
    %0 = arith.index_cast %arg0 : i32 to index
    %1 = memref.load %arg1[%0] : memref<3xi32, #tpu.memory_space<smem>>
    %c0_i32 = arith.constant 0 : i32
    %c0_i32_0 = arith.constant 0 : i32
    %c0_i32_1 = arith.constant 0 : i32
    return %1, %c0_i32, %c0_i32_0 : i32, i32, i32
  }
  func.func @transform_7(%arg0: i32, %arg1: memref<3xi32, #tpu.memory_space<smem>>) -> (i32, i32) {
    %c0_i32 = arith.constant 0 : i32
    %c0_i32_0 = arith.constant 0 : i32
    return %arg0, %c0_i32 : i32, i32
  }
}

module attributes {stable_mosaic.version = 11 : i64} {
  func.func @_gmm_nt_kernel(%arg0: i32, %arg1: memref<13xi32, #tpu.memory_space<smem>>, %arg2: memref<8x84xf32, #tpu.memory_space<vmem>>, %arg3: memref<1x7x84xf32, #tpu.memory_space<vmem>>, %arg4: memref<8x7xf32, #tpu.memory_space<vmem>>) attributes {dimension_semantics = [#tpu.dimension_semantics<parallel>], iteration_bounds = array<i64: 13>, scalar_prefetch = 1 : i64, scratch_operands = 0 : i64, tpu.core_type = #tpu.core_type<tc>, window_params = [{transform_indices = @transform_0, window_bounds = array<i64: 8, 84>}, {transform_indices = @transform_1, window_bounds = array<i64: 1, 7, 84>}, {transform_indices = @transform_2, window_bounds = array<i64: 8, 7>}]} {
    %c0 = arith.constant 0 : index
    %c0_0 = arith.constant 0 : index
    %0 = vector.load %arg2[%c0, %c0_0] : memref<8x84xf32, #tpu.memory_space<vmem>>, vector<8x84xf32>
    %c0_1 = arith.constant 0 : index
    %c0_2 = arith.constant 0 : index
    %c0_3 = arith.constant 0 : index
    %1 = vector.load %arg3[%c0_1, %c0_2, %c0_3] : memref<1x7x84xf32, #tpu.memory_space<vmem>>, vector<1x7x84xf32>
    %2 = vector.shape_cast %1 : vector<1x7x84xf32> to vector<7x84xf32>
    %cst = arith.constant dense<0.000000e+00> : vector<8x7xf32>
    %3 = tpu.matmul %0, %2, %cst {dimension_numbers = #tpu.dot_dimension_numbers<[1], [1], [0], [0], [0, 0, 1, 0], [], []>} : vector<8x84xf32>, vector<7x84xf32>, vector<8x7xf32> -> vector<8x7xf32>
    %c0_4 = arith.constant 0 : index
    %c0_5 = arith.constant 0 : index
    %4 = vector.load %arg4[%c0_4, %c0_5] : memref<8x7xf32, #tpu.memory_space<vmem>>, vector<8x7xf32>
    tpu.vector_store %arg4[%c0_4, %c0_5], %3 {strides = array<i32>} : memref<8x7xf32, #tpu.memory_space<vmem>>, vector<8x7xf32>,
    return
  }
  func.func @transform_0(%arg0: i32, %arg1: memref<13xi32, #tpu.memory_space<smem>>) -> (i32, i32) {
    %c0_i32 = arith.constant 0 : i32
    %c0_i32_0 = arith.constant 0 : i32
    return %arg0, %c0_i32 : i32, i32
  }
  func.func @transform_1(%arg0: i32, %arg1: memref<13xi32, #tpu.memory_space<smem>>) -> (i32, i32, i32) {
    %0 = arith.index_cast %arg0 : i32 to index
    %1 = memref.load %arg1[%0] : memref<13xi32, #tpu.memory_space<smem>>
    %c0_i32 = arith.constant 0 : i32
    %c0_i32_0 = arith.constant 0 : i32
    %c0_i32_1 = arith.constant 0 : i32
    return %1, %c0_i32, %c0_i32_0 : i32, i32, i32
  }
  func.func @transform_2(%arg0: i32, %arg1: memref<13xi32, #tpu.memory_space<smem>>) -> (i32, i32) {
    %c0_i32 = arith.constant 0 : i32
    %c0_i32_0 = arith.constant 0 : i32
    return %arg0, %c0_i32 : i32, i32
  }
}

</mosaic_0001>

<llo_original>
// kernel: custom-call
$region0: #{custom-call}
  %s0 = inlined_call_operand.vmem [shape: u32[3], index: 0, kind: output, shape index: {}]

// kernel: jvp__.8
$region0: #{jvp__.8}
  #allocation0 [shape = 'u32[]', space=smem, size = 0x4, offset = 0x4, fixed_abs, tag = 'smem constant byte address 0x4 - core index']
  #allocation1 [shape = 'u32[144,128]{1,0:T(1,128)}', space=vmem, size = 0x12000, scoped, tag = 'internal scratch']
  #allocation2 [shape = 's32[1]{0}', space=sflag, size = 0x4, scoped, tag = 'scoped memory for jvp__.8']
  #allocation3 [shape = 'u8[512]{0}', space=smem, size = 0x200, scoped, tag = 'prefetched SMEM operand 0']
  %s0 = inlined_call_operand.vmem [shape: s32[13], index: 0, kind: input, shape index: {}]
  %s1 = inlined_call_operand.vmem [shape: f32[104,7], index: 1, kind: input, shape index: {}]
  %s2 = inlined_call_operand.vmem [shape: f32[3,7,84], index: 2, kind: input, shape index: {}]
  %s3 = inlined_call_operand.vmem [shape: f32[104,84], index: 3, kind: output, shape index: {}]
  %s4 = sld [smem:[#allocation0]]
  $region41: #{jvp__.8} parent=0
    _
  %s6 = ssub.s32 1, %s4
  %s7 = scalar_select 0, %s6, %s4
  %s8 = sshll.u32 %s0, 4
  %s9 = int_to_ptr.vmem [resolvable:$true] %s8
  %11 = dma.vmem_to_smem %s9, 16, [#allocation3], [#allocation2]
  %12 = dma.done [#allocation2], 16
  %13 = sfence
  loop: start=0, step=1, limit=15
  $region2: #{jvp__.8} parent=0 // loop_pre_header
    _
  $region3: #{jvp__.8} parent=0 // loop_header
    %s15 = sphi 0, %s19
    %p16 = scmp.ge.s32.totalorder %s15, 15
    %s25 = sphi 0, %s27
    %s28 = sphi 0, %s25
    %s29 = sphi 0, %s28
    %s45 = sphi 0, %s29
    %s53 = sphi 0, %s55
    %s56 = sphi 0, %s53
    %s57 = sphi 0, %s56
    %s73 = sphi 0, %s57
    %s79 = sphi 0, %s81
    %s82 = sphi 0, %s79
    %s83 = sphi 0, %s82
    %s99 = sphi 0, %s83
  $region4: #{jvp__.8} parent=0 // loop_header_branch
    %18 = sbr.rel (%p16) target = $region8
  $region5: #{jvp__.8} parent=0 // loop_body
    %s20 = ssub.s32 %s15, 1
    %s21 = ssub.s32 %s15, 2
    %s22 = sadd.s32 %s15, 1
    %s23 = ssub.s32 %s15, %s22
    %p24 = scmp.eq.s32.totalorder %s23, 0
    %s26 = sadd.s32 %s25, 1
    %s27 = scalar_select %p24, %s25, %s26
    %p30 = pneg %p24
    %p31 = scmp.eq.s32.totalorder %s15, 12
    %p32 = por %p30, %p31
    %p33 = scmp.ne.s32.totalorder %s25, %s28
    %p34 = scmp.eq.s32.totalorder %s15, 0
    %p35 = por %p33, %p34
    %p36 = scmp.ne.s32.totalorder %s25, %s28
    %p37 = scmp.eq.s32.totalorder %s20, 12
    %p38 = por %p36, %p37
    %p39 = scmp.ne.s32.totalorder %s28, %s29
    %p40 = scmp.eq.s32.totalorder %s20, 0
    %p41 = por %p39, %p40
    %p42 = scmp.ne.s32.totalorder %s28, %s29
    %p43 = scmp.eq.s32.totalorder %s21, 12
    %p44 = por %p42, %p43
    %p46 = scmp.ne.s32.totalorder %s29, %s45
    %p47 = scmp.eq.s32.totalorder %s21, 0
    %p48 = por %p46, %p47
    %s49 = sld [smem:[#allocation3 + %s15]]
    %s50 = sld [smem:[#allocation3 + %s22]]
    %s51 = ssub.s32 %s49, %s50
    %p52 = scmp.eq.s32.totalorder %s51, 0
    %s54 = sadd.s32 %s53, 1
    %s55 = scalar_select %p52, %s53, %s54
    %p58 = pneg %p52
    %p59 = scmp.eq.s32.totalorder %s15, 12
    %p60 = por %p58, %p59
    %p61 = scmp.ne.s32.totalorder %s53, %s56
    %p62 = scmp.eq.s32.totalorder %s15, 0
    %p63 = por %p61, %p62
    %p64 = scmp.ne.s32.totalorder %s53, %s56
    %p65 = scmp.eq.s32.totalorder %s20, 12
    %p66 = por %p64, %p65
    %p67 = scmp.ne.s32.totalorder %s56, %s57
    %p68 = scmp.eq.s32.totalorder %s20, 0
    %p69 = por %p67, %p68
    %p70 = scmp.ne.s32.totalorder %s56, %s57
    %p71 = scmp.eq.s32.totalorder %s21, 12
    %p72 = por %p70, %p71
    %p74 = scmp.ne.s32.totalorder %s57, %s73
    %p75 = scmp.eq.s32.totalorder %s21, 0
    %p76 = por %p74, %p75
    %s77 = ssub.s32 %s15, %s22
    %p78 = scmp.eq.s32.totalorder %s77, 0
    %s80 = sadd.s32 %s79, 1
    %s81 = scalar_select %p78, %s79, %s80
    %p84 = pneg %p78
    %p85 = scmp.eq.s32.totalorder %s15, 12
    %p86 = por %p84, %p85
    %p87 = scmp.ne.s32.totalorder %s79, %s82
    %p88 = scmp.eq.s32.totalorder %s15, 0
    %p89 = por %p87, %p88
    %p90 = scmp.ne.s32.totalorder %s79, %s82
    %p91 = scmp.eq.s32.totalorder %s20, 12
    %p92 = por %p90, %p91
    %p93 = scmp.ne.s32.totalorder %s82, %s83
    %p94 = scmp.eq.s32.totalorder %s20, 0
    %p95 = por %p93, %p94
    %p96 = scmp.ne.s32.totalorder %s82, %s83
    %p97 = scmp.eq.s32.totalorder %s21, 12
    %p98 = por %p96, %p97
    %p100 = scmp.ne.s32.totalorder %s83, %s99
    %p101 = scmp.eq.s32.totalorder %s21, 0
    %p102 = por %p100, %p101
    %p103 = scmp.le.s32.totalorder 1, %s15
    %p104 = scmp.lt.s32.totalorder %s15, 14
    %p105 = pnand %p103, %p104
    %p106 = pneg %p105
    // Predicated region
    $region9: #{jvp__.8} parent=5 // pred_check
      _
    $region10: #{jvp__.8} parent=5 // pred_check_branch
      %108 = sbr.rel (%p105) target = $region12
    $region11: #{jvp__.8} parent=5 // pred_region
      %s109 = ssub.s32 %s15, 1
    $region12: #{jvp__.8} parent=5 // pred_fallthru
      _
    %p110 = scmp.lt.s32.totalorder %s15, 13
    // Predicated region
    $region13: #{jvp__.8} parent=5 // pred_check
      %p111 = pneg %p110
    $region14: #{jvp__.8} parent=5 // pred_check_branch
      %113 = sbr.rel (%p111) target = $region16
    $region15: #{jvp__.8} parent=5 // pred_region
      // Predicated region
      $region17: #{jvp__.8} parent=15 // pred_check
        %p114 = pneg %p35
      $region18: #{jvp__.8} parent=15 // pred_check_branch
        %116 = sbr.rel (%p114) target = $region20
      $region19: #{jvp__.8} parent=15 // pred_region
        %p117 = scmp.lt.s32.totalorder %s15, 12
        %s118 = scalar_select %p117, %s15, 12
        %s119 = smul.addr %s118, 8
        %s120 = scalar_lea.vmem %s1, %s119
      $region20: #{jvp__.8} parent=15 // pred_fallthru
        _
      // Predicated region
      $region21: #{jvp__.8} parent=15 // pred_check
        %p121 = pneg %p63
      $region22: #{jvp__.8} parent=15 // pred_check_branch
        %123 = sbr.rel (%p121) target = $region24
      $region23: #{jvp__.8} parent=15 // pred_region
        %s124 = sld [smem:[#allocation3 + %s15]]
        %p125 = scmp.lt.s32.totalorder %s124, 2
        %s126 = scalar_select %p125, %s124, 2
        %s127 = smul.addr %s126, 8
        %s128 = scalar_lea.vmem %s2, %s127
        %s129 = sld [smem:[#allocation3 + %s15]]
      $region24: #{jvp__.8} parent=15 // pred_fallthru
        _
    $region16: #{jvp__.8} parent=5 // pred_fallthru
      _
    %p130 = scmp.le.s32.totalorder 1, %s15
    %p131 = scmp.lt.s32.totalorder %s15, 14
    %p132 = pnand %p130, %p131
    %p133 = pneg %p132
    // Predicated region
    $region25: #{jvp__.8} parent=5 // pred_check
      _
    $region26: #{jvp__.8} parent=5 // pred_check_branch
      %135 = sbr.rel (%p132) target = $region28
    $region27: #{jvp__.8} parent=5 // pred_region
      %s136 = ssub.s32 %s15, 1
      %p137 = scmp.lt.s32.totalorder %s20, 12
      %s138 = scalar_select %p137, %s20, 12
      %s139 = smul.addr %s138, 8
      %s140 = scalar_lea.vmem %s1, %s139
      %p141 = pneg %p41
      %p142 = pneg %p38
      %s143 = sld [smem:[#allocation3 + %s20]]
      %p144 = scmp.lt.s32.totalorder %s143, 2
      %s145 = scalar_select %p144, %s143, 2
      %s146 = smul.addr %s145, 8
      %s147 = scalar_lea.vmem %s2, %s146
      %p148 = pneg %p69
      %p149 = pneg %p66
      %p150 = pneg %p95
      %p151 = pneg %p92
      %p152 = scmp.lt.s32.totalorder %s20, 12
      %s153 = scalar_select %p152, %s20, 12
      %s154 = smul.addr %s153, 8
      %s155 = scalar_lea.vmem %s3, %s154
      %p156 = scmp.lt.s32.totalorder %s20, 12
      %s157 = scalar_select %p156, %s20, 12
      %s158 = smul.addr %s157, 8
      %s159 = scalar_lea.vmem %s1, %s158
      %s160 = sld [smem:[#allocation3 + %s20]]
      %p161 = scmp.lt.s32.totalorder %s160, 2
      %s162 = scalar_select %p161, %s160, 2
      %s163 = smul.addr %s162, 8
      %s164 = scalar_lea.vmem %s2, %s163
      %s165 = sld [smem:[#allocation3 + %s20]]
      %p166 = scmp.lt.s32.totalorder %s20, 12
      %s167 = scalar_select %p166, %s20, 12
      %s168 = smul.addr %s167, 8
      %s169 = scalar_lea.vmem %s3, %s168
      %v170 = vld [vmem:[%s159] sm:$0xff]
      %v171 = vld [vmem:[%s164] sm:$0x7f]
      %vm172 = vcmask 56320
      %v174 = vsel %vm172, %v170, 0
      %vm176 = vcmask 1046528
      %v178 = vsel %vm176, %v171, 0
      %180 = vmatprep.subr.mxu0 0.0
      %181 = vmatpush1.msra.mxu0 0.0
      %182 = vmatprep.subr.mxu0 0.0
      %183 = vmatpush1.msra.mxu0 0.0
      %184 = vmatprep.subr.mxu0 0.0
      %185 = vmatpush1.msra.mxu0 0.0
      %186 = vmatprep.subr.mxu0 0.0
      %187 = vmatpush1.msra.mxu0 0.0
      %188 = vmatprep.subr.mxu0 0.0
      %189 = vmatpush1.msra.mxu0 0.0
      %190 = vmatprep.subr.mxu0 0.0
      %191 = vmatpush1.msra.mxu0 0.0
      %192 = vmatprep.subr.mxu0 0.0
      %193 = vmatpush1.msra.mxu0 0.0
      %194 = vmatprep.subr.mxu0 0.0
      %195 = vmatpush1.msra.mxu0 0.0
      %196 = vmatprep.subr.mxu0 0.0
      %197 = vmatpush1.msra.mxu0 0.0
      %198 = vmatprep.subr.mxu0 0.0
      %199 = vmatpush1.msra.mxu0 0.0
      %200 = vmatprep.subr.mxu0 0.0
      %201 = vmatpush1.msra.mxu0 0.0
      %202 = vmatprep.subr.mxu0 0.0
      %203 = vmatpush1.msra.mxu0 0.0
      %204 = vmatprep.subr.mxu0 0.0
      %205 = vmatpush1.msra.mxu0 0.0
      %206 = vmatprep.subr.mxu0 0.0
      %207 = vmatpush1.msra.mxu0 0.0
      %208 = vmatprep.subr.mxu0 0.0
      %209 = vmatpush1.msra.mxu0 0.0
      %210 = vmatprep.subr.mxu0 0.0
      %211 = vmatpush1.msra.mxu0 %v178
      %212 = vmatprep.subr.mxu0 0.0
      %213 = vmatpush2.msra.mxu0 0.0
      %214 = vmatprep.subr.mxu0 0.0
      %215 = vmatpush2.msra.mxu0 0.0
      %216 = vmatprep.subr.mxu0 0.0
      %217 = vmatpush2.msra.mxu0 0.0
      %218 = vmatprep.subr.mxu0 0.0
      %219 = vmatpush2.msra.mxu0 0.0
      %220 = vmatprep.subr.mxu0 0.0
      %221 = vmatpush2.msra.mxu0 0.0
      %222 = vmatprep.subr.mxu0 0.0
      %223 = vmatpush2.msra.mxu0 0.0
      %224 = vmatprep.subr.mxu0 0.0
      %225 = vmatpush2.msra.mxu0 0.0
      %226 = vmatprep.subr.mxu0 0.0
      %227 = vmatpush2.msra.mxu0 0.0
      %228 = vmatprep.subr.mxu0 0.0
      %229 = vmatpush2.msra.mxu0 0.0
      %230 = vmatprep.subr.mxu0 0.0
      %231 = vmatpush2.msra.mxu0 0.0
      %232 = vmatprep.subr.mxu0 0.0
      %233 = vmatpush2.msra.mxu0 0.0
      %234 = vmatprep.subr.mxu0 0.0
      %235 = vmatpush2.msra.mxu0 0.0
      %236 = vmatprep.subr.mxu0 0.0
      %237 = vmatpush2.msra.mxu0 0.0
      %238 = vmatprep.subr.mxu0 0.0
      %239 = vmatpush2.msra.mxu0 0.0
      %240 = vmatprep.subr.mxu0 0.0
      %241 = vmatpush2.msra.mxu0 0.0
      %242 = vmatprep.subr.mxu0 0.0
      %243 = vmatpush2.msra.mxu0 0.0
      %244 = vmatprep.mubr.f32.mxu0 0.0
      %245 = vmatmul.mubr.f32.gmra.mxu0 %v174
      %v246 = vpop.f32.mrf.mxu0
      %v247 = vadd.f32 0.0, %v246
      %v248 = vpop.f32.mrf.mxu0
      %249 = vdwg.mxu0
      %vm250 = vcmask 687104
      %251 = vst.msk [vmem:[%s169] sm:$0xff] %vm250, %v247
      %p252 = scmp.lt.s32.totalorder %s20, 12
      %s253 = scalar_select %p252, %s20, 12
      %s254 = smul.addr %s253, 8
      %s255 = scalar_lea.vmem %s3, %s254
      // Predicated region
      $region29: #{jvp__.8} parent=27 // pred_check
        %p256 = pneg %p92
      $region30: #{jvp__.8} parent=27 // pred_check_branch
        %258 = sbr.rel (%p256) target = $region32
      $region31: #{jvp__.8} parent=27 // pred_region
        _
      $region32: #{jvp__.8} parent=27 // pred_fallthru
        _
    $region28: #{jvp__.8} parent=5 // pred_fallthru
      _
    %p259 = scmp.le.s32.totalorder 2, %s15
    // Predicated region
    $region33: #{jvp__.8} parent=5 // pred_check
      %p260 = pneg %p259
    $region34: #{jvp__.8} parent=5 // pred_check_branch
      %262 = sbr.rel (%p260) target = $region36
    $region35: #{jvp__.8} parent=5 // pred_region
      %s263 = ssub.s32 %s15, 2
      // Predicated region
      $region37: #{jvp__.8} parent=35 // pred_check
        %p264 = pneg %p98
      $region38: #{jvp__.8} parent=35 // pred_check_branch
        %266 = sbr.rel (%p264) target = $region40
      $region39: #{jvp__.8} parent=35 // pred_region
        %p267 = scmp.lt.s32.totalorder %s21, 12
        %s268 = scalar_select %p267, %s21, 12
        %s269 = smul.addr %s268, 8
        %s270 = scalar_lea.vmem %s3, %s269
      $region40: #{jvp__.8} parent=35 // pred_fallthru
        _
    $region36: #{jvp__.8} parent=5 // pred_fallthru
      _
  $region6: #{jvp__.8} parent=0 // loop_footer
    %s19 = sadd.s32 1, %s15
  $region7: #{jvp__.8} parent=0 // loop_footer_branch
    %14 = sbr.rel target = $region3
  $region8: #{jvp__.8} parent=0 // loop_exit
    _

// kernel: jvp__.9
$region0: #{jvp__.9}
  #allocation0 [shape = 'u32[]', space=smem, size = 0x4, offset = 0x4, fixed_abs, tag = 'smem constant byte address 0x4 - core index']
  #allocation1 [shape = 'u32[144,128]{1,0:T(1,128)}', space=vmem, size = 0x12000, scoped, tag = 'internal scratch']
  #allocation2 [shape = 's32[1]{0}', space=sflag, size = 0x4, scoped, tag = 'scoped memory for jvp__.9']
  #allocation3 [shape = 'u8[512]{0}', space=smem, size = 0x200, scoped, tag = 'prefetched SMEM operand 0']
  %s0 = inlined_call_operand.vmem [shape: s32[3], index: 0, kind: input, shape index: {}]
  %s1 = inlined_call_operand.vmem [shape: f32[24,84], index: 1, kind: input, shape index: {}]
  %s2 = inlined_call_operand.vmem [shape: f32[2,84,128], index: 2, kind: input, shape index: {}]
  %s3 = inlined_call_operand.vmem [shape: f32[2,1,128], index: 3, kind: input, shape index: {}]
  %s4 = inlined_call_operand.vmem [shape: f32[2,1,128], index: 4, kind: input, shape index: {}]
  %s5 = inlined_call_operand.vmem [shape: f32[2,1,128], index: 5, kind: input, shape index: {}]
  %s6 = inlined_call_operand.vmem [shape: f32[2,1,128], index: 6, kind: input, shape index: {}]
  %s7 = inlined_call_operand.vmem [shape: f32[2,1,128], index: 7, kind: input, shape index: {}]
  %s8 = inlined_call_operand.vmem [shape: f32[24,128], index: 8, kind: output, shape index: {0}]
  %s9 = inlined_call_operand.vmem [shape: f32[24,128], index: 9, kind: output, shape index: {1}]
  %10 = xla_tuple %s8, %s9
  %s11 = sld [smem:[#allocation0]]
  $region69: #{jvp__.9} parent=0
    _
  %s13 = ssub.s32 1, %s11
  %s14 = scalar_select 0, %s13, %s11
  %s15 = sshll.u32 %s0, 4
  %s16 = int_to_ptr.vmem [resolvable:$true] %s15
  %18 = dma.vmem_to_smem %s16, 16, [#allocation3], [#allocation2]
  %19 = dma.done [#allocation2], 16
  %20 = sfence
  loop: start=0, step=1, limit=5
  $region2: #{jvp__.9} parent=0 // loop_pre_header
    _
  $region3: #{jvp__.9} parent=0 // loop_header
    %s22 = sphi 0, %s26
    %p23 = scmp.ge.s32.totalorder %s22, 5
    %s32 = sphi 0, %s34
    %s35 = sphi 0, %s32
    %s36 = sphi 0, %s35
    %s52 = sphi 0, %s36
    %s60 = sphi 0, %s62
    %s63 = sphi 0, %s60
    %s64 = sphi 0, %s63
    %s80 = sphi 0, %s64
    %s88 = sphi 0, %s90
    %s91 = sphi 0, %s88
    %s92 = sphi 0, %s91
    %s108 = sphi 0, %s92
    %s116 = sphi 0, %s118
    %s119 = sphi 0, %s116
    %s120 = sphi 0, %s119
    %s136 = sphi 0, %s120
    %s144 = sphi 0, %s146
    %s147 = sphi 0, %s144
    %s148 = sphi 0, %s147
    %s164 = sphi 0, %s148
    %s172 = sphi 0, %s174
    %s175 = sphi 0, %s172
    %s176 = sphi 0, %s175
    %s192 = sphi 0, %s176
    %s200 = sphi 0, %s202
    %s203 = sphi 0, %s200
    %s204 = sphi 0, %s203
    %s220 = sphi 0, %s204
    %s226 = sphi 0, %s228
    %s229 = sphi 0, %s226
    %s230 = sphi 0, %s229
    %s246 = sphi 0, %s230
    %s252 = sphi 0, %s254
    %s255 = sphi 0, %s252
    %s256 = sphi 0, %s255
    %s272 = sphi 0, %s256
  $region4: #{jvp__.9} parent=0 // loop_header_branch
    %25 = sbr.rel (%p23) target = $region8
  $region5: #{jvp__.9} parent=0 // loop_body
    %s27 = ssub.s32 %s22, 1
    %s28 = ssub.s32 %s22, 2
    %s29 = sadd.s32 %s22, 1
    %s30 = ssub.s32 %s22, %s29
    %p31 = scmp.eq.s32.totalorder %s30, 0
    %s33 = sadd.s32 %s32, 1
    %s34 = scalar_select %p31, %s32, %s33
    %p37 = pneg %p31
    %p38 = scmp.eq.s32.totalorder %s22, 2
    %p39 = por %p37, %p38
    %p40 = scmp.ne.s32.totalorder %s32, %s35
    %p41 = scmp.eq.s32.totalorder %s22, 0
    %p42 = por %p40, %p41
    %p43 = scmp.ne.s32.totalorder %s32, %s35
    %p44 = scmp.eq.s32.totalorder %s27, 2
    %p45 = por %p43, %p44
    %p46 = scmp.ne.s32.totalorder %s35, %s36
    %p47 = scmp.eq.s32.totalorder %s27, 0
    %p48 = por %p46, %p47
    %p49 = scmp.ne.s32.totalorder %s35, %s36
    %p50 = scmp.eq.s32.totalorder %s28, 2
    %p51 = por %p49, %p50
    %p53 = scmp.ne.s32.totalorder %s36, %s52
    %p54 = scmp.eq.s32.totalorder %s28, 0
    %p55 = por %p53, %p54
    %s56 = sld [smem:[#allocation3 + %s22]]
    %s57 = sld [smem:[#allocation3 + %s29]]
    %s58 = ssub.s32 %s56, %s57
    %p59 = scmp.eq.s32.totalorder %s58, 0
    %s61 = sadd.s32 %s60, 1
    %s62 = scalar_select %p59, %s60, %s61
    %p65 = pneg %p59
    %p66 = scmp.eq.s32.totalorder %s22, 2
    %p67 = por %p65, %p66
    %p68 = scmp.ne.s32.totalorder %s60, %s63
    %p69 = scmp.eq.s32.totalorder %s22, 0
    %p70 = por %p68, %p69
    %p71 = scmp.ne.s32.totalorder %s60, %s63
    %p72 = scmp.eq.s32.totalorder %s27, 2
    %p73 = por %p71, %p72
    %p74 = scmp.ne.s32.totalorder %s63, %s64
    %p75 = scmp.eq.s32.totalorder %s27, 0
    %p76 = por %p74, %p75
    %p77 = scmp.ne.s32.totalorder %s63, %s64
    %p78 = scmp.eq.s32.totalorder %s28, 2
    %p79 = por %p77, %p78
    %p81 = scmp.ne.s32.totalorder %s64, %s80
    %p82 = scmp.eq.s32.totalorder %s28, 0
    %p83 = por %p81, %p82
    %s84 = sld [smem:[#allocation3 + %s22]]
    %s85 = sld [smem:[#allocation3 + %s29]]
    %s86 = ssub.s32 %s84, %s85
    %p87 = scmp.eq.s32.totalorder %s86, 0
    %s89 = sadd.s32 %s88, 1
    %s90 = scalar_select %p87, %s88, %s89
    %p93 = pneg %p87
    %p94 = scmp.eq.s32.totalorder %s22, 2
    %p95 = por %p93, %p94
    %p96 = scmp.ne.s32.totalorder %s88, %s91
    %p97 = scmp.eq.s32.totalorder %s22, 0
    %p98 = por %p96, %p97
    %p99 = scmp.ne.s32.totalorder %s88, %s91
    %p100 = scmp.eq.s32.totalorder %s27, 2
    %p101 = por %p99, %p100
    %p102 = scmp.ne.s32.totalorder %s91, %s92
    %p103 = scmp.eq.s32.totalorder %s27, 0
    %p104 = por %p102, %p103
    %p105 = scmp.ne.s32.totalorder %s91, %s92
    %p106 = scmp.eq.s32.totalorder %s28, 2
    %p107 = por %p105, %p106
    %p109 = scmp.ne.s32.totalorder %s92, %s108
    %p110 = scmp.eq.s32.totalorder %s28, 0
    %p111 = por %p109, %p110
    %s112 = sld [smem:[#allocation3 + %s22]]
    %s113 = sld [smem:[#allocation3 + %s29]]
    %s114 = ssub.s32 %s112, %s113
    %p115 = scmp.eq.s32.totalorder %s114, 0
    %s117 = sadd.s32 %s116, 1
    %s118 = scalar_select %p115, %s116, %s117
    %p121 = pneg %p115
    %p122 = scmp.eq.s32.totalorder %s22, 2
    %p123 = por %p121, %p122
    %p124 = scmp.ne.s32.totalorder %s116, %s119
    %p125 = scmp.eq.s32.totalorder %s22, 0
    %p126 = por %p124, %p125
    %p127 = scmp.ne.s32.totalorder %s116, %s119
    %p128 = scmp.eq.s32.totalorder %s27, 2
    %p129 = por %p127, %p128
    %p130 = scmp.ne.s32.totalorder %s119, %s120
    %p131 = scmp.eq.s32.totalorder %s27, 0
    %p132 = por %p130, %p131
    %p133 = scmp.ne.s32.totalorder %s119, %s120
    %p134 = scmp.eq.s32.totalorder %s28, 2
    %p135 = por %p133, %p134
    %p137 = scmp.ne.s32.totalorder %s120, %s136
    %p138 = scmp.eq.s32.totalorder %s28, 0
    %p139 = por %p137, %p138
    %s140 = sld [smem:[#allocation3 + %s22]]
    %s141 = sld [smem:[#allocation3 + %s29]]
    %s142 = ssub.s32 %s140, %s141
    %p143 = scmp.eq.s32.totalorder %s142, 0
    %s145 = sadd.s32 %s144, 1
    %s146 = scalar_select %p143, %s144, %s145
    %p149 = pneg %p143
    %p150 = scmp.eq.s32.totalorder %s22, 2
    %p151 = por %p149, %p150
    %p152 = scmp.ne.s32.totalorder %s144, %s147
    %p153 = scmp.eq.s32.totalorder %s22, 0
    %p154 = por %p152, %p153
    %p155 = scmp.ne.s32.totalorder %s144, %s147
    %p156 = scmp.eq.s32.totalorder %s27, 2
    %p157 = por %p155, %p156
    %p158 = scmp.ne.s32.totalorder %s147, %s148
    %p159 = scmp.eq.s32.totalorder %s27, 0
    %p160 = por %p158, %p159
    %p161 = scmp.ne.s32.totalorder %s147, %s148
    %p162 = scmp.eq.s32.totalorder %s28, 2
    %p163 = por %p161, %p162
    %p165 = scmp.ne.s32.totalorder %s148, %s164
    %p166 = scmp.eq.s32.totalorder %s28, 0
    %p167 = por %p165, %p166
    %s168 = sld [smem:[#allocation3 + %s22]]
    %s169 = sld [smem:[#allocation3 + %s29]]
    %s170 = ssub.s32 %s168, %s169
    %p171 = scmp.eq.s32.totalorder %s170, 0
    %s173 = sadd.s32 %s172, 1
    %s174 = scalar_select %p171, %s172, %s173
    %p177 = pneg %p171
    %p178 = scmp.eq.s32.totalorder %s22, 2
    %p179 = por %p177, %p178
    %p180 = scmp.ne.s32.totalorder %s172, %s175
    %p181 = scmp.eq.s32.totalorder %s22, 0
    %p182 = por %p180, %p181
    %p183 = scmp.ne.s32.totalorder %s172, %s175
    %p184 = scmp.eq.s32.totalorder %s27, 2
    %p185 = por %p183, %p184
    %p186 = scmp.ne.s32.totalorder %s175, %s176
    %p187 = scmp.eq.s32.totalorder %s27, 0
    %p188 = por %p186, %p187
    %p189 = scmp.ne.s32.totalorder %s175, %s176
    %p190 = scmp.eq.s32.totalorder %s28, 2
    %p191 = por %p189, %p190
    %p193 = scmp.ne.s32.totalorder %s176, %s192
    %p194 = scmp.eq.s32.totalorder %s28, 0
    %p195 = por %p193, %p194
    %s196 = sld [smem:[#allocation3 + %s22]]
    %s197 = sld [smem:[#allocation3 + %s29]]
    %s198 = ssub.s32 %s196, %s197
    %p199 = scmp.eq.s32.totalorder %s198, 0
    %s201 = sadd.s32 %s200, 1
    %s202 = scalar_select %p199, %s200, %s201
    %p205 = pneg %p199
    %p206 = scmp.eq.s32.totalorder %s22, 2
    %p207 = por %p205, %p206
    %p208 = scmp.ne.s32.totalorder %s200, %s203
    %p209 = scmp.eq.s32.totalorder %s22, 0
    %p210 = por %p208, %p209
    %p211 = scmp.ne.s32.totalorder %s200, %s203
    %p212 = scmp.eq.s32.totalorder %s27, 2
    %p213 = por %p211, %p212
    %p214 = scmp.ne.s32.totalorder %s203, %s204
    %p215 = scmp.eq.s32.totalorder %s27, 0
    %p216 = por %p214, %p215
    %p217 = scmp.ne.s32.totalorder %s203, %s204
    %p218 = scmp.eq.s32.totalorder %s28, 2
    %p219 = por %p217, %p218
    %p221 = scmp.ne.s32.totalorder %s204, %s220
    %p222 = scmp.eq.s32.totalorder %s28, 0
    %p223 = por %p221, %p222
    %s224 = ssub.s32 %s22, %s29
    %p225 = scmp.eq.s32.totalorder %s224, 0
    %s227 = sadd.s32 %s226, 1
    %s228 = scalar_select %p225, %s226, %s227
    %p231 = pneg %p225
    %p232 = scmp.eq.s32.totalorder %s22, 2
    %p233 = por %p231, %p232
    %p234 = scmp.ne.s32.totalorder %s226, %s229
    %p235 = scmp.eq.s32.totalorder %s22, 0
    %p236 = por %p234, %p235
    %p237 = scmp.ne.s32.totalorder %s226, %s229
    %p238 = scmp.eq.s32.totalorder %s27, 2
    %p239 = por %p237, %p238
    %p240 = scmp.ne.s32.totalorder %s229, %s230
    %p241 = scmp.eq.s32.totalorder %s27, 0
    %p242 = por %p240, %p241
    %p243 = scmp.ne.s32.totalorder %s229, %s230
    %p244 = scmp.eq.s32.totalorder %s28, 2
    %p245 = por %p243, %p244
    %p247 = scmp.ne.s32.totalorder %s230, %s246
    %p248 = scmp.eq.s32.totalorder %s28, 0
    %p249 = por %p247, %p248
    %s250 = ssub.s32 %s22, %s29
    %p251 = scmp.eq.s32.totalorder %s250, 0
    %s253 = sadd.s32 %s252, 1
    %s254 = scalar_select %p251, %s252, %s253
    %p257 = pneg %p251
    %p258 = scmp.eq.s32.totalorder %s22, 2
    %p259 = por %p257, %p258
    %p260 = scmp.ne.s32.totalorder %s252, %s255
    %p261 = scmp.eq.s32.totalorder %s22, 0
    %p262 = por %p260, %p261
    %p263 = scmp.ne.s32.totalorder %s252, %s255
    %p264 = scmp.eq.s32.totalorder %s27, 2
    %p265 = por %p263, %p264
    %p266 = scmp.ne.s32.totalorder %s255, %s256
    %p267 = scmp.eq.s32.totalorder %s27, 0
    %p268 = por %p266, %p267
    %p269 = scmp.ne.s32.totalorder %s255, %s256
    %p270 = scmp.eq.s32.totalorder %s28, 2
    %p271 = por %p269, %p270
    %p273 = scmp.ne.s32.totalorder %s256, %s272
    %p274 = scmp.eq.s32.totalorder %s28, 0
    %p275 = por %p273, %p274
    %p276 = scmp.le.s32.totalorder 1, %s22
    %p277 = scmp.lt.s32.totalorder %s22, 4
    %p278 = pnand %p276, %p277
    %p279 = pneg %p278
    // Predicated region
    $region9: #{jvp__.9} parent=5 // pred_check
      _
    $region10: #{jvp__.9} parent=5 // pred_check_branch
      %281 = sbr.rel (%p278) target = $region12
    $region11: #{jvp__.9} parent=5 // pred_region
      %s282 = ssub.s32 %s22, 1
    $region12: #{jvp__.9} parent=5 // pred_fallthru
      _
    %p283 = scmp.lt.s32.totalorder %s22, 3
    // Predicated region
    $region13: #{jvp__.9} parent=5 // pred_check
      %p284 = pneg %p283
    $region14: #{jvp__.9} parent=5 // pred_check_branch
      %286 = sbr.rel (%p284) target = $region16
    $region15: #{jvp__.9} parent=5 // pred_region
      // Predicated region
      $region17: #{jvp__.9} parent=15 // pred_check
        %p287 = pneg %p42
      $region18: #{jvp__.9} parent=15 // pred_check_branch
        %289 = sbr.rel (%p287) target = $region20
      $region19: #{jvp__.9} parent=15 // pred_region
        %p290 = scmp.lt.s32.totalorder %s22, 2
        %s291 = scalar_select %p290, %s22, 2
        %s292 = smul.addr %s291, 8
        %s293 = scalar_lea.vmem %s1, %s292
      $region20: #{jvp__.9} parent=15 // pred_fallthru
        _
      // Predicated region
      $region21: #{jvp__.9} parent=15 // pred_check
        %p294 = pneg %p70
      $region22: #{jvp__.9} parent=15 // pred_check_branch
        %296 = sbr.rel (%p294) target = $region24
      $region23: #{jvp__.9} parent=15 // pred_region
        %s297 = sld [smem:[#allocation3 + %s22]]
        %p298 = scmp.lt.s32.totalorder %s297, 1
        %s299 = scalar_select %p298, %s297, 1
        %s300 = smul.addr %s299, 11
        %s301 = smul.addr %s300, 8
        %s302 = scalar_lea.vmem %s2, %s301
        %s303 = sld [smem:[#allocation3 + %s22]]
      $region24: #{jvp__.9} parent=15 // pred_fallthru
        _
      // Predicated region
      $region25: #{jvp__.9} parent=15 // pred_check
        %p304 = pneg %p98
      $region26: #{jvp__.9} parent=15 // pred_check_branch
        %306 = sbr.rel (%p304) target = $region28
      $region27: #{jvp__.9} parent=15 // pred_region
        %s307 = sld [smem:[#allocation3 + %s22]]
        %p308 = scmp.lt.s32.totalorder %s307, 1
        %s309 = scalar_select %p308, %s307, 1
        %s310 = scalar_lea.vmem %s3, %s309
        %s311 = sld [smem:[#allocation3 + %s22]]
      $region28: #{jvp__.9} parent=15 // pred_fallthru
        _
      // Predicated region
      $region29: #{jvp__.9} parent=15 // pred_check
        %p312 = pneg %p126
      $region30: #{jvp__.9} parent=15 // pred_check_branch
        %314 = sbr.rel (%p312) target = $region32
      $region31: #{jvp__.9} parent=15 // pred_region
        %s315 = sld [smem:[#allocation3 + %s22]]
        %p316 = scmp.lt.s32.totalorder %s315, 1
        %s317 = scalar_select %p316, %s315, 1
        %s318 = scalar_lea.vmem %s4, %s317
        %s319 = sld [smem:[#allocation3 + %s22]]
      $region32: #{jvp__.9} parent=15 // pred_fallthru
        _
      // Predicated region
      $region33: #{jvp__.9} parent=15 // pred_check
        %p320 = pneg %p154
      $region34: #{jvp__.9} parent=15 // pred_check_branch
        %322 = sbr.rel (%p320) target = $region36
      $region35: #{jvp__.9} parent=15 // pred_region
        %s323 = sld [smem:[#allocation3 + %s22]]
        %p324 = scmp.lt.s32.totalorder %s323, 1
        %s325 = scalar_select %p324, %s323, 1
        %s326 = scalar_lea.vmem %s5, %s325
        %s327 = sld [smem:[#allocation3 + %s22]]
      $region36: #{jvp__.9} parent=15 // pred_fallthru
        _
      // Predicated region
      $region37: #{jvp__.9} parent=15 // pred_check
        %p328 = pneg %p182
      $region38: #{jvp__.9} parent=15 // pred_check_branch
        %330 = sbr.rel (%p328) target = $region40
      $region39: #{jvp__.9} parent=15 // pred_region
        %s331 = sld [smem:[#allocation3 + %s22]]
        %p332 = scmp.lt.s32.totalorder %s331, 1
        %s333 = scalar_select %p332, %s331, 1
        %s334 = scalar_lea.vmem %s6, %s333
        %s335 = sld [smem:[#allocation3 + %s22]]
      $region40: #{jvp__.9} parent=15 // pred_fallthru
        _
      // Predicated region
      $region41: #{jvp__.9} parent=15 // pred_check
        %p336 = pneg %p210
      $region42: #{jvp__.9} parent=15 // pred_check_branch
        %338 = sbr.rel (%p336) target = $region44
      $region43: #{jvp__.9} parent=15 // pred_region
        %s339 = sld [smem:[#allocation3 + %s22]]
        %p340 = scmp.lt.s32.totalorder %s339, 1
        %s341 = scalar_select %p340, %s339, 1
        %s342 = scalar_lea.vmem %s7, %s341
        %s343 = sld [smem:[#allocation3 + %s22]]
      $region44: #{jvp__.9} parent=15 // pred_fallthru
        _
    $region16: #{jvp__.9} parent=5 // pred_fallthru
      _
    %p344 = scmp.le.s32.totalorder 1, %s22
    %p345 = scmp.lt.s32.totalorder %s22, 4
    %p346 = pnand %p344, %p345
    %p347 = pneg %p346
    // Predicated region
    $region45: #{jvp__.9} parent=5 // pred_check
      _
    $region46: #{jvp__.9} parent=5 // pred_check_branch
      %349 = sbr.rel (%p346) target = $region48
    $region47: #{jvp__.9} parent=5 // pred_region
      %s350 = ssub.s32 %s22, 1
      %p351 = scmp.lt.s32.totalorder %s27, 2
      %s352 = scalar_select %p351, %s27, 2
      %s353 = smul.addr %s352, 8
      %s354 = scalar_lea.vmem %s1, %s353
      %p355 = pneg %p48
      %p356 = pneg %p45
      %s357 = sld [smem:[#allocation3 + %s27]]
      %p358 = scmp.lt.s32.totalorder %s357, 1
      %s359 = scalar_select %p358, %s357, 1
      %s360 = smul.addr %s359, 11
      %s361 = smul.addr %s360, 8
      %s362 = scalar_lea.vmem %s2, %s361
      %p363 = pneg %p76
      %p364 = pneg %p73
      %s365 = sld [smem:[#allocation3 + %s27]]
      %p366 = scmp.lt.s32.totalorder %s365, 1
      %s367 = scalar_select %p366, %s365, 1
      %s368 = scalar_lea.vmem %s3, %s367
      %p369 = pneg %p104
      %p370 = pneg %p101
      %s371 = sld [smem:[#allocation3 + %s27]]
      %p372 = scmp.lt.s32.totalorder %s371, 1
      %s373 = scalar_select %p372, %s371, 1
      %s374 = scalar_lea.vmem %s4, %s373
      %p375 = pneg %p132
      %p376 = pneg %p129
      %s377 = sld [smem:[#allocation3 + %s27]]
      %p378 = scmp.lt.s32.totalorder %s377, 1
      %s379 = scalar_select %p378, %s377, 1
      %s380 = scalar_lea.vmem %s5, %s379
      %p381 = pneg %p160
      %p382 = pneg %p157
      %s383 = sld [smem:[#allocation3 + %s27]]
      %p384 = scmp.lt.s32.totalorder %s383, 1
      %s385 = scalar_select %p384, %s383, 1
      %s386 = scalar_lea.vmem %s6, %s385
      %p387 = pneg %p188
      %p388 = pneg %p185
      %s389 = sld [smem:[#allocation3 + %s27]]
      %p390 = scmp.lt.s32.totalorder %s389, 1
      %s391 = scalar_select %p390, %s389, 1
      %s392 = scalar_lea.vmem %s7, %s391
      %p393 = pneg %p216
      %p394 = pneg %p213
      %p395 = pneg %p242
      %p396 = pneg %p239
      %p397 = scmp.lt.s32.totalorder %s27, 2
      %s398 = scalar_select %p397, %s27, 2
      %s399 = smul.addr %s398, 8
      %s400 = scalar_lea.vmem %s8, %s399
      %p401 = pneg %p268
      %p402 = pneg %p265
      %p403 = scmp.lt.s32.totalorder %s27, 2
      %s404 = scalar_select %p403, %s27, 2
      %s405 = smul.addr %s404, 8
      %s406 = scalar_lea.vmem %s9, %s405
      %p407 = scmp.lt.s32.totalorder %s27, 2
      %s408 = scalar_select %p407, %s27, 2
      %s409 = smul.addr %s408, 8
      %s410 = scalar_lea.vmem %s1, %s409
      %s411 = sld [smem:[#allocation3 + %s27]]
      %p412 = scmp.lt.s32.totalorder %s411, 1
      %s413 = scalar_select %p412, %s411, 1
      %s414 = smul.addr %s413, 11
      %s415 = smul.addr %s414, 8
      %s416 = scalar_lea.vmem %s2, %s415
      %s417 = sld [smem:[#allocation3 + %s27]]
      %s418 = sld [smem:[#allocation3 + %s27]]
      %p419 = scmp.lt.s32.totalorder %s418, 1
      %s420 = scalar_select %p419, %s418, 1
      %s421 = scalar_lea.vmem %s3, %s420
      %s422 = sld [smem:[#allocation3 + %s27]]
      %s423 = sld [smem:[#allocation3 + %s27]]
      %p424 = scmp.lt.s32.totalorder %s423, 1
      %s425 = scalar_select %p424, %s423, 1
      %s426 = scalar_lea.vmem %s4, %s425
      %s427 = sld [smem:[#allocation3 + %s27]]
      %s428 = sld [smem:[#allocation3 + %s27]]
      %p429 = scmp.lt.s32.totalorder %s428, 1
      %s430 = scalar_select %p429, %s428, 1
      %s431 = scalar_lea.vmem %s5, %s430
      %s432 = sld [smem:[#allocation3 + %s27]]
      %s433 = sld [smem:[#allocation3 + %s27]]
      %p434 = scmp.lt.s32.totalorder %s433, 1
      %s435 = scalar_select %p434, %s433, 1
      %s436 = scalar_lea.vmem %s6, %s435
      %s437 = sld [smem:[#allocation3 + %s27]]
      %s438 = sld [smem:[#allocation3 + %s27]]
      %p439 = scmp.lt.s32.totalorder %s438, 1
      %s440 = scalar_select %p439, %s438, 1
      %s441 = scalar_lea.vmem %s7, %s440
      %s442 = sld [smem:[#allocation3 + %s27]]
      %p443 = scmp.lt.s32.totalorder %s27, 2
      %s444 = scalar_select %p443, %s27, 2
      %s445 = smul.addr %s444, 8
      %s446 = scalar_lea.vmem %s8, %s445
      %p447 = scmp.lt.s32.totalorder %s27, 2
      %s448 = scalar_select %p447, %s27, 2
      %s449 = smul.addr %s448, 8
      %s450 = scalar_lea.vmem %s9, %s449
      %v452 = vld [vmem:[%s410] sm:$0xff]
      %v453 = vpack.c.bf16 %v452, %v452
      %v454 = vld [vmem:[%s416] sm:$0xff]
      %v455 = vld [vmem:[%s416 + $0x8] sm:$0xff]
      %v456 = vld [vmem:[%s416 + $0x10] sm:$0xff]
      %v457 = vld [vmem:[%s416 + $0x18] sm:$0xff]
      %v458 = vld [vmem:[%s416 + $0x20] sm:$0xff]
      %v459 = vld [vmem:[%s416 + $0x28] sm:$0xff]
      %v460 = vld [vmem:[%s416 + $0x30] sm:$0xff]
      %v461 = vld [vmem:[%s416 + $0x38] sm:$0xff]
      %v462 = vld [vmem:[%s416 + $0x40] sm:$0xff]
      %v463 = vld [vmem:[%s416 + $0x48] sm:$0xff]
      %v464 = vld [vmem:[%s416 + $0x50] sm:$0xf]
      %v465 = vpack.c.bf16 %v455, %v454
      %v466 = vpack.c.bf16 %v457, %v456
      %v467 = vpack.c.bf16 %v459, %v458
      %v468 = vpack.c.bf16 %v461, %v460
      %v469 = vpack.c.bf16 %v463, %v462
      %v470 = vpack.c.bf16 %v464, %v464
      %v471 = vld [vmem:[%s421] sm:$0x1]
      %v473 = vlaneseq
      %v474 = vshrl.u32 %v473, 7
      %v475 = vsub.s32 0, %v474
      %v476 = vrot.slane %v471, %v475
      %vm478 = vcmask 687104
      %v480 = vsel %vm478, %v453, 0
      %vm482 = vcmask 1041408
      %v484 = vsel %vm482, %v470, 0
      %486 = vmatprep.subr.bf16.mxu0 0
      %487 = vmatpush1.bf16.msra.mxu0 0
      %488 = vmatprep.subr.bf16.mxu0 0
      %489 = vmatpush1.bf16.msra.mxu0 0
      %490 = vmatprep.subr.bf16.mxu0 0
      %491 = vmatpush1.bf16.msra.mxu0 %v484
      %492 = vmatprep.subr.bf16.mxu0 0
      %493 = vmatpush1.bf16.msra.mxu0 %v469
      %494 = vmatprep.subr.bf16.mxu0 0
      %495 = vmatpush1.bf16.msra.mxu0 %v468
      %496 = vmatprep.subr.bf16.mxu0 0
      %497 = vmatpush1.bf16.msra.mxu0 %v467
      %498 = vmatprep.subr.bf16.mxu0 0
      %499 = vmatpush1.bf16.msra.mxu0 %v466
      %500 = vmatprep.subr.bf16.mxu0 0
      %501 = vmatpush1.bf16.msra.mxu0 %v465
      %502 = vmatprep.subr.bf16.mxu0 0
      %503 = vmatpush2.bf16.msra.mxu0 0
      %504 = vmatprep.subr.bf16.mxu0 0
      %505 = vmatpush2.bf16.msra.mxu0 0
      %506 = vmatprep.subr.bf16.mxu0 0
      %507 = vmatpush2.bf16.msra.mxu0 0
      %508 = vmatprep.subr.bf16.mxu0 0
      %509 = vmatpush2.bf16.msra.mxu0 0
      %510 = vmatprep.subr.bf16.mxu0 0
      %511 = vmatpush2.bf16.msra.mxu0 0
      %512 = vmatprep.subr.bf16.mxu0 0
      %513 = vmatpush2.bf16.msra.mxu0 0
      %514 = vmatprep.subr.bf16.mxu0 0
      %515 = vmatpush2.bf16.msra.mxu0 0
      %516 = vmatprep.subr.bf16.mxu0 0
      %517 = vmatpush2.bf16.msra.mxu0 0
      %518 = vmatprep.mubr.bf16.mxu0 0
      %519 = vmatmul.mubr.bf16.gmra.mxu0 %v480
      %v520 = vpop.f32.mrf.mxu0
      %v521 = vadd.f32 %v476, %v520
      %v522 = vpop.f32.mrf.mxu0
      %v523 = vpop.f32.mrf.mxu0
      %v524 = vpop.f32.mrf.mxu0
      %525 = vdwg.mxu0
      %526 = vst [vmem:[%s450] sm:$0xff] %v521
      %527 = vadd.xlane.f32.xlu0 %v521
      %v528 = vpop.xlane.xlu0 %527
      %v529 = vrcp.pop 128.0
      %v530 = vmul.f32 %v528, %v529
      %v531 = vsub.f32 %v521, %v530
      %v532 = vmul.f32 %v531, %v531
      %533 = vadd.xlane.f32.xlu0 %v532
      %v534 = vpop.xlane.xlu0 %533
      %v535 = vmul.f32 %v534, %v529
      %v536 = vadd.f32 %v535, 1e-05
      %v537 = vrsqrt.pop %v536
      %v538 = vmul.f32 %v531, %v537
      %v539 = vld [vmem:[%s426] sm:$0x1]
      %v541 = vlaneseq
      %v542 = vshrl.u32 %v541, 7
      %v543 = vsub.s32 0, %v542
      %v544 = vrot.slane %v539, %v543
      %v546 = vmul.f32 %v538, %v544
      %v547 = vld [vmem:[%s431] sm:$0x1]
      %v549 = vlaneseq
      %v550 = vshrl.u32 %v549, 7
      %v551 = vsub.s32 0, %v550
      %v552 = vrot.slane %v547, %v551
      %v554 = vadd.f32 %v546, %v552
      %v555 = vld [vmem:[%s441] sm:$0x1]
      %v557 = vlaneseq
      %v558 = vshrl.u32 %v557, 7
      %v559 = vsub.s32 0, %v558
      %v560 = vrot.slane %v555, %v559
      %v562 = vmul.f32 %v554, %v560
      %v563 = vsub.f32 0.0, %v562
      %v564 = vmul.f32 %v563, 1.442695
      %v565 = vpow.pop %v564
      %v566 = vadd.f32 %v565, 1.0
      %v567 = vrcp.pop %v566
      %v568 = vld [vmem:[%s436] sm:$0x1]
      %v570 = vlaneseq
      %v571 = vshrl.u32 %v570, 7
      %v572 = vsub.s32 0, %v571
      %v573 = vrot.slane %v568, %v572
      %v575 = vmul.f32 %v573, %v562
      %v576 = vmul.f32 %v575, %v567
      %577 = vst [vmem:[%s446] sm:$0xff] %v576
      %p578 = scmp.lt.s32.totalorder %s27, 2
      %s579 = scalar_select %p578, %s27, 2
      %s580 = smul.addr %s579, 8
      %s581 = scalar_lea.vmem %s8, %s580
      %p582 = scmp.lt.s32.totalorder %s27, 2
      %s583 = scalar_select %p582, %s27, 2
      %s584 = smul.addr %s583, 8
      %s585 = scalar_lea.vmem %s9, %s584
      // Predicated region
      $region49: #{jvp__.9} parent=47 // pred_check
        %p586 = pneg %p239
      $region50: #{jvp__.9} parent=47 // pred_check_branch
        %588 = sbr.rel (%p586) target = $region52
      $region51: #{jvp__.9} parent=47 // pred_region
        _
      $region52: #{jvp__.9} parent=47 // pred_fallthru
        _
      // Predicated region
      $region53: #{jvp__.9} parent=47 // pred_check
        %p589 = pneg %p265
      $region54: #{jvp__.9} parent=47 // pred_check_branch
        %591 = sbr.rel (%p589) target = $region56
      $region55: #{jvp__.9} parent=47 // pred_region
        _
      $region56: #{jvp__.9} parent=47 // pred_fallthru
        _
    $region48: #{jvp__.9} parent=5 // pred_fallthru
      _
    %p592 = scmp.le.s32.totalorder 2, %s22
    // Predicated region
    $region57: #{jvp__.9} parent=5 // pred_check
      %p593 = pneg %p592
    $region58: #{jvp__.9} parent=5 // pred_check_branch
      %595 = sbr.rel (%p593) target = $region60
    $region59: #{jvp__.9} parent=5 // pred_region
      %s596 = ssub.s32 %s22, 2
      // Predicated region
      $region61: #{jvp__.9} parent=59 // pred_check
        %p597 = pneg %p245
      $region62: #{jvp__.9} parent=59 // pred_check_branch
        %599 = sbr.rel (%p597) target = $region64
      $region63: #{jvp__.9} parent=59 // pred_region
        %p600 = scmp.lt.s32.totalorder %s28, 2
        %s601 = scalar_select %p600, %s28, 2
        %s602 = smul.addr %s601, 8
        %s603 = scalar_lea.vmem %s8, %s602
      $region64: #{jvp__.9} parent=59 // pred_fallthru
        _
      // Predicated region
      $region65: #{jvp__.9} parent=59 // pred_check
        %p604 = pneg %p271
      $region66: #{jvp__.9} parent=59 // pred_check_branch
        %606 = sbr.rel (%p604) target = $region68
      $region67: #{jvp__.9} parent=59 // pred_region
        %p607 = scmp.lt.s32.totalorder %s28, 2
        %s608 = scalar_select %p607, %s28, 2
        %s609 = smul.addr %s608, 8
        %s610 = scalar_lea.vmem %s9, %s609
      $region68: #{jvp__.9} parent=59 // pred_fallthru
        _
    $region60: #{jvp__.9} parent=5 // pred_fallthru
      _
  $region6: #{jvp__.9} parent=0 // loop_footer
    %s26 = sadd.s32 1, %s22
  $region7: #{jvp__.9} parent=0 // loop_footer_branch
    %21 = sbr.rel target = $region3
  $region8: #{jvp__.9} parent=0 // loop_exit
    _

// kernel: jvp__.11
$region0: #{jvp__.11}
  #allocation0 [shape = 'u32[]', space=smem, size = 0x4, offset = 0x4, fixed_abs, tag = 'smem constant byte address 0x4 - core index']
  #allocation1 [shape = 'u32[144,128]{1,0:T(1,128)}', space=vmem, size = 0x12000, scoped, tag = 'internal scratch']
  #allocation2 [shape = 's32[1]{0}', space=sflag, size = 0x4, scoped, tag = 'scoped memory for jvp__.11']
  #allocation3 [shape = 'u8[512]{0}', space=smem, size = 0x200, scoped, tag = 'prefetched SMEM operand 0']
  %s0 = inlined_call_operand.vmem [shape: s32[3], index: 0, kind: input, shape index: {}]
  %s1 = inlined_call_operand.vmem [shape: f32[24,128], index: 1, kind: input, shape index: {}]
  %s2 = inlined_call_operand.vmem [shape: f32[2,128,7], index: 2, kind: input, shape index: {}]
  %s3 = inlined_call_operand.vmem [shape: f32[2,1,7], index: 3, kind: input, shape index: {}]
  %s4 = inlined_call_operand.vmem [shape: f32[24,7], index: 4, kind: output, shape index: {}]
  %s5 = sld [smem:[#allocation0]]
  $region45: #{jvp__.11} parent=0
    _
  %s7 = ssub.s32 1, %s5
  %s8 = scalar_select 0, %s7, %s5
  %s9 = sshll.u32 %s0, 4
  %s10 = int_to_ptr.vmem [resolvable:$true] %s9
  %12 = dma.vmem_to_smem %s10, 16, [#allocation3], [#allocation2]
  %13 = dma.done [#allocation2], 16
  %14 = sfence
  loop: start=0, step=1, limit=5
  $region2: #{jvp__.11} parent=0 // loop_pre_header
    _
  $region3: #{jvp__.11} parent=0 // loop_header
    %s16 = sphi 0, %s20
    %p17 = scmp.ge.s32.totalorder %s16, 5
    %s26 = sphi 0, %s28
    %s29 = sphi 0, %s26
    %s30 = sphi 0, %s29
    %s46 = sphi 0, %s30
    %s54 = sphi 0, %s56
    %s57 = sphi 0, %s54
    %s58 = sphi 0, %s57
    %s74 = sphi 0, %s58
    %s82 = sphi 0, %s84
    %s85 = sphi 0, %s82
    %s86 = sphi 0, %s85
    %s102 = sphi 0, %s86
    %s108 = sphi 0, %s110
    %s111 = sphi 0, %s108
    %s112 = sphi 0, %s111
    %s128 = sphi 0, %s112
  $region4: #{jvp__.11} parent=0 // loop_header_branch
    %19 = sbr.rel (%p17) target = $region8
  $region5: #{jvp__.11} parent=0 // loop_body
    %s21 = ssub.s32 %s16, 1
    %s22 = ssub.s32 %s16, 2
    %s23 = sadd.s32 %s16, 1
    %s24 = ssub.s32 %s16, %s23
    %p25 = scmp.eq.s32.totalorder %s24, 0
    %s27 = sadd.s32 %s26, 1
    %s28 = scalar_select %p25, %s26, %s27
    %p31 = pneg %p25
    %p32 = scmp.eq.s32.totalorder %s16, 2
    %p33 = por %p31, %p32
    %p34 = scmp.ne.s32.totalorder %s26, %s29
    %p35 = scmp.eq.s32.totalorder %s16, 0
    %p36 = por %p34, %p35
    %p37 = scmp.ne.s32.totalorder %s26, %s29
    %p38 = scmp.eq.s32.totalorder %s21, 2
    %p39 = por %p37, %p38
    %p40 = scmp.ne.s32.totalorder %s29, %s30
    %p41 = scmp.eq.s32.totalorder %s21, 0
    %p42 = por %p40, %p41
    %p43 = scmp.ne.s32.totalorder %s29, %s30
    %p44 = scmp.eq.s32.totalorder %s22, 2
    %p45 = por %p43, %p44
    %p47 = scmp.ne.s32.totalorder %s30, %s46
    %p48 = scmp.eq.s32.totalorder %s22, 0
    %p49 = por %p47, %p48
    %s50 = sld [smem:[#allocation3 + %s16]]
    %s51 = sld [smem:[#allocation3 + %s23]]
    %s52 = ssub.s32 %s50, %s51
    %p53 = scmp.eq.s32.totalorder %s52, 0
    %s55 = sadd.s32 %s54, 1
    %s56 = scalar_select %p53, %s54, %s55
    %p59 = pneg %p53
    %p60 = scmp.eq.s32.totalorder %s16, 2
    %p61 = por %p59, %p60
    %p62 = scmp.ne.s32.totalorder %s54, %s57
    %p63 = scmp.eq.s32.totalorder %s16, 0
    %p64 = por %p62, %p63
    %p65 = scmp.ne.s32.totalorder %s54, %s57
    %p66 = scmp.eq.s32.totalorder %s21, 2
    %p67 = por %p65, %p66
    %p68 = scmp.ne.s32.totalorder %s57, %s58
    %p69 = scmp.eq.s32.totalorder %s21, 0
    %p70 = por %p68, %p69
    %p71 = scmp.ne.s32.totalorder %s57, %s58
    %p72 = scmp.eq.s32.totalorder %s22, 2
    %p73 = por %p71, %p72
    %p75 = scmp.ne.s32.totalorder %s58, %s74
    %p76 = scmp.eq.s32.totalorder %s22, 0
    %p77 = por %p75, %p76
    %s78 = sld [smem:[#allocation3 + %s16]]
    %s79 = sld [smem:[#allocation3 + %s23]]
    %s80 = ssub.s32 %s78, %s79
    %p81 = scmp.eq.s32.totalorder %s80, 0
    %s83 = sadd.s32 %s82, 1
    %s84 = scalar_select %p81, %s82, %s83
    %p87 = pneg %p81
    %p88 = scmp.eq.s32.totalorder %s16, 2
    %p89 = por %p87, %p88
    %p90 = scmp.ne.s32.totalorder %s82, %s85
    %p91 = scmp.eq.s32.totalorder %s16, 0
    %p92 = por %p90, %p91
    %p93 = scmp.ne.s32.totalorder %s82, %s85
    %p94 = scmp.eq.s32.totalorder %s21, 2
    %p95 = por %p93, %p94
    %p96 = scmp.ne.s32.totalorder %s85, %s86
    %p97 = scmp.eq.s32.totalorder %s21, 0
    %p98 = por %p96, %p97
    %p99 = scmp.ne.s32.totalorder %s85, %s86
    %p100 = scmp.eq.s32.totalorder %s22, 2
    %p101 = por %p99, %p100
    %p103 = scmp.ne.s32.totalorder %s86, %s102
    %p104 = scmp.eq.s32.totalorder %s22, 0
    %p105 = por %p103, %p104
    %s106 = ssub.s32 %s16, %s23
    %p107 = scmp.eq.s32.totalorder %s106, 0
    %s109 = sadd.s32 %s108, 1
    %s110 = scalar_select %p107, %s108, %s109
    %p113 = pneg %p107
    %p114 = scmp.eq.s32.totalorder %s16, 2
    %p115 = por %p113, %p114
    %p116 = scmp.ne.s32.totalorder %s108, %s111
    %p117 = scmp.eq.s32.totalorder %s16, 0
    %p118 = por %p116, %p117
    %p119 = scmp.ne.s32.totalorder %s108, %s111
    %p120 = scmp.eq.s32.totalorder %s21, 2
    %p121 = por %p119, %p120
    %p122 = scmp.ne.s32.totalorder %s111, %s112
    %p123 = scmp.eq.s32.totalorder %s21, 0
    %p124 = por %p122, %p123
    %p125 = scmp.ne.s32.totalorder %s111, %s112
    %p126 = scmp.eq.s32.totalorder %s22, 2
    %p127 = por %p125, %p126
    %p129 = scmp.ne.s32.totalorder %s112, %s128
    %p130 = scmp.eq.s32.totalorder %s22, 0
    %p131 = por %p129, %p130
    %p132 = scmp.le.s32.totalorder 1, %s16
    %p133 = scmp.lt.s32.totalorder %s16, 4
    %p134 = pnand %p132, %p133
    %p135 = pneg %p134
    // Predicated region
    $region9: #{jvp__.11} parent=5 // pred_check
      _
    $region10: #{jvp__.11} parent=5 // pred_check_branch
      %137 = sbr.rel (%p134) target = $region12
    $region11: #{jvp__.11} parent=5 // pred_region
      %s138 = ssub.s32 %s16, 1
    $region12: #{jvp__.11} parent=5 // pred_fallthru
      _
    %p139 = scmp.lt.s32.totalorder %s16, 3
    // Predicated region
    $region13: #{jvp__.11} parent=5 // pred_check
      %p140 = pneg %p139
    $region14: #{jvp__.11} parent=5 // pred_check_branch
      %142 = sbr.rel (%p140) target = $region16
    $region15: #{jvp__.11} parent=5 // pred_region
      // Predicated region
      $region17: #{jvp__.11} parent=15 // pred_check
        %p143 = pneg %p36
      $region18: #{jvp__.11} parent=15 // pred_check_branch
        %145 = sbr.rel (%p143) target = $region20
      $region19: #{jvp__.11} parent=15 // pred_region
        %p146 = scmp.lt.s32.totalorder %s16, 2
        %s147 = scalar_select %p146, %s16, 2
        %s148 = smul.addr %s147, 8
        %s149 = scalar_lea.vmem %s1, %s148
      $region20: #{jvp__.11} parent=15 // pred_fallthru
        _
      // Predicated region
      $region21: #{jvp__.11} parent=15 // pred_check
        %p150 = pneg %p64
      $region22: #{jvp__.11} parent=15 // pred_check_branch
        %152 = sbr.rel (%p150) target = $region24
      $region23: #{jvp__.11} parent=15 // pred_region
        %s153 = sld [smem:[#allocation3 + %s16]]
        %p154 = scmp.lt.s32.totalorder %s153, 1
        %s155 = scalar_select %p154, %s153, 1
        %s156 = smul.addr %s155, 16
        %s157 = smul.addr %s156, 8
        %s158 = scalar_lea.vmem %s2, %s157
        %s159 = sld [smem:[#allocation3 + %s16]]
      $region24: #{jvp__.11} parent=15 // pred_fallthru
        _
      // Predicated region
      $region25: #{jvp__.11} parent=15 // pred_check
        %p160 = pneg %p92
      $region26: #{jvp__.11} parent=15 // pred_check_branch
        %162 = sbr.rel (%p160) target = $region28
      $region27: #{jvp__.11} parent=15 // pred_region
        %s163 = sld [smem:[#allocation3 + %s16]]
        %p164 = scmp.lt.s32.totalorder %s163, 1
        %s165 = scalar_select %p164, %s163, 1
        %s166 = scalar_lea.vmem %s3, %s165
        %s167 = sld [smem:[#allocation3 + %s16]]
      $region28: #{jvp__.11} parent=15 // pred_fallthru
        _
    $region16: #{jvp__.11} parent=5 // pred_fallthru
      _
    %p168 = scmp.le.s32.totalorder 1, %s16
    %p169 = scmp.lt.s32.totalorder %s16, 4
    %p170 = pnand %p168, %p169
    %p171 = pneg %p170
    // Predicated region
    $region29: #{jvp__.11} parent=5 // pred_check
      _
    $region30: #{jvp__.11} parent=5 // pred_check_branch
      %173 = sbr.rel (%p170) target = $region32
    $region31: #{jvp__.11} parent=5 // pred_region
      %s174 = ssub.s32 %s16, 1
      %p175 = scmp.lt.s32.totalorder %s21, 2
      %s176 = scalar_select %p175, %s21, 2
      %s177 = smul.addr %s176, 8
      %s178 = scalar_lea.vmem %s1, %s177
      %p179 = pneg %p42
      %p180 = pneg %p39
      %s181 = sld [smem:[#allocation3 + %s21]]
      %p182 = scmp.lt.s32.totalorder %s181, 1
      %s183 = scalar_select %p182, %s181, 1
      %s184 = smul.addr %s183, 16
      %s185 = smul.addr %s184, 8
      %s186 = scalar_lea.vmem %s2, %s185
      %p187 = pneg %p70
      %p188 = pneg %p67
      %s189 = sld [smem:[#allocation3 + %s21]]
      %p190 = scmp.lt.s32.totalorder %s189, 1
      %s191 = scalar_select %p190, %s189, 1
      %s192 = scalar_lea.vmem %s3, %s191
      %p193 = pneg %p98
      %p194 = pneg %p95
      %p195 = pneg %p124
      %p196 = pneg %p121
      %p197 = scmp.lt.s32.totalorder %s21, 2
      %s198 = scalar_select %p197, %s21, 2
      %s199 = smul.addr %s198, 8
      %s200 = scalar_lea.vmem %s4, %s199
      %p201 = scmp.lt.s32.totalorder %s21, 2
      %s202 = scalar_select %p201, %s21, 2
      %s203 = smul.addr %s202, 8
      %s204 = scalar_lea.vmem %s1, %s203
      %s205 = sld [smem:[#allocation3 + %s21]]
      %p206 = scmp.lt.s32.totalorder %s205, 1
      %s207 = scalar_select %p206, %s205, 1
      %s208 = smul.addr %s207, 16
      %s209 = smul.addr %s208, 8
      %s210 = scalar_lea.vmem %s2, %s209
      %s211 = sld [smem:[#allocation3 + %s21]]
      %s212 = sld [smem:[#allocation3 + %s21]]
      %p213 = scmp.lt.s32.totalorder %s212, 1
      %s214 = scalar_select %p213, %s212, 1
      %s215 = scalar_lea.vmem %s3, %s214
      %s216 = sld [smem:[#allocation3 + %s21]]
      %p217 = scmp.lt.s32.totalorder %s21, 2
      %s218 = scalar_select %p217, %s21, 2
      %s219 = smul.addr %s218, 8
      %s220 = scalar_lea.vmem %s4, %s219
      %v221 = vld [vmem:[%s204] sm:$0xff]
      %v222 = vld [vmem:[%s210] sm:$0xff]
      %v223 = vld [vmem:[%s210 + $0x8] sm:$0xff]
      %v224 = vld [vmem:[%s210 + $0x10] sm:$0xff]
      %v225 = vld [vmem:[%s210 + $0x18] sm:$0xff]
      %v226 = vld [vmem:[%s210 + $0x20] sm:$0xff]
      %v227 = vld [vmem:[%s210 + $0x28] sm:$0xff]
      %v228 = vld [vmem:[%s210 + $0x30] sm:$0xff]
      %v229 = vld [vmem:[%s210 + $0x38] sm:$0xff]
      %v230 = vld [vmem:[%s210 + $0x40] sm:$0xff]
      %v231 = vld [vmem:[%s210 + $0x48] sm:$0xff]
      %v232 = vld [vmem:[%s210 + $0x50] sm:$0xff]
      %v233 = vld [vmem:[%s210 + $0x58] sm:$0xff]
      %v234 = vld [vmem:[%s210 + $0x60] sm:$0xff]
      %v235 = vld [vmem:[%s210 + $0x68] sm:$0xff]
      %v236 = vld [vmem:[%s210 + $0x70] sm:$0xff]
      %v237 = vld [vmem:[%s210 + $0x78] sm:$0xff]
      %v238 = vld [vmem:[%s215] sm:$0x1]
      %v240 = vlaneseq
      %v241 = vshrl.u32 %v240, 7
      %v242 = vsub.s32 0, %v241
      %v243 = vrot.slane %v238, %v242
      %245 = vmatprep.subr.mxu0 0.0
      %246 = vmatpush1.msra.mxu0 %v237
      %247 = vmatprep.subr.mxu0 0.0
      %248 = vmatpush1.msra.mxu0 %v236
      %249 = vmatprep.subr.mxu0 0.0
      %250 = vmatpush1.msra.mxu0 %v235
      %251 = vmatprep.subr.mxu0 0.0
      %252 = vmatpush1.msra.mxu0 %v234
      %253 = vmatprep.subr.mxu0 0.0
      %254 = vmatpush1.msra.mxu0 %v233
      %255 = vmatprep.subr.mxu0 0.0
      %256 = vmatpush1.msra.mxu0 %v232
      %257 = vmatprep.subr.mxu0 0.0
      %258 = vmatpush1.msra.mxu0 %v231
      %259 = vmatprep.subr.mxu0 0.0
      %260 = vmatpush1.msra.mxu0 %v230
      %261 = vmatprep.subr.mxu0 0.0
      %262 = vmatpush1.msra.mxu0 %v229
      %263 = vmatprep.subr.mxu0 0.0
      %264 = vmatpush1.msra.mxu0 %v228
      %265 = vmatprep.subr.mxu0 0.0
      %266 = vmatpush1.msra.mxu0 %v227
      %267 = vmatprep.subr.mxu0 0.0
      %268 = vmatpush1.msra.mxu0 %v226
      %269 = vmatprep.subr.mxu0 0.0
      %270 = vmatpush1.msra.mxu0 %v225
      %271 = vmatprep.subr.mxu0 0.0
      %272 = vmatpush1.msra.mxu0 %v224
      %273 = vmatprep.subr.mxu0 0.0
      %274 = vmatpush1.msra.mxu0 %v223
      %275 = vmatprep.subr.mxu0 0.0
      %276 = vmatpush1.msra.mxu0 %v222
      %277 = vmatprep.subr.mxu0 0.0
      %278 = vmatpush2.msra.mxu0 0.0
      %279 = vmatprep.subr.mxu0 0.0
      %280 = vmatpush2.msra.mxu0 0.0
      %281 = vmatprep.subr.mxu0 0.0
      %282 = vmatpush2.msra.mxu0 0.0
      %283 = vmatprep.subr.mxu0 0.0
      %284 = vmatpush2.msra.mxu0 0.0
      %285 = vmatprep.subr.mxu0 0.0
      %286 = vmatpush2.msra.mxu0 0.0
      %287 = vmatprep.subr.mxu0 0.0
      %288 = vmatpush2.msra.mxu0 0.0
      %289 = vmatprep.subr.mxu0 0.0
      %290 = vmatpush2.msra.mxu0 0.0
      %291 = vmatprep.subr.mxu0 0.0
      %292 = vmatpush2.msra.mxu0 0.0
      %293 = vmatprep.subr.mxu0 0.0
      %294 = vmatpush2.msra.mxu0 0.0
      %295 = vmatprep.subr.mxu0 0.0
      %296 = vmatpush2.msra.mxu0 0.0
      %297 = vmatprep.subr.mxu0 0.0
      %298 = vmatpush2.msra.mxu0 0.0
      %299 = vmatprep.subr.mxu0 0.0
      %300 = vmatpush2.msra.mxu0 0.0
      %301 = vmatprep.subr.mxu0 0.0
      %302 = vmatpush2.msra.mxu0 0.0
      %303 = vmatprep.subr.mxu0 0.0
      %304 = vmatpush2.msra.mxu0 0.0
      %305 = vmatprep.subr.mxu0 0.0
      %306 = vmatpush2.msra.mxu0 0.0
      %307 = vmatprep.subr.mxu0 0.0
      %308 = vmatpush2.msra.mxu0 0.0
      %309 = vmatprep.mubr.f32.mxu0 0.0
      %310 = vmatmul.mubr.f32.gmra.mxu0 %v221
      %v311 = vpop.f32.mrf.mxu0
      %v312 = vadd.f32 %v243, %v311
      %v313 = vpop.f32.mrf.mxu0
      %314 = vdwg.mxu0
      %vm315 = vcmask 56320
      %316 = vst.msk [vmem:[%s220] sm:$0xff] %vm315, %v312
      %p317 = scmp.lt.s32.totalorder %s21, 2
      %s318 = scalar_select %p317, %s21, 2
      %s319 = smul.addr %s318, 8
      %s320 = scalar_lea.vmem %s4, %s319
      // Predicated region
      $region33: #{jvp__.11} parent=31 // pred_check
        %p321 = pneg %p121
      $region34: #{jvp__.11} parent=31 // pred_check_branch
        %323 = sbr.rel (%p321) target = $region36
      $region35: #{jvp__.11} parent=31 // pred_region
        _
      $region36: #{jvp__.11} parent=31 // pred_fallthru
        _
    $region32: #{jvp__.11} parent=5 // pred_fallthru
      _
    %p324 = scmp.le.s32.totalorder 2, %s16
    // Predicated region
    $region37: #{jvp__.11} parent=5 // pred_check
      %p325 = pneg %p324
    $region38: #{jvp__.11} parent=5 // pred_check_branch
      %327 = sbr.rel (%p325) target = $region40
    $region39: #{jvp__.11} parent=5 // pred_region
      %s328 = ssub.s32 %s16, 2
      // Predicated region
      $region41: #{jvp__.11} parent=39 // pred_check
        %p329 = pneg %p127
      $region42: #{jvp__.11} parent=39 // pred_check_branch
        %331 = sbr.rel (%p329) target = $region44
      $region43: #{jvp__.11} parent=39 // pred_region
        %p332 = scmp.lt.s32.totalorder %s22, 2
        %s333 = scalar_select %p332, %s22, 2
        %s334 = smul.addr %s333, 8
        %s335 = scalar_lea.vmem %s4, %s334
      $region44: #{jvp__.11} parent=39 // pred_fallthru
        _
    $region40: #{jvp__.11} parent=5 // pred_fallthru
      _
  $region6: #{jvp__.11} parent=0 // loop_footer
    %s20 = sadd.s32 1, %s16
  $region7: #{jvp__.11} parent=0 // loop_footer_branch
    %15 = sbr.rel target = $region3
  $region8: #{jvp__.11} parent=0 // loop_exit
    _

// kernel: jvp__.10
$region0: #{jvp__.10}
  #allocation0 [shape = 'u32[]', space=smem, size = 0x4, offset = 0x4, fixed_abs, tag = 'smem constant byte address 0x4 - core index']
  #allocation1 [shape = 'u32[144,128]{1,0:T(1,128)}', space=vmem, size = 0x12000, scoped, tag = 'internal scratch']
  #allocation2 [shape = 's32[1]{0}', space=sflag, size = 0x4, scoped, tag = 'scoped memory for jvp__.10']
  #allocation3 [shape = 'u8[512]{0}', space=smem, size = 0x200, scoped, tag = 'prefetched SMEM operand 0']
  %s0 = inlined_call_operand.vmem [shape: s32[3], index: 0, kind: input, shape index: {}]
  %s1 = inlined_call_operand.vmem [shape: f32[24,128], index: 1, kind: input, shape index: {}]
  %s2 = inlined_call_operand.vmem [shape: f32[2,128,128], index: 2, kind: input, shape index: {}]
  %s3 = inlined_call_operand.vmem [shape: f32[2,1,128], index: 3, kind: input, shape index: {}]
  %s4 = inlined_call_operand.vmem [shape: f32[2,1,128], index: 4, kind: input, shape index: {}]
  %s5 = inlined_call_operand.vmem [shape: f32[2,1,128], index: 5, kind: input, shape index: {}]
  %s6 = inlined_call_operand.vmem [shape: f32[2,1,128], index: 6, kind: input, shape index: {}]
  %s7 = inlined_call_operand.vmem [shape: f32[2,1,128], index: 7, kind: input, shape index: {}]
  %s8 = inlined_call_operand.vmem [shape: f32[24,128], index: 8, kind: output, shape index: {0}]
  %s9 = inlined_call_operand.vmem [shape: f32[24,128], index: 9, kind: output, shape index: {1}]
  %10 = xla_tuple %s8, %s9
  %s11 = sld [smem:[#allocation0]]
  $region69: #{jvp__.10} parent=0
    _
  %s13 = ssub.s32 1, %s11
  %s14 = scalar_select 0, %s13, %s11
  %s15 = sshll.u32 %s0, 4
  %s16 = int_to_ptr.vmem [resolvable:$true] %s15
  %18 = dma.vmem_to_smem %s16, 16, [#allocation3], [#allocation2]
  %19 = dma.done [#allocation2], 16
  %20 = sfence
  loop: start=0, step=1, limit=5
  $region2: #{jvp__.10} parent=0 // loop_pre_header
    _
  $region3: #{jvp__.10} parent=0 // loop_header
    %s22 = sphi 0, %s26
    %p23 = scmp.ge.s32.totalorder %s22, 5
    %s32 = sphi 0, %s34
    %s35 = sphi 0, %s32
    %s36 = sphi 0, %s35
    %s52 = sphi 0, %s36
    %s60 = sphi 0, %s62
    %s63 = sphi 0, %s60
    %s64 = sphi 0, %s63
    %s80 = sphi 0, %s64
    %s88 = sphi 0, %s90
    %s91 = sphi 0, %s88
    %s92 = sphi 0, %s91
    %s108 = sphi 0, %s92
    %s116 = sphi 0, %s118
    %s119 = sphi 0, %s116
    %s120 = sphi 0, %s119
    %s136 = sphi 0, %s120
    %s144 = sphi 0, %s146
    %s147 = sphi 0, %s144
    %s148 = sphi 0, %s147
    %s164 = sphi 0, %s148
    %s172 = sphi 0, %s174
    %s175 = sphi 0, %s172
    %s176 = sphi 0, %s175
    %s192 = sphi 0, %s176
    %s200 = sphi 0, %s202
    %s203 = sphi 0, %s200
    %s204 = sphi 0, %s203
    %s220 = sphi 0, %s204
    %s226 = sphi 0, %s228
    %s229 = sphi 0, %s226
    %s230 = sphi 0, %s229
    %s246 = sphi 0, %s230
    %s252 = sphi 0, %s254
    %s255 = sphi 0, %s252
    %s256 = sphi 0, %s255
    %s272 = sphi 0, %s256
  $region4: #{jvp__.10} parent=0 // loop_header_branch
    %25 = sbr.rel (%p23) target = $region8
  $region5: #{jvp__.10} parent=0 // loop_body
    %s27 = ssub.s32 %s22, 1
    %s28 = ssub.s32 %s22, 2
    %s29 = sadd.s32 %s22, 1
    %s30 = ssub.s32 %s22, %s29
    %p31 = scmp.eq.s32.totalorder %s30, 0
    %s33 = sadd.s32 %s32, 1
    %s34 = scalar_select %p31, %s32, %s33
    %p37 = pneg %p31
    %p38 = scmp.eq.s32.totalorder %s22, 2
    %p39 = por %p37, %p38
    %p40 = scmp.ne.s32.totalorder %s32, %s35
    %p41 = scmp.eq.s32.totalorder %s22, 0
    %p42 = por %p40, %p41
    %p43 = scmp.ne.s32.totalorder %s32, %s35
    %p44 = scmp.eq.s32.totalorder %s27, 2
    %p45 = por %p43, %p44
    %p46 = scmp.ne.s32.totalorder %s35, %s36
    %p47 = scmp.eq.s32.totalorder %s27, 0
    %p48 = por %p46, %p47
    %p49 = scmp.ne.s32.totalorder %s35, %s36
    %p50 = scmp.eq.s32.totalorder %s28, 2
    %p51 = por %p49, %p50
    %p53 = scmp.ne.s32.totalorder %s36, %s52
    %p54 = scmp.eq.s32.totalorder %s28, 0
    %p55 = por %p53, %p54
    %s56 = sld [smem:[#allocation3 + %s22]]
    %s57 = sld [smem:[#allocation3 + %s29]]
    %s58 = ssub.s32 %s56, %s57
    %p59 = scmp.eq.s32.totalorder %s58, 0
    %s61 = sadd.s32 %s60, 1
    %s62 = scalar_select %p59, %s60, %s61
    %p65 = pneg %p59
    %p66 = scmp.eq.s32.totalorder %s22, 2
    %p67 = por %p65, %p66
    %p68 = scmp.ne.s32.totalorder %s60, %s63
    %p69 = scmp.eq.s32.totalorder %s22, 0
    %p70 = por %p68, %p69
    %p71 = scmp.ne.s32.totalorder %s60, %s63
    %p72 = scmp.eq.s32.totalorder %s27, 2
    %p73 = por %p71, %p72
    %p74 = scmp.ne.s32.totalorder %s63, %s64
    %p75 = scmp.eq.s32.totalorder %s27, 0
    %p76 = por %p74, %p75
    %p77 = scmp.ne.s32.totalorder %s63, %s64
    %p78 = scmp.eq.s32.totalorder %s28, 2
    %p79 = por %p77, %p78
    %p81 = scmp.ne.s32.totalorder %s64, %s80
    %p82 = scmp.eq.s32.totalorder %s28, 0
    %p83 = por %p81, %p82
    %s84 = sld [smem:[#allocation3 + %s22]]
    %s85 = sld [smem:[#allocation3 + %s29]]
    %s86 = ssub.s32 %s84, %s85
    %p87 = scmp.eq.s32.totalorder %s86, 0
    %s89 = sadd.s32 %s88, 1
    %s90 = scalar_select %p87, %s88, %s89
    %p93 = pneg %p87
    %p94 = scmp.eq.s32.totalorder %s22, 2
    %p95 = por %p93, %p94
    %p96 = scmp.ne.s32.totalorder %s88, %s91
    %p97 = scmp.eq.s32.totalorder %s22, 0
    %p98 = por %p96, %p97
    %p99 = scmp.ne.s32.totalorder %s88, %s91
    %p100 = scmp.eq.s32.totalorder %s27, 2
    %p101 = por %p99, %p100
    %p102 = scmp.ne.s32.totalorder %s91, %s92
    %p103 = scmp.eq.s32.totalorder %s27, 0
    %p104 = por %p102, %p103
    %p105 = scmp.ne.s32.totalorder %s91, %s92
    %p106 = scmp.eq.s32.totalorder %s28, 2
    %p107 = por %p105, %p106
    %p109 = scmp.ne.s32.totalorder %s92, %s108
    %p110 = scmp.eq.s32.totalorder %s28, 0
    %p111 = por %p109, %p110
    %s112 = sld [smem:[#allocation3 + %s22]]
    %s113 = sld [smem:[#allocation3 + %s29]]
    %s114 = ssub.s32 %s112, %s113
    %p115 = scmp.eq.s32.totalorder %s114, 0
    %s117 = sadd.s32 %s116, 1
    %s118 = scalar_select %p115, %s116, %s117
    %p121 = pneg %p115
    %p122 = scmp.eq.s32.totalorder %s22, 2
    %p123 = por %p121, %p122
    %p124 = scmp.ne.s32.totalorder %s116, %s119
    %p125 = scmp.eq.s32.totalorder %s22, 0
    %p126 = por %p124, %p125
    %p127 = scmp.ne.s32.totalorder %s116, %s119
    %p128 = scmp.eq.s32.totalorder %s27, 2
    %p129 = por %p127, %p128
    %p130 = scmp.ne.s32.totalorder %s119, %s120
    %p131 = scmp.eq.s32.totalorder %s27, 0
    %p132 = por %p130, %p131
    %p133 = scmp.ne.s32.totalorder %s119, %s120
    %p134 = scmp.eq.s32.totalorder %s28, 2
    %p135 = por %p133, %p134
    %p137 = scmp.ne.s32.totalorder %s120, %s136
    %p138 = scmp.eq.s32.totalorder %s28, 0
    %p139 = por %p137, %p138
    %s140 = sld [smem:[#allocation3 + %s22]]
    %s141 = sld [smem:[#allocation3 + %s29]]
    %s142 = ssub.s32 %s140, %s141
    %p143 = scmp.eq.s32.totalorder %s142, 0
    %s145 = sadd.s32 %s144, 1
    %s146 = scalar_select %p143, %s144, %s145
    %p149 = pneg %p143
    %p150 = scmp.eq.s32.totalorder %s22, 2
    %p151 = por %p149, %p150
    %p152 = scmp.ne.s32.totalorder %s144, %s147
    %p153 = scmp.eq.s32.totalorder %s22, 0
    %p154 = por %p152, %p153
    %p155 = scmp.ne.s32.totalorder %s144, %s147
    %p156 = scmp.eq.s32.totalorder %s27, 2
    %p157 = por %p155, %p156
    %p158 = scmp.ne.s32.totalorder %s147, %s148
    %p159 = scmp.eq.s32.totalorder %s27, 0
    %p160 = por %p158, %p159
    %p161 = scmp.ne.s32.totalorder %s147, %s148
    %p162 = scmp.eq.s32.totalorder %s28, 2
    %p163 = por %p161, %p162
    %p165 = scmp.ne.s32.totalorder %s148, %s164
    %p166 = scmp.eq.s32.totalorder %s28, 0
    %p167 = por %p165, %p166
    %s168 = sld [smem:[#allocation3 + %s22]]
    %s169 = sld [smem:[#allocation3 + %s29]]
    %s170 = ssub.s32 %s168, %s169
    %p171 = scmp.eq.s32.totalorder %s170, 0
    %s173 = sadd.s32 %s172, 1
    %s174 = scalar_select %p171, %s172, %s173
    %p177 = pneg %p171
    %p178 = scmp.eq.s32.totalorder %s22, 2
    %p179 = por %p177, %p178
    %p180 = scmp.ne.s32.totalorder %s172, %s175
    %p181 = scmp.eq.s32.totalorder %s22, 0
    %p182 = por %p180, %p181
    %p183 = scmp.ne.s32.totalorder %s172, %s175
    %p184 = scmp.eq.s32.totalorder %s27, 2
    %p185 = por %p183, %p184
    %p186 = scmp.ne.s32.totalorder %s175, %s176
    %p187 = scmp.eq.s32.totalorder %s27, 0
    %p188 = por %p186, %p187
    %p189 = scmp.ne.s32.totalorder %s175, %s176
    %p190 = scmp.eq.s32.totalorder %s28, 2
    %p191 = por %p189, %p190
    %p193 = scmp.ne.s32.totalorder %s176, %s192
    %p194 = scmp.eq.s32.totalorder %s28, 0
    %p195 = por %p193, %p194
    %s196 = sld [smem:[#allocation3 + %s22]]
    %s197 = sld [smem:[#allocation3 + %s29]]
    %s198 = ssub.s32 %s196, %s197
    %p199 = scmp.eq.s32.totalorder %s198, 0
    %s201 = sadd.s32 %s200, 1
    %s202 = scalar_select %p199, %s200, %s201
    %p205 = pneg %p199
    %p206 = scmp.eq.s32.totalorder %s22, 2
    %p207 = por %p205, %p206
    %p208 = scmp.ne.s32.totalorder %s200, %s203
    %p209 = scmp.eq.s32.totalorder %s22, 0
    %p210 = por %p208, %p209
    %p211 = scmp.ne.s32.totalorder %s200, %s203
    %p212 = scmp.eq.s32.totalorder %s27, 2
    %p213 = por %p211, %p212
    %p214 = scmp.ne.s32.totalorder %s203, %s204
    %p215 = scmp.eq.s32.totalorder %s27, 0
    %p216 = por %p214, %p215
    %p217 = scmp.ne.s32.totalorder %s203, %s204
    %p218 = scmp.eq.s32.totalorder %s28, 2
    %p219 = por %p217, %p218
    %p221 = scmp.ne.s32.totalorder %s204, %s220
    %p222 = scmp.eq.s32.totalorder %s28, 0
    %p223 = por %p221, %p222
    %s224 = ssub.s32 %s22, %s29
    %p225 = scmp.eq.s32.totalorder %s224, 0
    %s227 = sadd.s32 %s226, 1
    %s228 = scalar_select %p225, %s226, %s227
    %p231 = pneg %p225
    %p232 = scmp.eq.s32.totalorder %s22, 2
    %p233 = por %p231, %p232
    %p234 = scmp.ne.s32.totalorder %s226, %s229
    %p235 = scmp.eq.s32.totalorder %s22, 0
    %p236 = por %p234, %p235
    %p237 = scmp.ne.s32.totalorder %s226, %s229
    %p238 = scmp.eq.s32.totalorder %s27, 2
    %p239 = por %p237, %p238
    %p240 = scmp.ne.s32.totalorder %s229, %s230
    %p241 = scmp.eq.s32.totalorder %s27, 0
    %p242 = por %p240, %p241
    %p243 = scmp.ne.s32.totalorder %s229, %s230
    %p244 = scmp.eq.s32.totalorder %s28, 2
    %p245 = por %p243, %p244
    %p247 = scmp.ne.s32.totalorder %s230, %s246
    %p248 = scmp.eq.s32.totalorder %s28, 0
    %p249 = por %p247, %p248
    %s250 = ssub.s32 %s22, %s29
    %p251 = scmp.eq.s32.totalorder %s250, 0
    %s253 = sadd.s32 %s252, 1
    %s254 = scalar_select %p251, %s252, %s253
    %p257 = pneg %p251
    %p258 = scmp.eq.s32.totalorder %s22, 2
    %p259 = por %p257, %p258
    %p260 = scmp.ne.s32.totalorder %s252, %s255
    %p261 = scmp.eq.s32.totalorder %s22, 0
    %p262 = por %p260, %p261
    %p263 = scmp.ne.s32.totalorder %s252, %s255
    %p264 = scmp.eq.s32.totalorder %s27, 2
    %p265 = por %p263, %p264
    %p266 = scmp.ne.s32.totalorder %s255, %s256
    %p267 = scmp.eq.s32.totalorder %s27, 0
    %p268 = por %p266, %p267
    %p269 = scmp.ne.s32.totalorder %s255, %s256
    %p270 = scmp.eq.s32.totalorder %s28, 2
    %p271 = por %p269, %p270
    %p273 = scmp.ne.s32.totalorder %s256, %s272
    %p274 = scmp.eq.s32.totalorder %s28, 0
    %p275 = por %p273, %p274
    %p276 = scmp.le.s32.totalorder 1, %s22
    %p277 = scmp.lt.s32.totalorder %s22, 4
    %p278 = pnand %p276, %p277
    %p279 = pneg %p278
    // Predicated region
    $region9: #{jvp__.10} parent=5 // pred_check
      _
    $region10: #{jvp__.10} parent=5 // pred_check_branch
      %281 = sbr.rel (%p278) target = $region12
    $region11: #{jvp__.10} parent=5 // pred_region
      %s282 = ssub.s32 %s22, 1
    $region12: #{jvp__.10} parent=5 // pred_fallthru
      _
    %p283 = scmp.lt.s32.totalorder %s22, 3
    // Predicated region
    $region13: #{jvp__.10} parent=5 // pred_check
      %p284 = pneg %p283
    $region14: #{jvp__.10} parent=5 // pred_check_branch
      %286 = sbr.rel (%p284) target = $region16
    $region15: #{jvp__.10} parent=5 // pred_region
      // Predicated region
      $region17: #{jvp__.10} parent=15 // pred_check
        %p287 = pneg %p42
      $region18: #{jvp__.10} parent=15 // pred_check_branch
        %289 = sbr.rel (%p287) target = $region20
      $region19: #{jvp__.10} parent=15 // pred_region
        %p290 = scmp.lt.s32.totalorder %s22, 2
        %s291 = scalar_select %p290, %s22, 2
        %s292 = smul.addr %s291, 8
        %s293 = scalar_lea.vmem %s1, %s292
      $region20: #{jvp__.10} parent=15 // pred_fallthru
        _
      // Predicated region
      $region21: #{jvp__.10} parent=15 // pred_check
        %p294 = pneg %p70
      $region22: #{jvp__.10} parent=15 // pred_check_branch
        %296 = sbr.rel (%p294) target = $region24
      $region23: #{jvp__.10} parent=15 // pred_region
        %s297 = sld [smem:[#allocation3 + %s22]]
        %p298 = scmp.lt.s32.totalorder %s297, 1
        %s299 = scalar_select %p298, %s297, 1
        %s300 = smul.addr %s299, 16
        %s301 = smul.addr %s300, 8
        %s302 = scalar_lea.vmem %s2, %s301
        %s303 = sld [smem:[#allocation3 + %s22]]
      $region24: #{jvp__.10} parent=15 // pred_fallthru
        _
      // Predicated region
      $region25: #{jvp__.10} parent=15 // pred_check
        %p304 = pneg %p98
      $region26: #{jvp__.10} parent=15 // pred_check_branch
        %306 = sbr.rel (%p304) target = $region28
      $region27: #{jvp__.10} parent=15 // pred_region
        %s307 = sld [smem:[#allocation3 + %s22]]
        %p308 = scmp.lt.s32.totalorder %s307, 1
        %s309 = scalar_select %p308, %s307, 1
        %s310 = scalar_lea.vmem %s3, %s309
        %s311 = sld [smem:[#allocation3 + %s22]]
      $region28: #{jvp__.10} parent=15 // pred_fallthru
        _
      // Predicated region
      $region29: #{jvp__.10} parent=15 // pred_check
        %p312 = pneg %p126
      $region30: #{jvp__.10} parent=15 // pred_check_branch
        %314 = sbr.rel (%p312) target = $region32
      $region31: #{jvp__.10} parent=15 // pred_region
        %s315 = sld [smem:[#allocation3 + %s22]]
        %p316 = scmp.lt.s32.totalorder %s315, 1
        %s317 = scalar_select %p316, %s315, 1
        %s318 = scalar_lea.vmem %s4, %s317
        %s319 = sld [smem:[#allocation3 + %s22]]
      $region32: #{jvp__.10} parent=15 // pred_fallthru
        _
      // Predicated region
      $region33: #{jvp__.10} parent=15 // pred_check
        %p320 = pneg %p154
      $region34: #{jvp__.10} parent=15 // pred_check_branch
        %322 = sbr.rel (%p320) target = $region36
      $region35: #{jvp__.10} parent=15 // pred_region
        %s323 = sld [smem:[#allocation3 + %s22]]
        %p324 = scmp.lt.s32.totalorder %s323, 1
        %s325 = scalar_select %p324, %s323, 1
        %s326 = scalar_lea.vmem %s5, %s325
        %s327 = sld [smem:[#allocation3 + %s22]]
      $region36: #{jvp__.10} parent=15 // pred_fallthru
        _
      // Predicated region
      $region37: #{jvp__.10} parent=15 // pred_check
        %p328 = pneg %p182
      $region38: #{jvp__.10} parent=15 // pred_check_branch
        %330 = sbr.rel (%p328) target = $region40
      $region39: #{jvp__.10} parent=15 // pred_region
        %s331 = sld [smem:[#allocation3 + %s22]]
        %p332 = scmp.lt.s32.totalorder %s331, 1
        %s333 = scalar_select %p332, %s331, 1
        %s334 = scalar_lea.vmem %s6, %s333
        %s335 = sld [smem:[#allocation3 + %s22]]
      $region40: #{jvp__.10} parent=15 // pred_fallthru
        _
      // Predicated region
      $region41: #{jvp__.10} parent=15 // pred_check
        %p336 = pneg %p210
      $region42: #{jvp__.10} parent=15 // pred_check_branch
        %338 = sbr.rel (%p336) target = $region44
      $region43: #{jvp__.10} parent=15 // pred_region
        %s339 = sld [smem:[#allocation3 + %s22]]
        %p340 = scmp.lt.s32.totalorder %s339, 1
        %s341 = scalar_select %p340, %s339, 1
        %s342 = scalar_lea.vmem %s7, %s341
        %s343 = sld [smem:[#allocation3 + %s22]]
      $region44: #{jvp__.10} parent=15 // pred_fallthru
        _
    $region16: #{jvp__.10} parent=5 // pred_fallthru
      _
    %p344 = scmp.le.s32.totalorder 1, %s22
    %p345 = scmp.lt.s32.totalorder %s22, 4
    %p346 = pnand %p344, %p345
    %p347 = pneg %p346
    // Predicated region
    $region45: #{jvp__.10} parent=5 // pred_check
      _
    $region46: #{jvp__.10} parent=5 // pred_check_branch
      %349 = sbr.rel (%p346) target = $region48
    $region47: #{jvp__.10} parent=5 // pred_region
      %s350 = ssub.s32 %s22, 1
      %p351 = scmp.lt.s32.totalorder %s27, 2
      %s352 = scalar_select %p351, %s27, 2
      %s353 = smul.addr %s352, 8
      %s354 = scalar_lea.vmem %s1, %s353
      %p355 = pneg %p48
      %p356 = pneg %p45
      %s357 = sld [smem:[#allocation3 + %s27]]
      %p358 = scmp.lt.s32.totalorder %s357, 1
      %s359 = scalar_select %p358, %s357, 1
      %s360 = smul.addr %s359, 16
      %s361 = smul.addr %s360, 8
      %s362 = scalar_lea.vmem %s2, %s361
      %p363 = pneg %p76
      %p364 = pneg %p73
      %s365 = sld [smem:[#allocation3 + %s27]]
      %p366 = scmp.lt.s32.totalorder %s365, 1
      %s367 = scalar_select %p366, %s365, 1
      %s368 = scalar_lea.vmem %s3, %s367
      %p369 = pneg %p104
      %p370 = pneg %p101
      %s371 = sld [smem:[#allocation3 + %s27]]
      %p372 = scmp.lt.s32.totalorder %s371, 1
      %s373 = scalar_select %p372, %s371, 1
      %s374 = scalar_lea.vmem %s4, %s373
      %p375 = pneg %p132
      %p376 = pneg %p129
      %s377 = sld [smem:[#allocation3 + %s27]]
      %p378 = scmp.lt.s32.totalorder %s377, 1
      %s379 = scalar_select %p378, %s377, 1
      %s380 = scalar_lea.vmem %s5, %s379
      %p381 = pneg %p160
      %p382 = pneg %p157
      %s383 = sld [smem:[#allocation3 + %s27]]
      %p384 = scmp.lt.s32.totalorder %s383, 1
      %s385 = scalar_select %p384, %s383, 1
      %s386 = scalar_lea.vmem %s6, %s385
      %p387 = pneg %p188
      %p388 = pneg %p185
      %s389 = sld [smem:[#allocation3 + %s27]]
      %p390 = scmp.lt.s32.totalorder %s389, 1
      %s391 = scalar_select %p390, %s389, 1
      %s392 = scalar_lea.vmem %s7, %s391
      %p393 = pneg %p216
      %p394 = pneg %p213
      %p395 = pneg %p242
      %p396 = pneg %p239
      %p397 = scmp.lt.s32.totalorder %s27, 2
      %s398 = scalar_select %p397, %s27, 2
      %s399 = smul.addr %s398, 8
      %s400 = scalar_lea.vmem %s8, %s399
      %p401 = pneg %p268
      %p402 = pneg %p265
      %p403 = scmp.lt.s32.totalorder %s27, 2
      %s404 = scalar_select %p403, %s27, 2
      %s405 = smul.addr %s404, 8
      %s406 = scalar_lea.vmem %s9, %s405
      %p407 = scmp.lt.s32.totalorder %s27, 2
      %s408 = scalar_select %p407, %s27, 2
      %s409 = smul.addr %s408, 8
      %s410 = scalar_lea.vmem %s1, %s409
      %s411 = sld [smem:[#allocation3 + %s27]]
      %p412 = scmp.lt.s32.totalorder %s411, 1
      %s413 = scalar_select %p412, %s411, 1
      %s414 = smul.addr %s413, 16
      %s415 = smul.addr %s414, 8
      %s416 = scalar_lea.vmem %s2, %s415
      %s417 = sld [smem:[#allocation3 + %s27]]
      %s418 = sld [smem:[#allocation3 + %s27]]
      %p419 = scmp.lt.s32.totalorder %s418, 1
      %s420 = scalar_select %p419, %s418, 1
      %s421 = scalar_lea.vmem %s3, %s420
      %s422 = sld [smem:[#allocation3 + %s27]]
      %s423 = sld [smem:[#allocation3 + %s27]]
      %p424 = scmp.lt.s32.totalorder %s423, 1
      %s425 = scalar_select %p424, %s423, 1
      %s426 = scalar_lea.vmem %s4, %s425
      %s427 = sld [smem:[#allocation3 + %s27]]
      %s428 = sld [smem:[#allocation3 + %s27]]
      %p429 = scmp.lt.s32.totalorder %s428, 1
      %s430 = scalar_select %p429, %s428, 1
      %s431 = scalar_lea.vmem %s5, %s430
      %s432 = sld [smem:[#allocation3 + %s27]]
      %s433 = sld [smem:[#allocation3 + %s27]]
      %p434 = scmp.lt.s32.totalorder %s433, 1
      %s435 = scalar_select %p434, %s433, 1
      %s436 = scalar_lea.vmem %s6, %s435
      %s437 = sld [smem:[#allocation3 + %s27]]
      %s438 = sld [smem:[#allocation3 + %s27]]
      %p439 = scmp.lt.s32.totalorder %s438, 1
      %s440 = scalar_select %p439, %s438, 1
      %s441 = scalar_lea.vmem %s7, %s440
      %s442 = sld [smem:[#allocation3 + %s27]]
      %p443 = scmp.lt.s32.totalorder %s27, 2
      %s444 = scalar_select %p443, %s27, 2
      %s445 = smul.addr %s444, 8
      %s446 = scalar_lea.vmem %s8, %s445
      %p447 = scmp.lt.s32.totalorder %s27, 2
      %s448 = scalar_select %p447, %s27, 2
      %s449 = smul.addr %s448, 8
      %s450 = scalar_lea.vmem %s9, %s449
      %v452 = vld [vmem:[%s410] sm:$0xff]
      %v453 = vpack.c.bf16 %v452, %v452
      %v454 = vld [vmem:[%s416] sm:$0xff]
      %v455 = vld [vmem:[%s416 + $0x8] sm:$0xff]
      %v456 = vld [vmem:[%s416 + $0x10] sm:$0xff]
      %v457 = vld [vmem:[%s416 + $0x18] sm:$0xff]
      %v458 = vld [vmem:[%s416 + $0x20] sm:$0xff]
      %v459 = vld [vmem:[%s416 + $0x28] sm:$0xff]
      %v460 = vld [vmem:[%s416 + $0x30] sm:$0xff]
      %v461 = vld [vmem:[%s416 + $0x38] sm:$0xff]
      %v462 = vld [vmem:[%s416 + $0x40] sm:$0xff]
      %v463 = vld [vmem:[%s416 + $0x48] sm:$0xff]
      %v464 = vld [vmem:[%s416 + $0x50] sm:$0xff]
      %v465 = vld [vmem:[%s416 + $0x58] sm:$0xff]
      %v466 = vld [vmem:[%s416 + $0x60] sm:$0xff]
      %v467 = vld [vmem:[%s416 + $0x68] sm:$0xff]
      %v468 = vld [vmem:[%s416 + $0x70] sm:$0xff]
      %v469 = vld [vmem:[%s416 + $0x78] sm:$0xff]
      %v470 = vpack.c.bf16 %v455, %v454
      %v471 = vpack.c.bf16 %v457, %v456
      %v472 = vpack.c.bf16 %v459, %v458
      %v473 = vpack.c.bf16 %v461, %v460
      %v474 = vpack.c.bf16 %v463, %v462
      %v475 = vpack.c.bf16 %v465, %v464
      %v476 = vpack.c.bf16 %v467, %v466
      %v477 = vpack.c.bf16 %v469, %v468
      %v478 = vld [vmem:[%s421] sm:$0x1]
      %v480 = vlaneseq
      %v481 = vshrl.u32 %v480, 7
      %v482 = vsub.s32 0, %v481
      %v483 = vrot.slane %v478, %v482
      %485 = vmatprep.subr.bf16.mxu0 0
      %486 = vmatpush1.bf16.msra.mxu0 %v477
      %487 = vmatprep.subr.bf16.mxu0 0
      %488 = vmatpush1.bf16.msra.mxu0 %v476
      %489 = vmatprep.subr.bf16.mxu0 0
      %490 = vmatpush1.bf16.msra.mxu0 %v475
      %491 = vmatprep.subr.bf16.mxu0 0
      %492 = vmatpush1.bf16.msra.mxu0 %v474
      %493 = vmatprep.subr.bf16.mxu0 0
      %494 = vmatpush1.bf16.msra.mxu0 %v473
      %495 = vmatprep.subr.bf16.mxu0 0
      %496 = vmatpush1.bf16.msra.mxu0 %v472
      %497 = vmatprep.subr.bf16.mxu0 0
      %498 = vmatpush1.bf16.msra.mxu0 %v471
      %499 = vmatprep.subr.bf16.mxu0 0
      %500 = vmatpush1.bf16.msra.mxu0 %v470
      %501 = vmatprep.subr.bf16.mxu0 0
      %502 = vmatpush2.bf16.msra.mxu0 0
      %503 = vmatprep.subr.bf16.mxu0 0
      %504 = vmatpush2.bf16.msra.mxu0 0
      %505 = vmatprep.subr.bf16.mxu0 0
      %506 = vmatpush2.bf16.msra.mxu0 0
      %507 = vmatprep.subr.bf16.mxu0 0
      %508 = vmatpush2.bf16.msra.mxu0 0
      %509 = vmatprep.subr.bf16.mxu0 0
      %510 = vmatpush2.bf16.msra.mxu0 0
      %511 = vmatprep.subr.bf16.mxu0 0
      %512 = vmatpush2.bf16.msra.mxu0 0
      %513 = vmatprep.subr.bf16.mxu0 0
      %514 = vmatpush2.bf16.msra.mxu0 0
      %515 = vmatprep.subr.bf16.mxu0 0
      %516 = vmatpush2.bf16.msra.mxu0 0
      %517 = vmatprep.mubr.bf16.mxu0 0
      %518 = vmatmul.mubr.bf16.gmra.mxu0 %v453
      %v519 = vpop.f32.mrf.mxu0
      %v520 = vadd.f32 %v483, %v519
      %v521 = vpop.f32.mrf.mxu0
      %v522 = vpop.f32.mrf.mxu0
      %v523 = vpop.f32.mrf.mxu0
      %524 = vdwg.mxu0
      %525 = vst [vmem:[%s450] sm:$0xff] %v520
      %526 = vadd.xlane.f32.xlu0 %v520
      %v527 = vpop.xlane.xlu0 %526
      %v528 = vrcp.pop 128.0
      %v529 = vmul.f32 %v527, %v528
      %v530 = vsub.f32 %v520, %v529
      %v531 = vmul.f32 %v530, %v530
      %532 = vadd.xlane.f32.xlu0 %v531
      %v533 = vpop.xlane.xlu0 %532
      %v534 = vmul.f32 %v533, %v528
      %v535 = vadd.f32 %v534, 1e-05
      %v536 = vrsqrt.pop %v535
      %v537 = vmul.f32 %v530, %v536
      %v538 = vld [vmem:[%s426] sm:$0x1]
      %v540 = vlaneseq
      %v541 = vshrl.u32 %v540, 7
      %v542 = vsub.s32 0, %v541
      %v543 = vrot.slane %v538, %v542
      %v545 = vmul.f32 %v537, %v543
      %v546 = vld [vmem:[%s431] sm:$0x1]
      %v548 = vlaneseq
      %v549 = vshrl.u32 %v548, 7
      %v550 = vsub.s32 0, %v549
      %v551 = vrot.slane %v546, %v550
      %v553 = vadd.f32 %v545, %v551
      %v554 = vld [vmem:[%s441] sm:$0x1]
      %v556 = vlaneseq
      %v557 = vshrl.u32 %v556, 7
      %v558 = vsub.s32 0, %v557
      %v559 = vrot.slane %v554, %v558
      %v561 = vmul.f32 %v553, %v559
      %v562 = vsub.f32 0.0, %v561
      %v563 = vmul.f32 %v562, 1.442695
      %v564 = vpow.pop %v563
      %v565 = vadd.f32 %v564, 1.0
      %v566 = vrcp.pop %v565
      %v567 = vld [vmem:[%s436] sm:$0x1]
      %v569 = vlaneseq
      %v570 = vshrl.u32 %v569, 7
      %v571 = vsub.s32 0, %v570
      %v572 = vrot.slane %v567, %v571
      %v574 = vmul.f32 %v572, %v561
      %v575 = vmul.f32 %v574, %v566
      %576 = vst [vmem:[%s446] sm:$0xff] %v575
      %p577 = scmp.lt.s32.totalorder %s27, 2
      %s578 = scalar_select %p577, %s27, 2
      %s579 = smul.addr %s578, 8
      %s580 = scalar_lea.vmem %s8, %s579
      %p581 = scmp.lt.s32.totalorder %s27, 2
      %s582 = scalar_select %p581, %s27, 2
      %s583 = smul.addr %s582, 8
      %s584 = scalar_lea.vmem %s9, %s583
      // Predicated region
      $region49: #{jvp__.10} parent=47 // pred_check
        %p585 = pneg %p239
      $region50: #{jvp__.10} parent=47 // pred_check_branch
        %587 = sbr.rel (%p585) target = $region52
      $region51: #{jvp__.10} parent=47 // pred_region
        _
      $region52: #{jvp__.10} parent=47 // pred_fallthru
        _
      // Predicated region
      $region53: #{jvp__.10} parent=47 // pred_check
        %p588 = pneg %p265
      $region54: #{jvp__.10} parent=47 // pred_check_branch
        %590 = sbr.rel (%p588) target = $region56
      $region55: #{jvp__.10} parent=47 // pred_region
        _
      $region56: #{jvp__.10} parent=47 // pred_fallthru
        _
    $region48: #{jvp__.10} parent=5 // pred_fallthru
      _
    %p591 = scmp.le.s32.totalorder 2, %s22
    // Predicated region
    $region57: #{jvp__.10} parent=5 // pred_check
      %p592 = pneg %p591
    $region58: #{jvp__.10} parent=5 // pred_check_branch
      %594 = sbr.rel (%p592) target = $region60
    $region59: #{jvp__.10} parent=5 // pred_region
      %s595 = ssub.s32 %s22, 2
      // Predicated region
      $region61: #{jvp__.10} parent=59 // pred_check
        %p596 = pneg %p245
      $region62: #{jvp__.10} parent=59 // pred_check_branch
        %598 = sbr.rel (%p596) target = $region64
      $region63: #{jvp__.10} parent=59 // pred_region
        %p599 = scmp.lt.s32.totalorder %s28, 2
        %s600 = scalar_select %p599, %s28, 2
        %s601 = smul.addr %s600, 8
        %s602 = scalar_lea.vmem %s8, %s601
      $region64: #{jvp__.10} parent=59 // pred_fallthru
        _
      // Predicated region
      $region65: #{jvp__.10} parent=59 // pred_check
        %p603 = pneg %p271
      $region66: #{jvp__.10} parent=59 // pred_check_branch
        %605 = sbr.rel (%p603) target = $region68
      $region67: #{jvp__.10} parent=59 // pred_region
        %p606 = scmp.lt.s32.totalorder %s28, 2
        %s607 = scalar_select %p606, %s28, 2
        %s608 = smul.addr %s607, 8
        %s609 = scalar_lea.vmem %s9, %s608
      $region68: #{jvp__.10} parent=59 // pred_fallthru
        _
    $region60: #{jvp__.10} parent=5 // pred_fallthru
      _
  $region6: #{jvp__.10} parent=0 // loop_footer
    %s26 = sadd.s32 1, %s22
  $region7: #{jvp__.10} parent=0 // loop_footer_branch
    %21 = sbr.rel target = $region3
  $region8: #{jvp__.10} parent=0 // loop_exit
    _

// kernel: jvp__.15
$region0: #{jvp__.15}
  #allocation0 [shape = 'u32[]', space=smem, size = 0x4, offset = 0x4, fixed_abs, tag = 'smem constant byte address 0x4 - core index']
  #allocation1 [shape = 'u32[144,128]{1,0:T(1,128)}', space=vmem, size = 0x12000, scoped, tag = 'internal scratch']
  #allocation2 [shape = 's32[1]{0}', space=sflag, size = 0x4, scoped, tag = 'scoped memory for jvp__.15']
  #allocation3 [shape = 'u8[512]{0}', space=smem, size = 0x200, scoped, tag = 'prefetched SMEM operand 0']
  %s0 = inlined_call_operand.vmem [shape: s32[3], index: 0, kind: input, shape index: {}]
  %s1 = inlined_call_operand.vmem [shape: f32[24,128], index: 1, kind: input, shape index: {}]
  %s2 = inlined_call_operand.vmem [shape: f32[2,128,1], index: 2, kind: input, shape index: {}]
  %s3 = inlined_call_operand.vmem [shape: f32[2,1,1], index: 3, kind: input, shape index: {}]
  %s4 = inlined_call_operand.vmem [shape: f32[24,1], index: 4, kind: output, shape index: {}]
  %s5 = sld [smem:[#allocation0]]
  $region45: #{jvp__.15} parent=0
    _
  %s7 = ssub.s32 1, %s5
  %s8 = scalar_select 0, %s7, %s5
  %s9 = sshll.u32 %s0, 4
  %s10 = int_to_ptr.vmem [resolvable:$true] %s9
  %12 = dma.vmem_to_smem %s10, 16, [#allocation3], [#allocation2]
  %13 = dma.done [#allocation2], 16
  %14 = sfence
  loop: start=0, step=1, limit=5
  $region2: #{jvp__.15} parent=0 // loop_pre_header
    _
  $region3: #{jvp__.15} parent=0 // loop_header
    %s16 = sphi 0, %s20
    %p17 = scmp.ge.s32.totalorder %s16, 5
    %s26 = sphi 0, %s28
    %s29 = sphi 0, %s26
    %s30 = sphi 0, %s29
    %s46 = sphi 0, %s30
    %s54 = sphi 0, %s56
    %s57 = sphi 0, %s54
    %s58 = sphi 0, %s57
    %s74 = sphi 0, %s58
    %s82 = sphi 0, %s84
    %s85 = sphi 0, %s82
    %s86 = sphi 0, %s85
    %s102 = sphi 0, %s86
    %s108 = sphi 0, %s110
    %s111 = sphi 0, %s108
    %s112 = sphi 0, %s111
    %s128 = sphi 0, %s112
  $region4: #{jvp__.15} parent=0 // loop_header_branch
    %19 = sbr.rel (%p17) target = $region8
  $region5: #{jvp__.15} parent=0 // loop_body
    %s21 = ssub.s32 %s16, 1
    %s22 = ssub.s32 %s16, 2
    %s23 = sadd.s32 %s16, 1
    %s24 = ssub.s32 %s16, %s23
    %p25 = scmp.eq.s32.totalorder %s24, 0
    %s27 = sadd.s32 %s26, 1
    %s28 = scalar_select %p25, %s26, %s27
    %p31 = pneg %p25
    %p32 = scmp.eq.s32.totalorder %s16, 2
    %p33 = por %p31, %p32
    %p34 = scmp.ne.s32.totalorder %s26, %s29
    %p35 = scmp.eq.s32.totalorder %s16, 0
    %p36 = por %p34, %p35
    %p37 = scmp.ne.s32.totalorder %s26, %s29
    %p38 = scmp.eq.s32.totalorder %s21, 2
    %p39 = por %p37, %p38
    %p40 = scmp.ne.s32.totalorder %s29, %s30
    %p41 = scmp.eq.s32.totalorder %s21, 0
    %p42 = por %p40, %p41
    %p43 = scmp.ne.s32.totalorder %s29, %s30
    %p44 = scmp.eq.s32.totalorder %s22, 2
    %p45 = por %p43, %p44
    %p47 = scmp.ne.s32.totalorder %s30, %s46
    %p48 = scmp.eq.s32.totalorder %s22, 0
    %p49 = por %p47, %p48
    %s50 = sld [smem:[#allocation3 + %s16]]
    %s51 = sld [smem:[#allocation3 + %s23]]
    %s52 = ssub.s32 %s50, %s51
    %p53 = scmp.eq.s32.totalorder %s52, 0
    %s55 = sadd.s32 %s54, 1
    %s56 = scalar_select %p53, %s54, %s55
    %p59 = pneg %p53
    %p60 = scmp.eq.s32.totalorder %s16, 2
    %p61 = por %p59, %p60
    %p62 = scmp.ne.s32.totalorder %s54, %s57
    %p63 = scmp.eq.s32.totalorder %s16, 0
    %p64 = por %p62, %p63
    %p65 = scmp.ne.s32.totalorder %s54, %s57
    %p66 = scmp.eq.s32.totalorder %s21, 2
    %p67 = por %p65, %p66
    %p68 = scmp.ne.s32.totalorder %s57, %s58
    %p69 = scmp.eq.s32.totalorder %s21, 0
    %p70 = por %p68, %p69
    %p71 = scmp.ne.s32.totalorder %s57, %s58
    %p72 = scmp.eq.s32.totalorder %s22, 2
    %p73 = por %p71, %p72
    %p75 = scmp.ne.s32.totalorder %s58, %s74
    %p76 = scmp.eq.s32.totalorder %s22, 0
    %p77 = por %p75, %p76
    %s78 = sld [smem:[#allocation3 + %s16]]
    %s79 = sld [smem:[#allocation3 + %s23]]
    %s80 = ssub.s32 %s78, %s79
    %p81 = scmp.eq.s32.totalorder %s80, 0
    %s83 = sadd.s32 %s82, 1
    %s84 = scalar_select %p81, %s82, %s83
    %p87 = pneg %p81
    %p88 = scmp.eq.s32.totalorder %s16, 2
    %p89 = por %p87, %p88
    %p90 = scmp.ne.s32.totalorder %s82, %s85
    %p91 = scmp.eq.s32.totalorder %s16, 0
    %p92 = por %p90, %p91
    %p93 = scmp.ne.s32.totalorder %s82, %s85
    %p94 = scmp.eq.s32.totalorder %s21, 2
    %p95 = por %p93, %p94
    %p96 = scmp.ne.s32.totalorder %s85, %s86
    %p97 = scmp.eq.s32.totalorder %s21, 0
    %p98 = por %p96, %p97
    %p99 = scmp.ne.s32.totalorder %s85, %s86
    %p100 = scmp.eq.s32.totalorder %s22, 2
    %p101 = por %p99, %p100
    %p103 = scmp.ne.s32.totalorder %s86, %s102
    %p104 = scmp.eq.s32.totalorder %s22, 0
    %p105 = por %p103, %p104
    %s106 = ssub.s32 %s16, %s23
    %p107 = scmp.eq.s32.totalorder %s106, 0
    %s109 = sadd.s32 %s108, 1
    %s110 = scalar_select %p107, %s108, %s109
    %p113 = pneg %p107
    %p114 = scmp.eq.s32.totalorder %s16, 2
    %p115 = por %p113, %p114
    %p116 = scmp.ne.s32.totalorder %s108, %s111
    %p117 = scmp.eq.s32.totalorder %s16, 0
    %p118 = por %p116, %p117
    %p119 = scmp.ne.s32.totalorder %s108, %s111
    %p120 = scmp.eq.s32.totalorder %s21, 2
    %p121 = por %p119, %p120
    %p122 = scmp.ne.s32.totalorder %s111, %s112
    %p123 = scmp.eq.s32.totalorder %s21, 0
    %p124 = por %p122, %p123
    %p125 = scmp.ne.s32.totalorder %s111, %s112
    %p126 = scmp.eq.s32.totalorder %s22, 2
    %p127 = por %p125, %p126
    %p129 = scmp.ne.s32.totalorder %s112, %s128
    %p130 = scmp.eq.s32.totalorder %s22, 0
    %p131 = por %p129, %p130
    %p132 = scmp.le.s32.totalorder 1, %s16
    %p133 = scmp.lt.s32.totalorder %s16, 4
    %p134 = pnand %p132, %p133
    %p135 = pneg %p134
    // Predicated region
    $region9: #{jvp__.15} parent=5 // pred_check
      _
    $region10: #{jvp__.15} parent=5 // pred_check_branch
      %137 = sbr.rel (%p134) target = $region12
    $region11: #{jvp__.15} parent=5 // pred_region
      %s138 = ssub.s32 %s16, 1
    $region12: #{jvp__.15} parent=5 // pred_fallthru
      _
    %p139 = scmp.lt.s32.totalorder %s16, 3
    // Predicated region
    $region13: #{jvp__.15} parent=5 // pred_check
      %p140 = pneg %p139
    $region14: #{jvp__.15} parent=5 // pred_check_branch
      %142 = sbr.rel (%p140) target = $region16
    $region15: #{jvp__.15} parent=5 // pred_region
      // Predicated region
      $region17: #{jvp__.15} parent=15 // pred_check
        %p143 = pneg %p36
      $region18: #{jvp__.15} parent=15 // pred_check_branch
        %145 = sbr.rel (%p143) target = $region20
      $region19: #{jvp__.15} parent=15 // pred_region
        %p146 = scmp.lt.s32.totalorder %s16, 2
        %s147 = scalar_select %p146, %s16, 2
        %s148 = smul.addr %s147, 8
        %s149 = scalar_lea.vmem %s1, %s148
      $region20: #{jvp__.15} parent=15 // pred_fallthru
        _
      // Predicated region
      $region21: #{jvp__.15} parent=15 // pred_check
        %p150 = pneg %p64
      $region22: #{jvp__.15} parent=15 // pred_check_branch
        %152 = sbr.rel (%p150) target = $region24
      $region23: #{jvp__.15} parent=15 // pred_region
        %s153 = sld [smem:[#allocation3 + %s16]]
        %p154 = scmp.lt.s32.totalorder %s153, 1
        %s155 = scalar_select %p154, %s153, 1
        %s156 = smul.addr %s155, 16
        %s157 = smul.addr %s156, 8
        %s158 = scalar_lea.vmem %s2, %s157
        %s159 = sld [smem:[#allocation3 + %s16]]
      $region24: #{jvp__.15} parent=15 // pred_fallthru
        _
      // Predicated region
      $region25: #{jvp__.15} parent=15 // pred_check
        %p160 = pneg %p92
      $region26: #{jvp__.15} parent=15 // pred_check_branch
        %162 = sbr.rel (%p160) target = $region28
      $region27: #{jvp__.15} parent=15 // pred_region
        %s163 = sld [smem:[#allocation3 + %s16]]
        %p164 = scmp.lt.s32.totalorder %s163, 1
        %s165 = scalar_select %p164, %s163, 1
        %s166 = scalar_lea.vmem %s3, %s165
        %s167 = sld [smem:[#allocation3 + %s16]]
      $region28: #{jvp__.15} parent=15 // pred_fallthru
        _
    $region16: #{jvp__.15} parent=5 // pred_fallthru
      _
    %p168 = scmp.le.s32.totalorder 1, %s16
    %p169 = scmp.lt.s32.totalorder %s16, 4
    %p170 = pnand %p168, %p169
    %p171 = pneg %p170
    // Predicated region
    $region29: #{jvp__.15} parent=5 // pred_check
      _
    $region30: #{jvp__.15} parent=5 // pred_check_branch
      %173 = sbr.rel (%p170) target = $region32
    $region31: #{jvp__.15} parent=5 // pred_region
      %s174 = ssub.s32 %s16, 1
      %p175 = scmp.lt.s32.totalorder %s21, 2
      %s176 = scalar_select %p175, %s21, 2
      %s177 = smul.addr %s176, 8
      %s178 = scalar_lea.vmem %s1, %s177
      %p179 = pneg %p42
      %p180 = pneg %p39
      %s181 = sld [smem:[#allocation3 + %s21]]
      %p182 = scmp.lt.s32.totalorder %s181, 1
      %s183 = scalar_select %p182, %s181, 1
      %s184 = smul.addr %s183, 16
      %s185 = smul.addr %s184, 8
      %s186 = scalar_lea.vmem %s2, %s185
      %p187 = pneg %p70
      %p188 = pneg %p67
      %s189 = sld [smem:[#allocation3 + %s21]]
      %p190 = scmp.lt.s32.totalorder %s189, 1
      %s191 = scalar_select %p190, %s189, 1
      %s192 = scalar_lea.vmem %s3, %s191
      %p193 = pneg %p98
      %p194 = pneg %p95
      %p195 = pneg %p124
      %p196 = pneg %p121
      %p197 = scmp.lt.s32.totalorder %s21, 2
      %s198 = scalar_select %p197, %s21, 2
      %s199 = smul.addr %s198, 8
      %s200 = scalar_lea.vmem %s4, %s199
      %p201 = scmp.lt.s32.totalorder %s21, 2
      %s202 = scalar_select %p201, %s21, 2
      %s203 = smul.addr %s202, 8
      %s204 = scalar_lea.vmem %s1, %s203
      %s205 = sld [smem:[#allocation3 + %s21]]
      %p206 = scmp.lt.s32.totalorder %s205, 1
      %s207 = scalar_select %p206, %s205, 1
      %s208 = smul.addr %s207, 16
      %s209 = smul.addr %s208, 8
      %s210 = scalar_lea.vmem %s2, %s209
      %s211 = sld [smem:[#allocation3 + %s21]]
      %s212 = sld [smem:[#allocation3 + %s21]]
      %p213 = scmp.lt.s32.totalorder %s212, 1
      %s214 = scalar_select %p213, %s212, 1
      %s215 = scalar_lea.vmem %s3, %s214
      %s216 = sld [smem:[#allocation3 + %s21]]
      %p217 = scmp.lt.s32.totalorder %s21, 2
      %s218 = scalar_select %p217, %s21, 2
      %s219 = smul.addr %s218, 8
      %s220 = scalar_lea.vmem %s4, %s219
      %v221 = vld [vmem:[%s204] sm:$0xff]
      %v222 = vld [vmem:[%s210] sm:$0xff]
      %v223 = vld [vmem:[%s210 + $0x8] sm:$0xff]
      %v224 = vld [vmem:[%s210 + $0x10] sm:$0xff]
      %v225 = vld [vmem:[%s210 + $0x18] sm:$0xff]
      %v226 = vld [vmem:[%s210 + $0x20] sm:$0xff]
      %v227 = vld [vmem:[%s210 + $0x28] sm:$0xff]
      %v228 = vld [vmem:[%s210 + $0x30] sm:$0xff]
      %v229 = vld [vmem:[%s210 + $0x38] sm:$0xff]
      %v230 = vld [vmem:[%s210 + $0x40] sm:$0xff]
      %v231 = vld [vmem:[%s210 + $0x48] sm:$0xff]
      %v232 = vld [vmem:[%s210 + $0x50] sm:$0xff]
      %v233 = vld [vmem:[%s210 + $0x58] sm:$0xff]
      %v234 = vld [vmem:[%s210 + $0x60] sm:$0xff]
      %v235 = vld [vmem:[%s210 + $0x68] sm:$0xff]
      %v236 = vld [vmem:[%s210 + $0x70] sm:$0xff]
      %v237 = vld [vmem:[%s210 + $0x78] sm:$0xff]
      %v238 = vld [vmem:[%s215] sm:$0x1]
      %v240 = vlaneseq
      %v241 = vshrl.u32 %v240, 7
      %v242 = vsub.s32 0, %v241
      %v243 = vrot.slane %v238, %v242
      %245 = vmatprep.subr.mxu0 0.0
      %246 = vmatpush1.msra.mxu0 %v237
      %247 = vmatprep.subr.mxu0 0.0
      %248 = vmatpush1.msra.mxu0 %v236
      %249 = vmatprep.subr.mxu0 0.0
      %250 = vmatpush1.msra.mxu0 %v235
      %251 = vmatprep.subr.mxu0 0.0
      %252 = vmatpush1.msra.mxu0 %v234
      %253 = vmatprep.subr.mxu0 0.0
      %254 = vmatpush1.msra.mxu0 %v233
      %255 = vmatprep.subr.mxu0 0.0
      %256 = vmatpush1.msra.mxu0 %v232
      %257 = vmatprep.subr.mxu0 0.0
      %258 = vmatpush1.msra.mxu0 %v231
      %259 = vmatprep.subr.mxu0 0.0
      %260 = vmatpush1.msra.mxu0 %v230
      %261 = vmatprep.subr.mxu0 0.0
      %262 = vmatpush1.msra.mxu0 %v229
      %263 = vmatprep.subr.mxu0 0.0
      %264 = vmatpush1.msra.mxu0 %v228
      %265 = vmatprep.subr.mxu0 0.0
      %266 = vmatpush1.msra.mxu0 %v227
      %267 = vmatprep.subr.mxu0 0.0
      %268 = vmatpush1.msra.mxu0 %v226
      %269 = vmatprep.subr.mxu0 0.0
      %270 = vmatpush1.msra.mxu0 %v225
      %271 = vmatprep.subr.mxu0 0.0
      %272 = vmatpush1.msra.mxu0 %v224
      %273 = vmatprep.subr.mxu0 0.0
      %274 = vmatpush1.msra.mxu0 %v223
      %275 = vmatprep.subr.mxu0 0.0
      %276 = vmatpush1.msra.mxu0 %v222
      %277 = vmatprep.subr.mxu0 0.0
      %278 = vmatpush2.msra.mxu0 0.0
      %279 = vmatprep.subr.mxu0 0.0
      %280 = vmatpush2.msra.mxu0 0.0
      %281 = vmatprep.subr.mxu0 0.0
      %282 = vmatpush2.msra.mxu0 0.0
      %283 = vmatprep.subr.mxu0 0.0
      %284 = vmatpush2.msra.mxu0 0.0
      %285 = vmatprep.subr.mxu0 0.0
      %286 = vmatpush2.msra.mxu0 0.0
      %287 = vmatprep.subr.mxu0 0.0
      %288 = vmatpush2.msra.mxu0 0.0
      %289 = vmatprep.subr.mxu0 0.0
      %290 = vmatpush2.msra.mxu0 0.0
      %291 = vmatprep.subr.mxu0 0.0
      %292 = vmatpush2.msra.mxu0 0.0
      %293 = vmatprep.subr.mxu0 0.0
      %294 = vmatpush2.msra.mxu0 0.0
      %295 = vmatprep.subr.mxu0 0.0
      %296 = vmatpush2.msra.mxu0 0.0
      %297 = vmatprep.subr.mxu0 0.0
      %298 = vmatpush2.msra.mxu0 0.0
      %299 = vmatprep.subr.mxu0 0.0
      %300 = vmatpush2.msra.mxu0 0.0
      %301 = vmatprep.subr.mxu0 0.0
      %302 = vmatpush2.msra.mxu0 0.0
      %303 = vmatprep.subr.mxu0 0.0
      %304 = vmatpush2.msra.mxu0 0.0
      %305 = vmatprep.subr.mxu0 0.0
      %306 = vmatpush2.msra.mxu0 0.0
      %307 = vmatprep.subr.mxu0 0.0
      %308 = vmatpush2.msra.mxu0 0.0
      %309 = vmatprep.mubr.f32.mxu0 0.0
      %310 = vmatmul.mubr.f32.gmra.mxu0 %v221
      %v311 = vpop.f32.mrf.mxu0
      %v312 = vadd.f32 %v243, %v311
      %v313 = vpop.f32.mrf.mxu0
      %314 = vdwg.mxu0
      %vm315 = vcmask 7168
      %316 = vst.msk [vmem:[%s220] sm:$0xff] %vm315, %v312
      %p317 = scmp.lt.s32.totalorder %s21, 2
      %s318 = scalar_select %p317, %s21, 2
      %s319 = smul.addr %s318, 8
      %s320 = scalar_lea.vmem %s4, %s319
      // Predicated region
      $region33: #{jvp__.15} parent=31 // pred_check
        %p321 = pneg %p121
      $region34: #{jvp__.15} parent=31 // pred_check_branch
        %323 = sbr.rel (%p321) target = $region36
      $region35: #{jvp__.15} parent=31 // pred_region
        _
      $region36: #{jvp__.15} parent=31 // pred_fallthru
        _
    $region32: #{jvp__.15} parent=5 // pred_fallthru
      _
    %p324 = scmp.le.s32.totalorder 2, %s16
    // Predicated region
    $region37: #{jvp__.15} parent=5 // pred_check
      %p325 = pneg %p324
    $region38: #{jvp__.15} parent=5 // pred_check_branch
      %327 = sbr.rel (%p325) target = $region40
    $region39: #{jvp__.15} parent=5 // pred_region
      %s328 = ssub.s32 %s16, 2
      // Predicated region
      $region41: #{jvp__.15} parent=39 // pred_check
        %p329 = pneg %p127
      $region42: #{jvp__.15} parent=39 // pred_check_branch
        %331 = sbr.rel (%p329) target = $region44
      $region43: #{jvp__.15} parent=39 // pred_region
        %p332 = scmp.lt.s32.totalorder %s22, 2
        %s333 = scalar_select %p332, %s22, 2
        %s334 = smul.addr %s333, 8
        %s335 = scalar_lea.vmem %s4, %s334
      $region44: #{jvp__.15} parent=39 // pred_fallthru
        _
    $region40: #{jvp__.15} parent=5 // pred_fallthru
      _
  $region6: #{jvp__.15} parent=0 // loop_footer
    %s20 = sadd.s32 1, %s16
  $region7: #{jvp__.15} parent=0 // loop_footer_branch
    %15 = sbr.rel target = $region3
  $region8: #{jvp__.15} parent=0 // loop_exit
    _

// kernel: split.0
$region0: #{split.0}
  #allocation0 [shape = 'u32[2048]{0}', space=vmem, size = 0x2000, scoped, tag = 'scoped memory for split.0']
  #allocation1 [shape = 'u32[2048]{0}', space=vmem, size = 0x2000, scoped, tag = 'scoped memory for split.0']
  #allocation2 [shape = 'u32[2048]{0}', space=vmem, size = 0x2000, scoped, tag = 'scoped memory for split.0']
  #allocation3 [shape = 'u32[2048]{0}', space=vmem, size = 0x2000, scoped, tag = 'scoped memory for split.0']
  #allocation4 [shape = 'u32[2048]{0}', space=vmem, size = 0x2000, scoped, tag = 'scoped memory for split.0']
  #allocation5 [shape = 's32[1]{0}', space=sflag, size = 0x4, scoped, tag = 'scoped memory for split.0']
  %s0 = inlined_call_operand.vmem [shape: f32[13,56], index: 0, kind: input, shape index: {}]
  %s1 = inlined_call_operand.vmem [shape: f32[9,56], index: 1, kind: output, shape index: {}]
  %v2 = vld [vmem:[%s0] sm:$0xff]
  %s3 = scalar_lea.vmem %s0, 8
  %v4 = vld [vmem:[%s3] sm:$0xff]
  %vm5 = vcmask 1043456
  %v6 = vsel %vm5, %v4, %v2
  %v7 = vrot.slane %v6, 4
  %8 = vst [vmem:[%s1] sm:$0xff] %v7
  %vm9 = vcmask 1043456
  %v10 = vsel %vm9, 0, %v4
  %v11 = vrot.slane %v10, 4
  %s12 = scalar_lea.vmem %s1, 8
  %13 = vst [vmem:[%s12] sm:$0xff] %v11

</llo_original>
